<compile_context>
chip_gen: v5e
topology: v5e:2x2
jax: 0.10.0
libtpu: 0.0.40
codegen_flags: <defaults>
</compile_context>

<pallas_src>
import functools

import jax
import jax.numpy as jnp
from jax.experimental import pallas as pl
from jax.experimental.pallas import tpu as pltpu

LANE = 128

PARAM_ORDER = ("wfa", "bf", "ba", "w1a", "w1b", "b1", "bns", "bnb",
               "wo", "bo", "wf1", "bf1", "wf2", "bf2", "wf3", "bf3")


def la_mlp_kernel(x_ref,               # (TB, Lp, E)   zero-padded input tile
                  wfa_ref,             # (K, E, 2*EO)  fused feature|attention conv weight
                  bf_ref, ba_ref,      # (1, E), (1, E)
                  w1a_ref, w1b_ref,    # (E, 32), (E, 32)   Linear(2E,32) split halves
                  b1_ref,              # (1, 32)
                  bns_ref, bnb_ref,    # (1, 32)       folded eval-mode BatchNorm1d
                  wo_ref, bo_ref,      # (32, 128), (1, 128)
                  wf1_ref, bf1_ref,    # (128, 128), (1, 128)
                  wf2_ref, bf2_ref,    # (128, 64), (1, 64)
                  wf3_ref, bf3_ref,    # (64, OUTP), (1, OUTP)  zero-padded to 128 lanes
                  out_ref,             # (TB, OUTP)
                  *, TB, L, K, E, EO):
    xp = x_ref[...]                                        # [TB, Lp, E]
    M = TB * L

    # Fused Conv1d(E, E, K) x2: one MXU matmul per tap with M = TB*L rows and a
    # 2*EO-wide fused output (feat in lanes [0, E), attn in lanes [EO, EO+E)).
    fa = jnp.zeros((M, 2 * EO), jnp.float32)
    for k in range(K):                                     # static unroll over taps
        xs = xp[:, k:k + L, :].reshape(M, E)               # shifted window, M rows
        fa = fa + jnp.dot(xs, wfa_ref[k], preferred_element_type=jnp.float32)

    feat = fa[:, :E].reshape(TB, L, E) + bf_ref[...]       # lane-aligned slice
    attn = fa[:, EO:EO + E].reshape(TB, L, E) + ba_ref[...]  # lane-aligned slice

    # conv_dropout is identity in eval mode.
    # softmax over the sequence axis (axis=1 here == torch dim=-1 on [B, E, L]);
    # the 1/sum is hoisted out of the weighted sum and runs on the EUP.
    a_max = jnp.max(attn, axis=1, keepdims=True)           # [TB, 1, E]
    e = jnp.exp(attn - a_max)                              # [TB, L, E]
    num = jnp.sum(feat * e, axis=1)                        # [TB, E]
    den = jnp.sum(e, axis=1)                               # [TB, E]  (>= 1, safe)
    o1 = num * pl.reciprocal(den, approx=True)             # attention-pooled
    o2 = jnp.max(feat, axis=1)                             # max-pooled (valid L rows only)

    # Linear(2E, 32) on cat([o1, o2], -1) as a split matmul (no concat needed),
    # then Dropout (identity) -> ReLU -> folded BatchNorm1d (eval).
    h = (jnp.dot(o1, w1a_ref[...], preferred_element_type=jnp.float32)
         + jnp.dot(o2, w1b_ref[...], preferred_element_type=jnp.float32)
         + b1_ref[...])
    h = jnp.maximum(h, 0.0)
    h = h * bns_ref[...] + bnb_ref[...]

    la = jnp.dot(h, wo_ref[...], preferred_element_type=jnp.float32) + bo_ref[...]

    # FFNN head (Flatten is a no-op on [TB, 128]); LeakyReLU slope 0.1 per module.
    z = jnp.dot(la, wf1_ref[...], preferred_element_type=jnp.float32) + bf1_ref[...]
    z = jnp.where(z > 0, z, 0.1 * z)
    z = jnp.dot(z, wf2_ref[...], preferred_element_type=jnp.float32) + bf2_ref[...]
    z = jnp.where(z > 0, z, 0.1 * z)
    z = jnp.dot(z, wf3_ref[...], preferred_element_type=jnp.float32) + bf3_ref[...]

    out_ref[...] = z.astype(out_ref.dtype)                 # lane-dense (TB, 128) store


def la_mlp_forward(x, params, *, tb=8):
    B, L, E = x.shape
    K = params["wf"].shape[0]
    pad = K // 2
    Lp = L + 2 * pad
    out_dim = params["bf3"].shape[-1]
    outp = ((out_dim + LANE - 1) // LANE) * LANE           # lane-dense output width
    EO = ((E + LANE - 1) // LANE) * LANE                   # lane-aligned attention offset

    Bp = ((B + tb - 1) // tb) * tb
    # One XLA pad handles both the batch round-up (to a multiple of TB) and the
    # conv halo along the sequence axis.
    # TODO(synk): at production L*E sizes, build the halo in-kernel (VMEM scratch)
    # to avoid the extra HBM round trip of x done by jnp.pad.
    x_pad = jnp.pad(x, ((0, Bp - B), (pad, pad), (0, 0)))

    # Fuse the two conv weights along the output axis; the attention half starts at
    # the lane-aligned offset EO so both halves are extracted with aligned slices.
    # (Weights stay f32 to match the reference bit-for-bit; casting wfa/x to bf16
    #  is the next lever when scaling to embeddings_dim=1024.)
    wfa = jnp.zeros((K, E, 2 * EO), jnp.float32)
    wfa = wfa.at[:, :, :E].set(params["wf"])
    wfa = wfa.at[:, :, EO:EO + E].set(params["wa"])

    kparams = {
        "wfa": wfa,
        "bf": params["bf"], "ba": params["ba"],
        "w1a": params["w1"][:E], "w1b": params["w1"][E:], "b1": params["b1"],
        "bns": params["bns"], "bnb": params["bnb"],
        "wo": params["wo"], "bo": params["bo"],
        "wf1": params["wf1"], "bf1": params["bf1"],
        "wf2": params["wf2"], "bf2": params["bf2"],
        "wf3": jnp.pad(params["wf3"], ((0, 0), (0, outp - out_dim))),
        "bf3": jnp.pad(params["bf3"], ((0, 0), (0, outp - out_dim))),
    }

    def full_spec(shape):
        return pl.BlockSpec(shape, lambda b, _n=len(shape): (0,) * _n)

    in_specs = [pl.BlockSpec((tb, Lp, E), lambda b: (b, 0, 0))]
    in_specs += [full_spec(kparams[name].shape) for name in PARAM_ORDER]

    kernel = functools.partial(la_mlp_kernel, TB=tb, L=L, K=K, E=E, EO=EO)

    out = pl.pallas_call(
        kernel,
        out_shape=jax.ShapeDtypeStruct((Bp, outp), jnp.float32),
        grid=(Bp // tb,),
        in_specs=in_specs,
        out_specs=pl.BlockSpec((tb, outp), lambda b: (b, 0)),
        compiler_params=pltpu.CompilerParams(
            dimension_semantics=("parallel",),       # batch tiles are independent
            vmem_limit_bytes=32 * 1024 * 1024,       # above the 16 MiB v5e default
        ),
    )(x_pad, *[kparams[name] for name in PARAM_ORDER])

    return out[:B, :out_dim]


def la_mlp_reference(x, p):
    """Pure-JAX reference with identical (eval-mode) semantics."""
    B, L, E = x.shape
    K = p["wf"].shape[0]
    pad = K // 2
    xp = jnp.pad(x, ((0, 0), (pad, pad), (0, 0)))
    feat = jnp.zeros((B, L, E), jnp.float32)
    attn = jnp.zeros((B, L, E), jnp.float32)
    for k in range(K):
        xs = xp[:, k:k + L, :]
        feat = feat + jnp.einsum("ble,ef->blf", xs, p["wf"][k])
        attn = attn + jnp.einsum("ble,ef->blf", xs, p["wa"][k])
    feat = feat + p["bf"]
    attn = attn + p["ba"]
    prob = jax.nn.softmax(attn, axis=1)
    o1 = jnp.sum(feat * prob, axis=1)
    o2 = jnp.max(feat, axis=1)
    o = jnp.concatenate([o1, o2], axis=-1)
    h = jnp.maximum(o @ p["w1"] + p["b1"], 0.0)
    h = h * p["bns"] + p["bnb"]
    la = h @ p["wo"] + p["bo"]
    z = la @ p["wf1"] + p["bf1"]
    z = jnp.where(z > 0, z, 0.1 * z)
    z = z @ p["wf2"] + p["bf2"]
    z = jnp.where(z > 0, z, 0.1 * z)
    return z @ p["wf3"] + p["bf3"]


def init_params(key, E, K, hidden=32, la_out=128, out_dim=2):
    ks = jax.random.split(key, 12)
    n = jax.random.normal

    def dense(k, fi, fo):  # [in, out] layout (y = x @ W + b), synthetic deterministic init
        return n(k, (fi, fo), jnp.float32) * (1.0 / jnp.sqrt(fi))

    # BatchNorm1d eval fold: bns = gamma/sqrt(var+eps), bnb = beta - mean*bns.
    # Default running stats (mean=0, var=1, gamma=1, beta=0) are used here.
    eps = 1e-5
    return {
        # conv weights stored as [K, E_in, E_out] (torch's [out, in, K] transposed)
        "wf": n(ks[0], (K, E, E), jnp.float32) * (1.0 / jnp.sqrt(E * K)),
        "bf": n(ks[1], (1, E), jnp.float32) * 0.1,
        "wa": n(ks[2], (K, E, E), jnp.float32) * (1.0 / jnp.sqrt(E * K)),
        "ba": n(ks[3], (1, E), jnp.float32) * 0.1,
        "w1": dense(ks[4], 2 * E, hidden),
        "b1": n(ks[5], (1, hidden), jnp.float32) * 0.1,
        "bns": jnp.full((1, hidden), 1.0 / jnp.sqrt(1.0 + eps), jnp.float32),
        "bnb": jnp.zeros((1, hidden), jnp.float32),
        "wo": dense(ks[6], hidden, la_out),
        "bo": n(ks[7], (1, la_out), jnp.float32) * 0.1,
        "wf1": dense(ks[8], la_out, 128),
        "bf1": n(ks[9], (1, 128), jnp.float32) * 0.1,
        "wf2": dense(ks[10], 128, 64),
        "bf2": jnp.zeros((1, 64), jnp.float32),
        "wf3": dense(ks[11], 64, out_dim),
        "bf3": jnp.zeros((1, out_dim), jnp.float32),
    }


if __name__ == "__main__":
    # Small demo shapes: B=16 so the batch-tiled grid has 2 parallel steps (TB=8),
    # conv matmuls run with M = TB*L = 128 rows, head matmuls with M = 8.
    B, L, E, K, OUT = 16, 16, 32, 9, 2
    key = jax.random.PRNGKey(0)
    kx, kp = jax.random.split(key)
    x = jax.random.normal(kx, (B, L, E), jnp.float32)   # [batch, seq, emb]
    params = init_params(kp, E, K, out_dim=OUT)

    out = jax.block_until_ready(la_mlp_forward(x, params, tb=8))
    ref = jax.block_until_ready(la_mlp_reference(x, params))

    assert out.shape == (B, OUT), out.shape
    # Tolerance accounts for the approximate (EUP) reciprocal in the softmax.
    assert jnp.allclose(out, ref, atol=2e-3, rtol=2e-3), float(jnp.max(jnp.abs(out - ref)))
    print("KERNEL_OK")
</pallas_src>

<mosaic_0001>
module attributes {stable_mosaic.version = 11 : i64} {
  func.func @la_mlp_kernel(%arg0: i32, %arg1: memref<8x24x32xf32, #tpu.memory_space<vmem>>, %arg2: memref<9x32x256xf32, #tpu.memory_space<vmem>>, %arg3: memref<1x32xf32, #tpu.memory_space<vmem>>, %arg4: memref<1x32xf32, #tpu.memory_space<vmem>>, %arg5: memref<32x32xf32, #tpu.memory_space<vmem>>, %arg6: memref<32x32xf32, #tpu.memory_space<vmem>>, %arg7: memref<1x32xf32, #tpu.memory_space<vmem>>, %arg8: memref<1x32xf32, #tpu.memory_space<vmem>>, %arg9: memref<1x32xf32, #tpu.memory_space<vmem>>, %arg10: memref<32x128xf32, #tpu.memory_space<vmem>>, %arg11: memref<1x128xf32, #tpu.memory_space<vmem>>, %arg12: memref<128x128xf32, #tpu.memory_space<vmem>>, %arg13: memref<1x128xf32, #tpu.memory_space<vmem>>, %arg14: memref<128x64xf32, #tpu.memory_space<vmem>>, %arg15: memref<1x64xf32, #tpu.memory_space<vmem>>, %arg16: memref<64x128xf32, #tpu.memory_space<vmem>>, %arg17: memref<1x128xf32, #tpu.memory_space<vmem>>, %arg18: memref<8x128xf32, #tpu.memory_space<vmem>>) attributes {dimension_semantics = [#tpu.dimension_semantics<parallel>], iteration_bounds = array<i64: 2>, scalar_prefetch = 0 : i64, scratch_operands = 0 : i64, tpu.core_type = #tpu.core_type<tc>, window_params = [{transform_indices = @transform_0, window_bounds = array<i64: 8, 24, 32>}, {pipeline_mode = #tpu.pipeline_mode<synchronous>, transform_indices = @transform_1, window_bounds = array<i64: 9, 32, 256>}, {pipeline_mode = #tpu.pipeline_mode<synchronous>, transform_indices = @transform_2, window_bounds = array<i64: 1, 32>}, {pipeline_mode = #tpu.pipeline_mode<synchronous>, transform_indices = @transform_3, window_bounds = array<i64: 1, 32>}, {pipeline_mode = #tpu.pipeline_mode<synchronous>, transform_indices = @transform_4, window_bounds = array<i64: 32, 32>}, {pipeline_mode = #tpu.pipeline_mode<synchronous>, transform_indices = @transform_5, window_bounds = array<i64: 32, 32>}, {pipeline_mode = #tpu.pipeline_mode<synchronous>, transform_indices = @transform_6, window_bounds = array<i64: 1, 32>}, {pipeline_mode = #tpu.pipeline_mode<synchronous>, transform_indices = @transform_7, window_bounds = array<i64: 1, 32>}, {pipeline_mode = #tpu.pipeline_mode<synchronous>, transform_indices = @transform_8, window_bounds = array<i64: 1, 32>}, {pipeline_mode = #tpu.pipeline_mode<synchronous>, transform_indices = @transform_9, window_bounds = array<i64: 32, 128>}, {pipeline_mode = #tpu.pipeline_mode<synchronous>, transform_indices = @transform_10, window_bounds = array<i64: 1, 128>}, {pipeline_mode = #tpu.pipeline_mode<synchronous>, transform_indices = @transform_11, window_bounds = array<i64: 128, 128>}, {pipeline_mode = #tpu.pipeline_mode<synchronous>, transform_indices = @transform_12, window_bounds = array<i64: 1, 128>}, {pipeline_mode = #tpu.pipeline_mode<synchronous>, transform_indices = @transform_13, window_bounds = array<i64: 128, 64>}, {pipeline_mode = #tpu.pipeline_mode<synchronous>, transform_indices = @transform_14, window_bounds = array<i64: 1, 64>}, {pipeline_mode = #tpu.pipeline_mode<synchronous>, transform_indices = @transform_15, window_bounds = array<i64: 64, 128>}, {pipeline_mode = #tpu.pipeline_mode<synchronous>, transform_indices = @transform_16, window_bounds = array<i64: 1, 128>}, {transform_indices = @transform_17, window_bounds = array<i64: 8, 128>}]} {
    %c0 = arith.constant 0 : index
    %c0_0 = arith.constant 0 : index
    %c0_1 = arith.constant 0 : index
    %0 = vector.load %arg1[%c0, %c0_0, %c0_1] : memref<8x24x32xf32, #tpu.memory_space<vmem>>, vector<8x24x32xf32>
    %cst = arith.constant 0.000000e+00 : f32
    %1 = vector.broadcast %cst : f32 to vector<128x256xf32>
    %2 = vector.extract_strided_slice %0 {offsets = [0, 0, 0], sizes = [8, 16, 32], strides = [1, 1, 1]} : vector<8x24x32xf32> to vector<8x16x32xf32>
    %3 = vector.shape_cast %2 : vector<8x16x32xf32> to vector<128x32xf32>
    %c0_2 = arith.constant 0 : index
    %c0_3 = arith.constant 0 : index
    %c0_4 = arith.constant 0 : index
    %4 = vector.load %arg2[%c0_2, %c0_3, %c0_4] : memref<9x32x256xf32, #tpu.memory_space<vmem>>, vector<1x32x256xf32>
    %5 = vector.shape_cast %4 : vector<1x32x256xf32> to vector<32x256xf32>
    %cst_5 = arith.constant dense<0.000000e+00> : vector<128x256xf32>
    %6 = tpu.matmul %3, %5, %cst_5 {dimension_numbers = #tpu.dot_dimension_numbers<[1], [0], [0], [1], [0, 0, 1, 1], [], []>} : vector<128x32xf32>, vector<32x256xf32>, vector<128x256xf32> -> vector<128x256xf32>
    %7 = arith.addf %1, %6 : vector<128x256xf32>
    %8 = vector.extract_strided_slice %0 {offsets = [0, 1, 0], sizes = [8, 16, 32], strides = [1, 1, 1]} : vector<8x24x32xf32> to vector<8x16x32xf32>
    %9 = vector.shape_cast %8 : vector<8x16x32xf32> to vector<128x32xf32>
    %c1 = arith.constant 1 : index
    %c0_6 = arith.constant 0 : index
    %c0_7 = arith.constant 0 : index
    %10 = vector.load %arg2[%c1, %c0_6, %c0_7] : memref<9x32x256xf32, #tpu.memory_space<vmem>>, vector<1x32x256xf32>
    %11 = vector.shape_cast %10 : vector<1x32x256xf32> to vector<32x256xf32>
    %cst_8 = arith.constant dense<0.000000e+00> : vector<128x256xf32>
    %12 = tpu.matmul %9, %11, %cst_8 {dimension_numbers = #tpu.dot_dimension_numbers<[1], [0], [0], [1], [0, 0, 1, 1], [], []>} : vector<128x32xf32>, vector<32x256xf32>, vector<128x256xf32> -> vector<128x256xf32>
    %13 = arith.addf %7, %12 : vector<128x256xf32>
    %14 = vector.extract_strided_slice %0 {offsets = [0, 2, 0], sizes = [8, 16, 32], strides = [1, 1, 1]} : vector<8x24x32xf32> to vector<8x16x32xf32>
    %15 = vector.shape_cast %14 : vector<8x16x32xf32> to vector<128x32xf32>
    %c2 = arith.constant 2 : index
    %c0_9 = arith.constant 0 : index
    %c0_10 = arith.constant 0 : index
    %16 = vector.load %arg2[%c2, %c0_9, %c0_10] : memref<9x32x256xf32, #tpu.memory_space<vmem>>, vector<1x32x256xf32>
    %17 = vector.shape_cast %16 : vector<1x32x256xf32> to vector<32x256xf32>
    %cst_11 = arith.constant dense<0.000000e+00> : vector<128x256xf32>
    %18 = tpu.matmul %15, %17, %cst_11 {dimension_numbers = #tpu.dot_dimension_numbers<[1], [0], [0], [1], [0, 0, 1, 1], [], []>} : vector<128x32xf32>, vector<32x256xf32>, vector<128x256xf32> -> vector<128x256xf32>
    %19 = arith.addf %13, %18 : vector<128x256xf32>
    %20 = vector.extract_strided_slice %0 {offsets = [0, 3, 0], sizes = [8, 16, 32], strides = [1, 1, 1]} : vector<8x24x32xf32> to vector<8x16x32xf32>
    %21 = vector.shape_cast %20 : vector<8x16x32xf32> to vector<128x32xf32>
    %c3 = arith.constant 3 : index
    %c0_12 = arith.constant 0 : index
    %c0_13 = arith.constant 0 : index
    %22 = vector.load %arg2[%c3, %c0_12, %c0_13] : memref<9x32x256xf32, #tpu.memory_space<vmem>>, vector<1x32x256xf32>
    %23 = vector.shape_cast %22 : vector<1x32x256xf32> to vector<32x256xf32>
    %cst_14 = arith.constant dense<0.000000e+00> : vector<128x256xf32>
    %24 = tpu.matmul %21, %23, %cst_14 {dimension_numbers = #tpu.dot_dimension_numbers<[1], [0], [0], [1], [0, 0, 1, 1], [], []>} : vector<128x32xf32>, vector<32x256xf32>, vector<128x256xf32> -> vector<128x256xf32>
    %25 = arith.addf %19, %24 : vector<128x256xf32>
    %26 = vector.extract_strided_slice %0 {offsets = [0, 4, 0], sizes = [8, 16, 32], strides = [1, 1, 1]} : vector<8x24x32xf32> to vector<8x16x32xf32>
    %27 = vector.shape_cast %26 : vector<8x16x32xf32> to vector<128x32xf32>
    %c4 = arith.constant 4 : index
    %c0_15 = arith.constant 0 : index
    %c0_16 = arith.constant 0 : index
    %28 = vector.load %arg2[%c4, %c0_15, %c0_16] : memref<9x32x256xf32, #tpu.memory_space<vmem>>, vector<1x32x256xf32>
    %29 = vector.shape_cast %28 : vector<1x32x256xf32> to vector<32x256xf32>
    %cst_17 = arith.constant dense<0.000000e+00> : vector<128x256xf32>
    %30 = tpu.matmul %27, %29, %cst_17 {dimension_numbers = #tpu.dot_dimension_numbers<[1], [0], [0], [1], [0, 0, 1, 1], [], []>} : vector<128x32xf32>, vector<32x256xf32>, vector<128x256xf32> -> vector<128x256xf32>
    %31 = arith.addf %25, %30 : vector<128x256xf32>
    %32 = vector.extract_strided_slice %0 {offsets = [0, 5, 0], sizes = [8, 16, 32], strides = [1, 1, 1]} : vector<8x24x32xf32> to vector<8x16x32xf32>
    %33 = vector.shape_cast %32 : vector<8x16x32xf32> to vector<128x32xf32>
    %c5 = arith.constant 5 : index
    %c0_18 = arith.constant 0 : index
    %c0_19 = arith.constant 0 : index
    %34 = vector.load %arg2[%c5, %c0_18, %c0_19] : memref<9x32x256xf32, #tpu.memory_space<vmem>>, vector<1x32x256xf32>
    %35 = vector.shape_cast %34 : vector<1x32x256xf32> to vector<32x256xf32>
    %cst_20 = arith.constant dense<0.000000e+00> : vector<128x256xf32>
    %36 = tpu.matmul %33, %35, %cst_20 {dimension_numbers = #tpu.dot_dimension_numbers<[1], [0], [0], [1], [0, 0, 1, 1], [], []>} : vector<128x32xf32>, vector<32x256xf32>, vector<128x256xf32> -> vector<128x256xf32>
    %37 = arith.addf %31, %36 : vector<128x256xf32>
    %38 = vector.extract_strided_slice %0 {offsets = [0, 6, 0], sizes = [8, 16, 32], strides = [1, 1, 1]} : vector<8x24x32xf32> to vector<8x16x32xf32>
    %39 = vector.shape_cast %38 : vector<8x16x32xf32> to vector<128x32xf32>
    %c6 = arith.constant 6 : index
    %c0_21 = arith.constant 0 : index
    %c0_22 = arith.constant 0 : index
    %40 = vector.load %arg2[%c6, %c0_21, %c0_22] : memref<9x32x256xf32, #tpu.memory_space<vmem>>, vector<1x32x256xf32>
    %41 = vector.shape_cast %40 : vector<1x32x256xf32> to vector<32x256xf32>
    %cst_23 = arith.constant dense<0.000000e+00> : vector<128x256xf32>
    %42 = tpu.matmul %39, %41, %cst_23 {dimension_numbers = #tpu.dot_dimension_numbers<[1], [0], [0], [1], [0, 0, 1, 1], [], []>} : vector<128x32xf32>, vector<32x256xf32>, vector<128x256xf32> -> vector<128x256xf32>
    %43 = arith.addf %37, %42 : vector<128x256xf32>
    %44 = vector.extract_strided_slice %0 {offsets = [0, 7, 0], sizes = [8, 16, 32], strides = [1, 1, 1]} : vector<8x24x32xf32> to vector<8x16x32xf32>
    %45 = vector.shape_cast %44 : vector<8x16x32xf32> to vector<128x32xf32>
    %c7 = arith.constant 7 : index
    %c0_24 = arith.constant 0 : index
    %c0_25 = arith.constant 0 : index
    %46 = vector.load %arg2[%c7, %c0_24, %c0_25] : memref<9x32x256xf32, #tpu.memory_space<vmem>>, vector<1x32x256xf32>
    %47 = vector.shape_cast %46 : vector<1x32x256xf32> to vector<32x256xf32>
    %cst_26 = arith.constant dense<0.000000e+00> : vector<128x256xf32>
    %48 = tpu.matmul %45, %47, %cst_26 {dimension_numbers = #tpu.dot_dimension_numbers<[1], [0], [0], [1], [0, 0, 1, 1], [], []>} : vector<128x32xf32>, vector<32x256xf32>, vector<128x256xf32> -> vector<128x256xf32>
    %49 = arith.addf %43, %48 : vector<128x256xf32>
    %50 = vector.extract_strided_slice %0 {offsets = [0, 8, 0], sizes = [8, 16, 32], strides = [1, 1, 1]} : vector<8x24x32xf32> to vector<8x16x32xf32>
    %51 = vector.shape_cast %50 : vector<8x16x32xf32> to vector<128x32xf32>
    %c8 = arith.constant 8 : index
    %c0_27 = arith.constant 0 : index
    %c0_28 = arith.constant 0 : index
    %52 = vector.load %arg2[%c8, %c0_27, %c0_28] : memref<9x32x256xf32, #tpu.memory_space<vmem>>, vector<1x32x256xf32>
    %53 = vector.shape_cast %52 : vector<1x32x256xf32> to vector<32x256xf32>
    %cst_29 = arith.constant dense<0.000000e+00> : vector<128x256xf32>
    %54 = tpu.matmul %51, %53, %cst_29 {dimension_numbers = #tpu.dot_dimension_numbers<[1], [0], [0], [1], [0, 0, 1, 1], [], []>} : vector<128x32xf32>, vector<32x256xf32>, vector<128x256xf32> -> vector<128x256xf32>
    %55 = arith.addf %49, %54 : vector<128x256xf32>
    %56 = vector.extract_strided_slice %55 {offsets = [0, 0], sizes = [128, 32], strides = [1, 1]} : vector<128x256xf32> to vector<128x32xf32>
    %57 = vector.shape_cast %56 : vector<128x32xf32> to vector<8x16x32xf32>
    %c0_30 = arith.constant 0 : index
    %c0_31 = arith.constant 0 : index
    %58 = vector.load %arg3[%c0_30, %c0_31] : memref<1x32xf32, #tpu.memory_space<vmem>>, vector<1x32xf32>
    %59 = vector.shape_cast %58 : vector<1x32xf32> to vector<1x1x32xf32>
    %60 = vector.broadcast %59 : vector<1x1x32xf32> to vector<8x16x32xf32>
    %61 = arith.addf %57, %60 : vector<8x16x32xf32>
    %62 = vector.extract_strided_slice %55 {offsets = [0, 128], sizes = [128, 32], strides = [1, 1]} : vector<128x256xf32> to vector<128x32xf32>
    %63 = vector.shape_cast %62 : vector<128x32xf32> to vector<8x16x32xf32>
    %c0_32 = arith.constant 0 : index
    %c0_33 = arith.constant 0 : index
    %64 = vector.load %arg4[%c0_32, %c0_33] : memref<1x32xf32, #tpu.memory_space<vmem>>, vector<1x32xf32>
    %65 = vector.shape_cast %64 : vector<1x32xf32> to vector<1x1x32xf32>
    %66 = vector.broadcast %65 : vector<1x1x32xf32> to vector<8x16x32xf32>
    %67 = arith.addf %63, %66 : vector<8x16x32xf32>
    %cst_34 = arith.constant dense<0xFF800000> : vector<8x32xf32>
    %68 = vector.multi_reduction <maximumf>, %67, %cst_34 [1] : vector<8x16x32xf32> to vector<8x32xf32>
    %69 = vector.shape_cast %68 : vector<8x32xf32> to vector<8x1x32xf32>
    %70 = vector.broadcast %69 : vector<8x1x32xf32> to vector<8x16x32xf32>
    %71 = arith.subf %67, %70 : vector<8x16x32xf32>
    %72 = math.exp %71 : vector<8x16x32xf32>
    %73 = arith.mulf %61, %72 : vector<8x16x32xf32>
    %cst_35 = arith.constant dense<0.000000e+00> : vector<8x32xf32>
    %74 = vector.multi_reduction <add>, %73, %cst_35 [1] : vector<8x16x32xf32> to vector<8x32xf32>
    %cst_36 = arith.constant dense<0.000000e+00> : vector<8x32xf32>
    %75 = vector.multi_reduction <add>, %72, %cst_36 [1] : vector<8x16x32xf32> to vector<8x32xf32>
    %76 = tpu.reciprocal %75 {approx = true} : vector<8x32xf32> -> vector<8x32xf32>
    %77 = arith.mulf %74, %76 : vector<8x32xf32>
    %cst_37 = arith.constant dense<0xFF800000> : vector<8x32xf32>
    %78 = vector.multi_reduction <maximumf>, %61, %cst_37 [1] : vector<8x16x32xf32> to vector<8x32xf32>
    %c0_38 = arith.constant 0 : index
    %c0_39 = arith.constant 0 : index
    %79 = vector.load %arg5[%c0_38, %c0_39] : memref<32x32xf32, #tpu.memory_space<vmem>>, vector<32x32xf32>
    %cst_40 = arith.constant dense<0.000000e+00> : vector<8x32xf32>
    %80 = tpu.matmul %77, %79, %cst_40 {dimension_numbers = #tpu.dot_dimension_numbers<[1], [0], [0], [1], [0, 0, 1, 1], [], []>} : vector<8x32xf32>, vector<32x32xf32>, vector<8x32xf32> -> vector<8x32xf32>
    %c0_41 = arith.constant 0 : index
    %c0_42 = arith.constant 0 : index
    %81 = vector.load %arg6[%c0_41, %c0_42] : memref<32x32xf32, #tpu.memory_space<vmem>>, vector<32x32xf32>
    %cst_43 = arith.constant dense<0.000000e+00> : vector<8x32xf32>
    %82 = tpu.matmul %78, %81, %cst_43 {dimension_numbers = #tpu.dot_dimension_numbers<[1], [0], [0], [1], [0, 0, 1, 1], [], []>} : vector<8x32xf32>, vector<32x32xf32>, vector<8x32xf32> -> vector<8x32xf32>
    %83 = arith.addf %80, %82 : vector<8x32xf32>
    %c0_44 = arith.constant 0 : index
    %c0_45 = arith.constant 0 : index
    %84 = vector.load %arg7[%c0_44, %c0_45] : memref<1x32xf32, #tpu.memory_space<vmem>>, vector<1x32xf32>
    %85 = vector.broadcast %84 : vector<1x32xf32> to vector<8x32xf32>
    %86 = arith.addf %83, %85 : vector<8x32xf32>
    %cst_46 = arith.constant 0.000000e+00 : f32
    %87 = vector.broadcast %cst_46 : f32 to vector<8x32xf32>
    %88 = arith.maximumf %86, %87 : vector<8x32xf32>
    %c0_47 = arith.constant 0 : index
    %c0_48 = arith.constant 0 : index
    %89 = vector.load %arg8[%c0_47, %c0_48] : memref<1x32xf32, #tpu.memory_space<vmem>>, vector<1x32xf32>
    %90 = vector.broadcast %89 : vector<1x32xf32> to vector<8x32xf32>
    %91 = arith.mulf %88, %90 : vector<8x32xf32>
    %c0_49 = arith.constant 0 : index
    %c0_50 = arith.constant 0 : index
    %92 = vector.load %arg9[%c0_49, %c0_50] : memref<1x32xf32, #tpu.memory_space<vmem>>, vector<1x32xf32>
    %93 = vector.broadcast %92 : vector<1x32xf32> to vector<8x32xf32>
    %94 = arith.addf %91, %93 : vector<8x32xf32>
    %c0_51 = arith.constant 0 : index
    %c0_52 = arith.constant 0 : index
    %95 = vector.load %arg10[%c0_51, %c0_52] : memref<32x128xf32, #tpu.memory_space<vmem>>, vector<32x128xf32>
    %cst_53 = arith.constant dense<0.000000e+00> : vector<8x128xf32>
    %96 = tpu.matmul %94, %95, %cst_53 {dimension_numbers = #tpu.dot_dimension_numbers<[1], [0], [0], [1], [0, 0, 1, 1], [], []>} : vector<8x32xf32>, vector<32x128xf32>, vector<8x128xf32> -> vector<8x128xf32>
    %c0_54 = arith.constant 0 : index
    %c0_55 = arith.constant 0 : index
    %97 = vector.load %arg11[%c0_54, %c0_55] : memref<1x128xf32, #tpu.memory_space<vmem>>, vector<1x128xf32>
    %98 = vector.broadcast %97 : vector<1x128xf32> to vector<8x128xf32>
    %99 = arith.addf %96, %98 : vector<8x128xf32>
    %c0_56 = arith.constant 0 : index
    %c0_57 = arith.constant 0 : index
    %100 = vector.load %arg12[%c0_56, %c0_57] : memref<128x128xf32, #tpu.memory_space<vmem>>, vector<128x128xf32>
    %cst_58 = arith.constant dense<0.000000e+00> : vector<8x128xf32>
    %101 = tpu.matmul %99, %100, %cst_58 {dimension_numbers = #tpu.dot_dimension_numbers<[1], [0], [0], [1], [0, 0, 1, 1], [], []>} : vector<8x128xf32>, vector<128x128xf32>, vector<8x128xf32> -> vector<8x128xf32>
    %c0_59 = arith.constant 0 : index
    %c0_60 = arith.constant 0 : index
    %102 = vector.load %arg13[%c0_59, %c0_60] : memref<1x128xf32, #tpu.memory_space<vmem>>, vector<1x128xf32>
    %103 = vector.broadcast %102 : vector<1x128xf32> to vector<8x128xf32>
    %104 = arith.addf %101, %103 : vector<8x128xf32>
    %cst_61 = arith.constant 0.000000e+00 : f32
    %105 = vector.broadcast %cst_61 : f32 to vector<8x128xf32>
    %106 = arith.cmpf ogt, %104, %105 : vector<8x128xf32>
    %cst_62 = arith.constant 1.000000e-01 : f32
    %107 = vector.broadcast %cst_62 : f32 to vector<8x128xf32>
    %108 = arith.mulf %107, %104 : vector<8x128xf32>
    %109 = arith.select %106, %104, %108 : vector<8x128xi1>, vector<8x128xf32>
    %c0_63 = arith.constant 0 : index
    %c0_64 = arith.constant 0 : index
    %110 = vector.load %arg14[%c0_63, %c0_64] : memref<128x64xf32, #tpu.memory_space<vmem>>, vector<128x64xf32>
    %cst_65 = arith.constant dense<0.000000e+00> : vector<8x64xf32>
    %111 = tpu.matmul %109, %110, %cst_65 {dimension_numbers = #tpu.dot_dimension_numbers<[1], [0], [0], [1], [0, 0, 1, 1], [], []>} : vector<8x128xf32>, vector<128x64xf32>, vector<8x64xf32> -> vector<8x64xf32>
    %c0_66 = arith.constant 0 : index
    %c0_67 = arith.constant 0 : index
    %112 = vector.load %arg15[%c0_66, %c0_67] : memref<1x64xf32, #tpu.memory_space<vmem>>, vector<1x64xf32>
    %113 = vector.broadcast %112 : vector<1x64xf32> to vector<8x64xf32>
    %114 = arith.addf %111, %113 : vector<8x64xf32>
    %cst_68 = arith.constant 0.000000e+00 : f32
    %115 = vector.broadcast %cst_68 : f32 to vector<8x64xf32>
    %116 = arith.cmpf ogt, %114, %115 : vector<8x64xf32>
    %cst_69 = arith.constant 1.000000e-01 : f32
    %117 = vector.broadcast %cst_69 : f32 to vector<8x64xf32>
    %118 = arith.mulf %117, %114 : vector<8x64xf32>
    %119 = arith.select %116, %114, %118 : vector<8x64xi1>, vector<8x64xf32>
    %c0_70 = arith.constant 0 : index
    %c0_71 = arith.constant 0 : index
    %120 = vector.load %arg16[%c0_70, %c0_71] : memref<64x128xf32, #tpu.memory_space<vmem>>, vector<64x128xf32>
    %cst_72 = arith.constant dense<0.000000e+00> : vector<8x128xf32>
    %121 = tpu.matmul %119, %120, %cst_72 {dimension_numbers = #tpu.dot_dimension_numbers<[1], [0], [0], [1], [0, 0, 1, 1], [], []>} : vector<8x64xf32>, vector<64x128xf32>, vector<8x128xf32> -> vector<8x128xf32>
    %c0_73 = arith.constant 0 : index
    %c0_74 = arith.constant 0 : index
    %122 = vector.load %arg17[%c0_73, %c0_74] : memref<1x128xf32, #tpu.memory_space<vmem>>, vector<1x128xf32>
    %123 = vector.broadcast %122 : vector<1x128xf32> to vector<8x128xf32>
    %124 = arith.addf %121, %123 : vector<8x128xf32>
    %c0_75 = arith.constant 0 : index
    %c0_76 = arith.constant 0 : index
    %125 = vector.load %arg18[%c0_75, %c0_76] : memref<8x128xf32, #tpu.memory_space<vmem>>, vector<8x128xf32>
    tpu.vector_store %arg18[%c0_75, %c0_76], %124 {strides = array<i32>} : memref<8x128xf32, #tpu.memory_space<vmem>>, vector<8x128xf32>,
    return
  }
  func.func @transform_0(%arg0: i32) -> (i32, i32, i32) {
    %c0_i32 = arith.constant 0 : i32
    %c0_i32_0 = arith.constant 0 : i32
    %c0_i32_1 = arith.constant 0 : i32
    return %arg0, %c0_i32, %c0_i32_0 : i32, i32, i32
  }
  func.func @transform_1(%arg0: i32) -> (i32, i32, i32) {
    %c0_i32 = arith.constant 0 : i32
    %c0_i32_0 = arith.constant 0 : i32
    %c0_i32_1 = arith.constant 0 : i32
    %c0_i32_2 = arith.constant 0 : i32
    return %c0_i32, %c0_i32_0, %c0_i32_1 : i32, i32, i32
  }
  func.func @transform_2(%arg0: i32) -> (i32, i32) {
    %c0_i32 = arith.constant 0 : i32
    %c0_i32_0 = arith.constant 0 : i32
    %c0_i32_1 = arith.constant 0 : i32
    return %c0_i32, %c0_i32_0 : i32, i32
  }
  func.func @transform_3(%arg0: i32) -> (i32, i32) {
    %c0_i32 = arith.constant 0 : i32
    %c0_i32_0 = arith.constant 0 : i32
    %c0_i32_1 = arith.constant 0 : i32
    return %c0_i32, %c0_i32_0 : i32, i32
  }
  func.func @transform_4(%arg0: i32) -> (i32, i32) {
    %c0_i32 = arith.constant 0 : i32
    %c0_i32_0 = arith.constant 0 : i32
    %c0_i32_1 = arith.constant 0 : i32
    return %c0_i32, %c0_i32_0 : i32, i32
  }
  func.func @transform_5(%arg0: i32) -> (i32, i32) {
    %c0_i32 = arith.constant 0 : i32
    %c0_i32_0 = arith.constant 0 : i32
    %c0_i32_1 = arith.constant 0 : i32
    return %c0_i32, %c0_i32_0 : i32, i32
  }
  func.func @transform_6(%arg0: i32) -> (i32, i32) {
    %c0_i32 = arith.constant 0 : i32
    %c0_i32_0 = arith.constant 0 : i32
    %c0_i32_1 = arith.constant 0 : i32
    return %c0_i32, %c0_i32_0 : i32, i32
  }
  func.func @transform_7(%arg0: i32) -> (i32, i32) {
    %c0_i32 = arith.constant 0 : i32
    %c0_i32_0 = arith.constant 0 : i32
    %c0_i32_1 = arith.constant 0 : i32
    return %c0_i32, %c0_i32_0 : i32, i32
  }
  func.func @transform_8(%arg0: i32) -> (i32, i32) {
    %c0_i32 = arith.constant 0 : i32
    %c0_i32_0 = arith.constant 0 : i32
    %c0_i32_1 = arith.constant 0 : i32
    return %c0_i32, %c0_i32_0 : i32, i32
  }
  func.func @transform_9(%arg0: i32) -> (i32, i32) {
    %c0_i32 = arith.constant 0 : i32
    %c0_i32_0 = arith.constant 0 : i32
    %c0_i32_1 = arith.constant 0 : i32
    return %c0_i32, %c0_i32_0 : i32, i32
  }
  func.func @transform_10(%arg0: i32) -> (i32, i32) {
    %c0_i32 = arith.constant 0 : i32
    %c0_i32_0 = arith.constant 0 : i32
    %c0_i32_1 = arith.constant 0 : i32
    return %c0_i32, %c0_i32_0 : i32, i32
  }
  func.func @transform_11(%arg0: i32) -> (i32, i32) {
    %c0_i32 = arith.constant 0 : i32
    %c0_i32_0 = arith.constant 0 : i32
    %c0_i32_1 = arith.constant 0 : i32
    return %c0_i32, %c0_i32_0 : i32, i32
  }
  func.func @transform_12(%arg0: i32) -> (i32, i32) {
    %c0_i32 = arith.constant 0 : i32
    %c0_i32_0 = arith.constant 0 : i32
    %c0_i32_1 = arith.constant 0 : i32
    return %c0_i32, %c0_i32_0 : i32, i32
  }
  func.func @transform_13(%arg0: i32) -> (i32, i32) {
    %c0_i32 = arith.constant 0 : i32
    %c0_i32_0 = arith.constant 0 : i32
    %c0_i32_1 = arith.constant 0 : i32
    return %c0_i32, %c0_i32_0 : i32, i32
  }
  func.func @transform_14(%arg0: i32) -> (i32, i32) {
    %c0_i32 = arith.constant 0 : i32
    %c0_i32_0 = arith.constant 0 : i32
    %c0_i32_1 = arith.constant 0 : i32
    return %c0_i32, %c0_i32_0 : i32, i32
  }
  func.func @transform_15(%arg0: i32) -> (i32, i32) {
    %c0_i32 = arith.constant 0 : i32
    %c0_i32_0 = arith.constant 0 : i32
    %c0_i32_1 = arith.constant 0 : i32
    return %c0_i32, %c0_i32_0 : i32, i32
  }
  func.func @transform_16(%arg0: i32) -> (i32, i32) {
    %c0_i32 = arith.constant 0 : i32
    %c0_i32_0 = arith.constant 0 : i32
    %c0_i32_1 = arith.constant 0 : i32
    return %c0_i32, %c0_i32_0 : i32, i32
  }
  func.func @transform_17(%arg0: i32) -> (i32, i32) {
    %c0_i32 = arith.constant 0 : i32
    %c0_i32_0 = arith.constant 0 : i32
    return %arg0, %c0_i32 : i32, i32
  }
}

</mosaic_0001>

<llo_original>
// kernel: tpu_custom_call.1
$region0: #{tpu_custom_call.1}
  #allocation0 [shape = 'u32[]', space=smem, size = 0x4, offset = 0x4, fixed_abs, tag = 'smem constant byte address 0x4 - core index']
  #allocation1 [shape = 'u32[72,128]{1,0:T(1,128)}', space=vmem, size = 0x9000, scoped, tag = 'internal scratch']
  %s0 = inlined_call_operand.hbm [shape: f32[16,24,32], index: 0, kind: input, shape index: {}]
  %s1 = inlined_call_operand.hbm [shape: f32[9,32,256], index: 1, kind: input, shape index: {}]
  %s2 = inlined_call_operand.vmem [shape: f32[1,32], index: 2, kind: input, shape index: {}]
  %s3 = inlined_call_operand.vmem [shape: f32[1,32], index: 3, kind: input, shape index: {}]
  %s4 = inlined_call_operand.hbm [shape: f32[32,32], index: 4, kind: input, shape index: {}]
  %s5 = inlined_call_operand.hbm [shape: f32[32,32], index: 5, kind: input, shape index: {}]
  %s6 = inlined_call_operand.vmem [shape: f32[1,32], index: 6, kind: input, shape index: {}]
  %s7 = inlined_call_operand.vmem [shape: f32[1,32], index: 7, kind: input, shape index: {}]
  %s8 = inlined_call_operand.vmem [shape: f32[1,32], index: 8, kind: input, shape index: {}]
  %s9 = inlined_call_operand.hbm [shape: f32[32,128], index: 9, kind: input, shape index: {}]
  %s10 = inlined_call_operand.vmem [shape: f32[1,128], index: 10, kind: input, shape index: {}]
  %s11 = inlined_call_operand.vmem [shape: f32[128,128], index: 11, kind: input, shape index: {}]
  %s12 = inlined_call_operand.vmem [shape: f32[1,128], index: 12, kind: input, shape index: {}]
  %s13 = inlined_call_operand.vmem [shape: f32[128,64], index: 13, kind: input, shape index: {}]
  %s14 = inlined_call_operand.vmem [shape: f32[1,64], index: 14, kind: input, shape index: {}]
  %s15 = inlined_call_operand.vmem [shape: f32[64,128], index: 15, kind: input, shape index: {}]
  %s16 = inlined_call_operand.vmem [shape: f32[1,128], index: 16, kind: input, shape index: {}]
  %s17 = inlined_call_operand.hbm [shape: f32[16,128], index: 17, kind: output, shape index: {}]
  %s18 = sld [smem:[#allocation0]]
  $region121: #{tpu_custom_call.1} parent=0
    _
  %s20 = ssub.s32 1, %s18
  %s21 = scalar_select 0, %s20, %s18
  $region1: #{tpu_custom_call.1} parent=0
    #allocation2 [shape = 'u8[196608]{0}', space=vmem, size = 0x30000, scoped, tag = 'input window, operand 0']
    #allocation3 [shape = 's32[2]{0}', space=sflag, size = 0x8, scoped, tag = 'scoped memory for tpu_custom_call.1']
    #allocation4 [shape = 's32[2]{0}', space=sflag, size = 0x8, scoped, tag = 'scoped memory for tpu_custom_call.1']
    #allocation5 [shape = 'u8[294912]{0}', space=vmem, size = 0x48000, scoped, tag = 'input window, operand 1, single buffered']
    #allocation6 [shape = 's32[1]{0}', space=sflag, size = 0x4, scoped, tag = 'scoped memory for tpu_custom_call.1']
    #allocation7 [shape = 'u8[16384]{0}', space=vmem, size = 0x4000, scoped, tag = 'input window, operand 4, single buffered']
    #allocation8 [shape = 'u8[16384]{0}', space=vmem, size = 0x4000, scoped, tag = 'input window, operand 5, single buffered']
    #allocation9 [shape = 's32[1]{0}', space=sflag, size = 0x4, scoped, tag = 'scoped memory for tpu_custom_call.1']
    #allocation10 [shape = 'u8[16384]{0}', space=vmem, size = 0x4000, scoped, tag = 'input window, operand 9, single buffered']
    #allocation11 [shape = 'u8[8192]{0}', space=vmem, size = 0x2000, scoped, tag = 'output window, operand 0']
    %22 = vsyncpa [#allocation3], 0
    %s23 = scalar_lea.sflag [#allocation3], 1
    %24 = vsyncpa %s23, 0
    %25 = vsyncpa [#allocation6], 0
    %26 = vsyncpa [#allocation9], 0
    %27 = vsyncpa [#allocation4], 0
    %s28 = scalar_lea.sflag [#allocation4], 1
    %29 = vsyncpa %s28, 0
    loop: start=0, step=1, limit=4
    $region2: #{tpu_custom_call.1} parent=1 // loop_pre_header
      _
    $region3: #{tpu_custom_call.1} parent=1 // loop_header
      %s31 = sphi 0, %s35
      %p32 = scmp.ge.s32.totalorder %s31, 4
      %s41 = sphi 0, %s43
      %s44 = sphi 0, %s41
      %s45 = sphi 0, %s44
      %s61 = sphi 0, %s45
      %s65 = sphi 0, %s65
      %s67 = sphi 0, %s65
      %s68 = sphi 0, %s67
      %s82 = sphi 0, %s68
      %s86 = sphi 0, %s86
      %s88 = sphi 0, %s86
      %s89 = sphi 0, %s88
      %s103 = sphi 0, %s89
      %s107 = sphi 0, %s107
      %s109 = sphi 0, %s107
      %s110 = sphi 0, %s109
      %s124 = sphi 0, %s110
      %s128 = sphi 0, %s128
      %s130 = sphi 0, %s128
      %s131 = sphi 0, %s130
      %s145 = sphi 0, %s131
      %s149 = sphi 0, %s149
      %s151 = sphi 0, %s149
      %s152 = sphi 0, %s151
      %s166 = sphi 0, %s152
      %s170 = sphi 0, %s170
      %s172 = sphi 0, %s170
      %s173 = sphi 0, %s172
      %s187 = sphi 0, %s173
      %s191 = sphi 0, %s191
      %s193 = sphi 0, %s191
      %s194 = sphi 0, %s193
      %s208 = sphi 0, %s194
      %s212 = sphi 0, %s212
      %s214 = sphi 0, %s212
      %s215 = sphi 0, %s214
      %s229 = sphi 0, %s215
      %s233 = sphi 0, %s233
      %s235 = sphi 0, %s233
      %s236 = sphi 0, %s235
      %s250 = sphi 0, %s236
      %s254 = sphi 0, %s254
      %s256 = sphi 0, %s254
      %s257 = sphi 0, %s256
      %s271 = sphi 0, %s257
      %s275 = sphi 0, %s275
      %s277 = sphi 0, %s275
      %s278 = sphi 0, %s277
      %s292 = sphi 0, %s278
      %s296 = sphi 0, %s296
      %s298 = sphi 0, %s296
      %s299 = sphi 0, %s298
      %s313 = sphi 0, %s299
      %s317 = sphi 0, %s317
      %s319 = sphi 0, %s317
      %s320 = sphi 0, %s319
      %s334 = sphi 0, %s320
      %s338 = sphi 0, %s338
      %s340 = sphi 0, %s338
      %s341 = sphi 0, %s340
      %s355 = sphi 0, %s341
      %s359 = sphi 0, %s359
      %s361 = sphi 0, %s359
      %s362 = sphi 0, %s361
      %s376 = sphi 0, %s362
      %s380 = sphi 0, %s380
      %s382 = sphi 0, %s380
      %s383 = sphi 0, %s382
      %s397 = sphi 0, %s383
      %s403 = sphi 0, %s405
      %s406 = sphi 0, %s403
      %s407 = sphi 0, %s406
      %s423 = sphi 0, %s407
    $region4: #{tpu_custom_call.1} parent=1 // loop_header_branch
      %34 = sbr.rel (%p32) target = $region8
    $region5: #{tpu_custom_call.1} parent=1 // loop_body
      %s36 = ssub.s32 %s31, 1
      %s37 = ssub.s32 %s31, 2
      %s38 = sadd.s32 %s31, 1
      %s39 = ssub.s32 %s31, %s38
      %p40 = scmp.eq.s32.totalorder %s39, 0
      %s42 = sadd.s32 %s41, 1
      %s43 = scalar_select %p40, %s41, %s42
      %p46 = pneg %p40
      %p47 = scmp.eq.s32.totalorder %s31, 1
      %p48 = por %p46, %p47
      %p49 = scmp.ne.s32.totalorder %s41, %s44
      %p50 = scmp.eq.s32.totalorder %s31, 0
      %p51 = por %p49, %p50
      %p52 = scmp.ne.s32.totalorder %s41, %s44
      %p53 = scmp.eq.s32.totalorder %s36, 1
      %p54 = por %p52, %p53
      %p55 = scmp.ne.s32.totalorder %s44, %s45
      %p56 = scmp.eq.s32.totalorder %s36, 0
      %p57 = por %p55, %p56
      %p58 = scmp.ne.s32.totalorder %s44, %s45
      %p59 = scmp.eq.s32.totalorder %s37, 1
      %p60 = por %p58, %p59
      %p62 = scmp.ne.s32.totalorder %s45, %s61
      %p63 = scmp.eq.s32.totalorder %s37, 0
      %p64 = por %p62, %p63
      %s66 = sadd.s32 %s65, 1
      %p69 = scmp.eq.s32.totalorder %s31, 1
      %p70 = scmp.ne.s32.totalorder %s65, %s67
      %p71 = scmp.eq.s32.totalorder %s31, 0
      %p72 = por %p70, %p71
      %p73 = scmp.ne.s32.totalorder %s65, %s67
      %p74 = scmp.eq.s32.totalorder %s36, 1
      %p75 = por %p73, %p74
      %p76 = scmp.ne.s32.totalorder %s67, %s68
      %p77 = scmp.eq.s32.totalorder %s36, 0
      %p78 = por %p76, %p77
      %p79 = scmp.ne.s32.totalorder %s67, %s68
      %p80 = scmp.eq.s32.totalorder %s37, 1
      %p81 = por %p79, %p80
      %p83 = scmp.ne.s32.totalorder %s68, %s82
      %p84 = scmp.eq.s32.totalorder %s37, 0
      %p85 = por %p83, %p84
      %s87 = sadd.s32 %s86, 1
      %p90 = scmp.eq.s32.totalorder %s31, 1
      %p91 = scmp.ne.s32.totalorder %s86, %s88
      %p92 = scmp.eq.s32.totalorder %s31, 0
      %p93 = por %p91, %p92
      %p94 = scmp.ne.s32.totalorder %s86, %s88
      %p95 = scmp.eq.s32.totalorder %s36, 1
      %p96 = por %p94, %p95
      %p97 = scmp.ne.s32.totalorder %s88, %s89
      %p98 = scmp.eq.s32.totalorder %s36, 0
      %p99 = por %p97, %p98
      %p100 = scmp.ne.s32.totalorder %s88, %s89
      %p101 = scmp.eq.s32.totalorder %s37, 1
      %p102 = por %p100, %p101
      %p104 = scmp.ne.s32.totalorder %s89, %s103
      %p105 = scmp.eq.s32.totalorder %s37, 0
      %p106 = por %p104, %p105
      %s108 = sadd.s32 %s107, 1
      %p111 = scmp.eq.s32.totalorder %s31, 1
      %p112 = scmp.ne.s32.totalorder %s107, %s109
      %p113 = scmp.eq.s32.totalorder %s31, 0
      %p114 = por %p112, %p113
      %p115 = scmp.ne.s32.totalorder %s107, %s109
      %p116 = scmp.eq.s32.totalorder %s36, 1
      %p117 = por %p115, %p116
      %p118 = scmp.ne.s32.totalorder %s109, %s110
      %p119 = scmp.eq.s32.totalorder %s36, 0
      %p120 = por %p118, %p119
      %p121 = scmp.ne.s32.totalorder %s109, %s110
      %p122 = scmp.eq.s32.totalorder %s37, 1
      %p123 = por %p121, %p122
      %p125 = scmp.ne.s32.totalorder %s110, %s124
      %p126 = scmp.eq.s32.totalorder %s37, 0
      %p127 = por %p125, %p126
      %s129 = sadd.s32 %s128, 1
      %p132 = scmp.eq.s32.totalorder %s31, 1
      %p133 = scmp.ne.s32.totalorder %s128, %s130
      %p134 = scmp.eq.s32.totalorder %s31, 0
      %p135 = por %p133, %p134
      %p136 = scmp.ne.s32.totalorder %s128, %s130
      %p137 = scmp.eq.s32.totalorder %s36, 1
      %p138 = por %p136, %p137
      %p139 = scmp.ne.s32.totalorder %s130, %s131
      %p140 = scmp.eq.s32.totalorder %s36, 0
      %p141 = por %p139, %p140
      %p142 = scmp.ne.s32.totalorder %s130, %s131
      %p143 = scmp.eq.s32.totalorder %s37, 1
      %p144 = por %p142, %p143
      %p146 = scmp.ne.s32.totalorder %s131, %s145
      %p147 = scmp.eq.s32.totalorder %s37, 0
      %p148 = por %p146, %p147
      %s150 = sadd.s32 %s149, 1
      %p153 = scmp.eq.s32.totalorder %s31, 1
      %p154 = scmp.ne.s32.totalorder %s149, %s151
      %p155 = scmp.eq.s32.totalorder %s31, 0
      %p156 = por %p154, %p155
      %p157 = scmp.ne.s32.totalorder %s149, %s151
      %p158 = scmp.eq.s32.totalorder %s36, 1
      %p159 = por %p157, %p158
      %p160 = scmp.ne.s32.totalorder %s151, %s152
      %p161 = scmp.eq.s32.totalorder %s36, 0
      %p162 = por %p160, %p161
      %p163 = scmp.ne.s32.totalorder %s151, %s152
      %p164 = scmp.eq.s32.totalorder %s37, 1
      %p165 = por %p163, %p164
      %p167 = scmp.ne.s32.totalorder %s152, %s166
      %p168 = scmp.eq.s32.totalorder %s37, 0
      %p169 = por %p167, %p168
      %s171 = sadd.s32 %s170, 1
      %p174 = scmp.eq.s32.totalorder %s31, 1
      %p175 = scmp.ne.s32.totalorder %s170, %s172
      %p176 = scmp.eq.s32.totalorder %s31, 0
      %p177 = por %p175, %p176
      %p178 = scmp.ne.s32.totalorder %s170, %s172
      %p179 = scmp.eq.s32.totalorder %s36, 1
      %p180 = por %p178, %p179
      %p181 = scmp.ne.s32.totalorder %s172, %s173
      %p182 = scmp.eq.s32.totalorder %s36, 0
      %p183 = por %p181, %p182
      %p184 = scmp.ne.s32.totalorder %s172, %s173
      %p185 = scmp.eq.s32.totalorder %s37, 1
      %p186 = por %p184, %p185
      %p188 = scmp.ne.s32.totalorder %s173, %s187
      %p189 = scmp.eq.s32.totalorder %s37, 0
      %p190 = por %p188, %p189
      %s192 = sadd.s32 %s191, 1
      %p195 = scmp.eq.s32.totalorder %s31, 1
      %p196 = scmp.ne.s32.totalorder %s191, %s193
      %p197 = scmp.eq.s32.totalorder %s31, 0
      %p198 = por %p196, %p197
      %p199 = scmp.ne.s32.totalorder %s191, %s193
      %p200 = scmp.eq.s32.totalorder %s36, 1
      %p201 = por %p199, %p200
      %p202 = scmp.ne.s32.totalorder %s193, %s194
      %p203 = scmp.eq.s32.totalorder %s36, 0
      %p204 = por %p202, %p203
      %p205 = scmp.ne.s32.totalorder %s193, %s194
      %p206 = scmp.eq.s32.totalorder %s37, 1
      %p207 = por %p205, %p206
      %p209 = scmp.ne.s32.totalorder %s194, %s208
      %p210 = scmp.eq.s32.totalorder %s37, 0
      %p211 = por %p209, %p210
      %s213 = sadd.s32 %s212, 1
      %p216 = scmp.eq.s32.totalorder %s31, 1
      %p217 = scmp.ne.s32.totalorder %s212, %s214
      %p218 = scmp.eq.s32.totalorder %s31, 0
      %p219 = por %p217, %p218
      %p220 = scmp.ne.s32.totalorder %s212, %s214
      %p221 = scmp.eq.s32.totalorder %s36, 1
      %p222 = por %p220, %p221
      %p223 = scmp.ne.s32.totalorder %s214, %s215
      %p224 = scmp.eq.s32.totalorder %s36, 0
      %p225 = por %p223, %p224
      %p226 = scmp.ne.s32.totalorder %s214, %s215
      %p227 = scmp.eq.s32.totalorder %s37, 1
      %p228 = por %p226, %p227
      %p230 = scmp.ne.s32.totalorder %s215, %s229
      %p231 = scmp.eq.s32.totalorder %s37, 0
      %p232 = por %p230, %p231
      %s234 = sadd.s32 %s233, 1
      %p237 = scmp.eq.s32.totalorder %s31, 1
      %p238 = scmp.ne.s32.totalorder %s233, %s235
      %p239 = scmp.eq.s32.totalorder %s31, 0
      %p240 = por %p238, %p239
      %p241 = scmp.ne.s32.totalorder %s233, %s235
      %p242 = scmp.eq.s32.totalorder %s36, 1
      %p243 = por %p241, %p242
      %p244 = scmp.ne.s32.totalorder %s235, %s236
      %p245 = scmp.eq.s32.totalorder %s36, 0
      %p246 = por %p244, %p245
      %p247 = scmp.ne.s32.totalorder %s235, %s236
      %p248 = scmp.eq.s32.totalorder %s37, 1
      %p249 = por %p247, %p248
      %p251 = scmp.ne.s32.totalorder %s236, %s250
      %p252 = scmp.eq.s32.totalorder %s37, 0
      %p253 = por %p251, %p252
      %s255 = sadd.s32 %s254, 1
      %p258 = scmp.eq.s32.totalorder %s31, 1
      %p259 = scmp.ne.s32.totalorder %s254, %s256
      %p260 = scmp.eq.s32.totalorder %s31, 0
      %p261 = por %p259, %p260
      %p262 = scmp.ne.s32.totalorder %s254, %s256
      %p263 = scmp.eq.s32.totalorder %s36, 1
      %p264 = por %p262, %p263
      %p265 = scmp.ne.s32.totalorder %s256, %s257
      %p266 = scmp.eq.s32.totalorder %s36, 0
      %p267 = por %p265, %p266
      %p268 = scmp.ne.s32.totalorder %s256, %s257
      %p269 = scmp.eq.s32.totalorder %s37, 1
      %p270 = por %p268, %p269
      %p272 = scmp.ne.s32.totalorder %s257, %s271
      %p273 = scmp.eq.s32.totalorder %s37, 0
      %p274 = por %p272, %p273
      %s276 = sadd.s32 %s275, 1
      %p279 = scmp.eq.s32.totalorder %s31, 1
      %p280 = scmp.ne.s32.totalorder %s275, %s277
      %p281 = scmp.eq.s32.totalorder %s31, 0
      %p282 = por %p280, %p281
      %p283 = scmp.ne.s32.totalorder %s275, %s277
      %p284 = scmp.eq.s32.totalorder %s36, 1
      %p285 = por %p283, %p284
      %p286 = scmp.ne.s32.totalorder %s277, %s278
      %p287 = scmp.eq.s32.totalorder %s36, 0
      %p288 = por %p286, %p287
      %p289 = scmp.ne.s32.totalorder %s277, %s278
      %p290 = scmp.eq.s32.totalorder %s37, 1
      %p291 = por %p289, %p290
      %p293 = scmp.ne.s32.totalorder %s278, %s292
      %p294 = scmp.eq.s32.totalorder %s37, 0
      %p295 = por %p293, %p294
      %s297 = sadd.s32 %s296, 1
      %p300 = scmp.eq.s32.totalorder %s31, 1
      %p301 = scmp.ne.s32.totalorder %s296, %s298
      %p302 = scmp.eq.s32.totalorder %s31, 0
      %p303 = por %p301, %p302
      %p304 = scmp.ne.s32.totalorder %s296, %s298
      %p305 = scmp.eq.s32.totalorder %s36, 1
      %p306 = por %p304, %p305
      %p307 = scmp.ne.s32.totalorder %s298, %s299
      %p308 = scmp.eq.s32.totalorder %s36, 0
      %p309 = por %p307, %p308
      %p310 = scmp.ne.s32.totalorder %s298, %s299
      %p311 = scmp.eq.s32.totalorder %s37, 1
      %p312 = por %p310, %p311
      %p314 = scmp.ne.s32.totalorder %s299, %s313
      %p315 = scmp.eq.s32.totalorder %s37, 0
      %p316 = por %p314, %p315
      %s318 = sadd.s32 %s317, 1
      %p321 = scmp.eq.s32.totalorder %s31, 1
      %p322 = scmp.ne.s32.totalorder %s317, %s319
      %p323 = scmp.eq.s32.totalorder %s31, 0
      %p324 = por %p322, %p323
      %p325 = scmp.ne.s32.totalorder %s317, %s319
      %p326 = scmp.eq.s32.totalorder %s36, 1
      %p327 = por %p325, %p326
      %p328 = scmp.ne.s32.totalorder %s319, %s320
      %p329 = scmp.eq.s32.totalorder %s36, 0
      %p330 = por %p328, %p329
      %p331 = scmp.ne.s32.totalorder %s319, %s320
      %p332 = scmp.eq.s32.totalorder %s37, 1
      %p333 = por %p331, %p332
      %p335 = scmp.ne.s32.totalorder %s320, %s334
      %p336 = scmp.eq.s32.totalorder %s37, 0
      %p337 = por %p335, %p336
      %s339 = sadd.s32 %s338, 1
      %p342 = scmp.eq.s32.totalorder %s31, 1
      %p343 = scmp.ne.s32.totalorder %s338, %s340
      %p344 = scmp.eq.s32.totalorder %s31, 0
      %p345 = por %p343, %p344
      %p346 = scmp.ne.s32.totalorder %s338, %s340
      %p347 = scmp.eq.s32.totalorder %s36, 1
      %p348 = por %p346, %p347
      %p349 = scmp.ne.s32.totalorder %s340, %s341
      %p350 = scmp.eq.s32.totalorder %s36, 0
      %p351 = por %p349, %p350
      %p352 = scmp.ne.s32.totalorder %s340, %s341
      %p353 = scmp.eq.s32.totalorder %s37, 1
      %p354 = por %p352, %p353
      %p356 = scmp.ne.s32.totalorder %s341, %s355
      %p357 = scmp.eq.s32.totalorder %s37, 0
      %p358 = por %p356, %p357
      %s360 = sadd.s32 %s359, 1
      %p363 = scmp.eq.s32.totalorder %s31, 1
      %p364 = scmp.ne.s32.totalorder %s359, %s361
      %p365 = scmp.eq.s32.totalorder %s31, 0
      %p366 = por %p364, %p365
      %p367 = scmp.ne.s32.totalorder %s359, %s361
      %p368 = scmp.eq.s32.totalorder %s36, 1
      %p369 = por %p367, %p368
      %p370 = scmp.ne.s32.totalorder %s361, %s362
      %p371 = scmp.eq.s32.totalorder %s36, 0
      %p372 = por %p370, %p371
      %p373 = scmp.ne.s32.totalorder %s361, %s362
      %p374 = scmp.eq.s32.totalorder %s37, 1
      %p375 = por %p373, %p374
      %p377 = scmp.ne.s32.totalorder %s362, %s376
      %p378 = scmp.eq.s32.totalorder %s37, 0
      %p379 = por %p377, %p378
      %s381 = sadd.s32 %s380, 1
      %p384 = scmp.eq.s32.totalorder %s31, 1
      %p385 = scmp.ne.s32.totalorder %s380, %s382
      %p386 = scmp.eq.s32.totalorder %s31, 0
      %p387 = por %p385, %p386
      %p388 = scmp.ne.s32.totalorder %s380, %s382
      %p389 = scmp.eq.s32.totalorder %s36, 1
      %p390 = por %p388, %p389
      %p391 = scmp.ne.s32.totalorder %s382, %s383
      %p392 = scmp.eq.s32.totalorder %s36, 0
      %p393 = por %p391, %p392
      %p394 = scmp.ne.s32.totalorder %s382, %s383
      %p395 = scmp.eq.s32.totalorder %s37, 1
      %p396 = por %p394, %p395
      %p398 = scmp.ne.s32.totalorder %s383, %s397
      %p399 = scmp.eq.s32.totalorder %s37, 0
      %p400 = por %p398, %p399
      %s401 = ssub.s32 %s31, %s38
      %p402 = scmp.eq.s32.totalorder %s401, 0
      %s404 = sadd.s32 %s403, 1
      %s405 = scalar_select %p402, %s403, %s404
      %p408 = pneg %p402
      %p409 = scmp.eq.s32.totalorder %s31, 1
      %p410 = por %p408, %p409
      %p411 = scmp.ne.s32.totalorder %s403, %s406
      %p412 = scmp.eq.s32.totalorder %s31, 0
      %p413 = por %p411, %p412
      %p414 = scmp.ne.s32.totalorder %s403, %s406
      %p415 = scmp.eq.s32.totalorder %s36, 1
      %p416 = por %p414, %p415
      %p417 = scmp.ne.s32.totalorder %s406, %s407
      %p418 = scmp.eq.s32.totalorder %s36, 0
      %p419 = por %p417, %p418
      %p420 = scmp.ne.s32.totalorder %s406, %s407
      %p421 = scmp.eq.s32.totalorder %s37, 1
      %p422 = por %p420, %p421
      %p424 = scmp.ne.s32.totalorder %s407, %s423
      %p425 = scmp.eq.s32.totalorder %s37, 0
      %p426 = por %p424, %p425
      %p427 = scmp.le.s32.totalorder 1, %s31
      %p428 = scmp.lt.s32.totalorder %s31, 3
      %p429 = pnand %p427, %p428
      %p430 = pneg %p429
      // Predicated region
      $region9: #{tpu_custom_call.1} parent=5 // pred_check
        _
      $region10: #{tpu_custom_call.1} parent=5 // pred_check_branch
        %432 = sbr.rel (%p429) target = $region12
      $region11: #{tpu_custom_call.1} parent=5 // pred_region
        %s433 = ssub.s32 %s31, 1
        // Predicated region
        $region13: #{tpu_custom_call.1} parent=11 // pred_check
          %p434 = pneg %p78
        $region14: #{tpu_custom_call.1} parent=11 // pred_check_branch
          %436 = sbr.rel (%p434) target = $region16
        $region15: #{tpu_custom_call.1} parent=11 // pred_region
          %438 = vsyncadd [#allocation6], 0
          %s439 = sshll.u32 %s1, 4
          %s440 = int_to_ptr.hbm [resolvable:$true] %s439
          %s441 = sshll.u32 [#allocation5], 4
          %s442 = int_to_ptr.vmem [resolvable:$true] %s441
          %447 = dma.hbm_to_vmem [thread:$0]  %s440, 9216, %s442, [#allocation6], 256, 256, 16
        $region16: #{tpu_custom_call.1} parent=11 // pred_fallthru
          _
        // Predicated region
        $region17: #{tpu_custom_call.1} parent=11 // pred_check
          %p448 = pneg %p99
        $region18: #{tpu_custom_call.1} parent=11 // pred_check_branch
          %450 = sbr.rel (%p448) target = $region20
        $region19: #{tpu_custom_call.1} parent=11 // pred_region
          _
        $region20: #{tpu_custom_call.1} parent=11 // pred_fallthru
          _
        // Predicated region
        $region21: #{tpu_custom_call.1} parent=11 // pred_check
          %p451 = pneg %p120
        $region22: #{tpu_custom_call.1} parent=11 // pred_check_branch
          %453 = sbr.rel (%p451) target = $region24
        $region23: #{tpu_custom_call.1} parent=11 // pred_region
          _
        $region24: #{tpu_custom_call.1} parent=11 // pred_fallthru
          _
        // Predicated region
        $region25: #{tpu_custom_call.1} parent=11 // pred_check
          %p454 = pneg %p141
        $region26: #{tpu_custom_call.1} parent=11 // pred_check_branch
          %456 = sbr.rel (%p454) target = $region28
        $region27: #{tpu_custom_call.1} parent=11 // pred_region
          %458 = vsyncadd [#allocation6], 0
          %s459 = sshll.u32 %s4, 4
          %s460 = int_to_ptr.hbm [resolvable:$true] %s459
          %s461 = sshll.u32 [#allocation7], 4
          %s462 = int_to_ptr.vmem [resolvable:$true] %s461
          %467 = dma.hbm_to_vmem [thread:$0]  %s460, 512, %s462, [#allocation6], 128, 128, 8
        $region28: #{tpu_custom_call.1} parent=11 // pred_fallthru
          _
        // Predicated region
        $region29: #{tpu_custom_call.1} parent=11 // pred_check
          %p468 = pneg %p162
        $region30: #{tpu_custom_call.1} parent=11 // pred_check_branch
          %470 = sbr.rel (%p468) target = $region32
        $region31: #{tpu_custom_call.1} parent=11 // pred_region
          %472 = vsyncadd [#allocation9], 0
          %s473 = sshll.u32 %s5, 4
          %s474 = int_to_ptr.hbm [resolvable:$true] %s473
          %s475 = sshll.u32 [#allocation8], 4
          %s476 = int_to_ptr.vmem [resolvable:$true] %s475
          %481 = dma.hbm_to_vmem [thread:$0]  %s474, 512, %s476, [#allocation9], 128, 128, 8
        $region32: #{tpu_custom_call.1} parent=11 // pred_fallthru
          _
        // Predicated region
        $region33: #{tpu_custom_call.1} parent=11 // pred_check
          %p482 = pneg %p183
        $region34: #{tpu_custom_call.1} parent=11 // pred_check_branch
          %484 = sbr.rel (%p482) target = $region36
        $region35: #{tpu_custom_call.1} parent=11 // pred_region
          _
        $region36: #{tpu_custom_call.1} parent=11 // pred_fallthru
          _
        // Predicated region
        $region37: #{tpu_custom_call.1} parent=11 // pred_check
          %p485 = pneg %p204
        $region38: #{tpu_custom_call.1} parent=11 // pred_check_branch
          %487 = sbr.rel (%p485) target = $region40
        $region39: #{tpu_custom_call.1} parent=11 // pred_region
          _
        $region40: #{tpu_custom_call.1} parent=11 // pred_fallthru
          _
        // Predicated region
        $region41: #{tpu_custom_call.1} parent=11 // pred_check
          %p488 = pneg %p225
        $region42: #{tpu_custom_call.1} parent=11 // pred_check_branch
          %490 = sbr.rel (%p488) target = $region44
        $region43: #{tpu_custom_call.1} parent=11 // pred_region
          _
        $region44: #{tpu_custom_call.1} parent=11 // pred_fallthru
          _
        // Predicated region
        $region45: #{tpu_custom_call.1} parent=11 // pred_check
          %p491 = pneg %p246
        $region46: #{tpu_custom_call.1} parent=11 // pred_check_branch
          %493 = sbr.rel (%p491) target = $region48
        $region47: #{tpu_custom_call.1} parent=11 // pred_region
          %495 = vsyncadd [#allocation9], 0
          %s496 = sshll.u32 %s9, 4
          %s497 = int_to_ptr.hbm [resolvable:$true] %s496
          %s498 = sshll.u32 [#allocation10], 4
          %s499 = int_to_ptr.vmem [resolvable:$true] %s498
          %504 = dma.hbm_to_vmem [thread:$0]  %s497, 512, %s499, [#allocation9], 128, 128, 8
        $region48: #{tpu_custom_call.1} parent=11 // pred_fallthru
          _
        // Predicated region
        $region49: #{tpu_custom_call.1} parent=11 // pred_check
          %p505 = pneg %p267
        $region50: #{tpu_custom_call.1} parent=11 // pred_check_branch
          %507 = sbr.rel (%p505) target = $region52
        $region51: #{tpu_custom_call.1} parent=11 // pred_region
          _
        $region52: #{tpu_custom_call.1} parent=11 // pred_fallthru
          _
        // Predicated region
        $region53: #{tpu_custom_call.1} parent=11 // pred_check
          %p508 = pneg %p288
        $region54: #{tpu_custom_call.1} parent=11 // pred_check_branch
          %510 = sbr.rel (%p508) target = $region56
        $region55: #{tpu_custom_call.1} parent=11 // pred_region
          _
        $region56: #{tpu_custom_call.1} parent=11 // pred_fallthru
          _
        // Predicated region
        $region57: #{tpu_custom_call.1} parent=11 // pred_check
          %p511 = pneg %p309
        $region58: #{tpu_custom_call.1} parent=11 // pred_check_branch
          %513 = sbr.rel (%p511) target = $region60
        $region59: #{tpu_custom_call.1} parent=11 // pred_region
          _
        $region60: #{tpu_custom_call.1} parent=11 // pred_fallthru
          _
        // Predicated region
        $region61: #{tpu_custom_call.1} parent=11 // pred_check
          %p514 = pneg %p330
        $region62: #{tpu_custom_call.1} parent=11 // pred_check_branch
          %516 = sbr.rel (%p514) target = $region64
        $region63: #{tpu_custom_call.1} parent=11 // pred_region
          _
        $region64: #{tpu_custom_call.1} parent=11 // pred_fallthru
          _
        // Predicated region
        $region65: #{tpu_custom_call.1} parent=11 // pred_check
          %p517 = pneg %p351
        $region66: #{tpu_custom_call.1} parent=11 // pred_check_branch
          %519 = sbr.rel (%p517) target = $region68
        $region67: #{tpu_custom_call.1} parent=11 // pred_region
          _
        $region68: #{tpu_custom_call.1} parent=11 // pred_fallthru
          _
        // Predicated region
        $region69: #{tpu_custom_call.1} parent=11 // pred_check
          %p520 = pneg %p372
        $region70: #{tpu_custom_call.1} parent=11 // pred_check_branch
          %522 = sbr.rel (%p520) target = $region72
        $region71: #{tpu_custom_call.1} parent=11 // pred_region
          _
        $region72: #{tpu_custom_call.1} parent=11 // pred_fallthru
          _
        // Predicated region
        $region73: #{tpu_custom_call.1} parent=11 // pred_check
          %p523 = pneg %p393
        $region74: #{tpu_custom_call.1} parent=11 // pred_check_branch
          %525 = sbr.rel (%p523) target = $region76
        $region75: #{tpu_custom_call.1} parent=11 // pred_region
          _
        $region76: #{tpu_custom_call.1} parent=11 // pred_fallthru
          _
      $region12: #{tpu_custom_call.1} parent=5 // pred_fallthru
        _
      %p526 = scmp.lt.s32.totalorder %s31, 2
      // Predicated region
      $region77: #{tpu_custom_call.1} parent=5 // pred_check
        %p527 = pneg %p526
      $region78: #{tpu_custom_call.1} parent=5 // pred_check_branch
        %529 = sbr.rel (%p527) target = $region80
      $region79: #{tpu_custom_call.1} parent=5 // pred_region
        // Predicated region
        $region81: #{tpu_custom_call.1} parent=79 // pred_check
          %p530 = pneg %p51
        $region82: #{tpu_custom_call.1} parent=79 // pred_check_branch
          %532 = sbr.rel (%p530) target = $region84
        $region83: #{tpu_custom_call.1} parent=79 // pred_region
          %s533 = sand.u32 %s41, 1
          %s534 = scalar_lea.sflag [#allocation3], %s533
          %s535 = sand.u32 %s41, 1
          %s536 = smul.addr %s535, 192
          %s537 = scalar_lea.vmem [#allocation2], %s536
          %s538 = smul.u32 8, %s31
          %540 = vsyncadd %s534, 0
          %s541 = smul.addr %s538, 3
          %s542 = smul.addr %s541, 8
          %s543 = scalar_lea.hbm %s0, %s542
          %s544 = sshll.u32 %s543, 4
          %s545 = int_to_ptr.hbm [resolvable:$true] %s544
          %s546 = sshll.u32 %s537, 4
          %s547 = int_to_ptr.vmem [resolvable:$true] %s546
          %552 = dma.hbm_to_vmem [thread:$0]  %s545, 3072, %s547, %s534, 128, 128, 8
        $region84: #{tpu_custom_call.1} parent=79 // pred_fallthru
          _
      $region80: #{tpu_custom_call.1} parent=5 // pred_fallthru
        _
      %p553 = scmp.le.s32.totalorder 1, %s31
      %p554 = scmp.lt.s32.totalorder %s31, 3
      %p555 = pnand %p553, %p554
      %p556 = pneg %p555
      // Predicated region
      $region85: #{tpu_custom_call.1} parent=5 // pred_check
        _
      $region86: #{tpu_custom_call.1} parent=5 // pred_check_branch
        %558 = sbr.rel (%p555) target = $region88
      $region87: #{tpu_custom_call.1} parent=5 // pred_region
        %s559 = ssub.s32 %s31, 1
        %s560 = sand.u32 %s44, 1
        %s561 = scalar_lea.sflag [#allocation3], %s560
        %s562 = sand.u32 %s44, 1
        %s563 = smul.addr %s562, 192
        %s564 = scalar_lea.vmem [#allocation2], %s563
        // Predicated region
        $region89: #{tpu_custom_call.1} parent=87 // pred_check
          %p565 = pneg %p57
        $region90: #{tpu_custom_call.1} parent=87 // pred_check_branch
          %567 = sbr.rel (%p565) target = $region92
        $region91: #{tpu_custom_call.1} parent=87 // pred_region
          %569 = dma.done %s561, 3072
        $region92: #{tpu_custom_call.1} parent=87 // pred_fallthru
          _
        // Predicated region
        $region93: #{tpu_custom_call.1} parent=87 // pred_check
          %p570 = pneg %p78
        $region94: #{tpu_custom_call.1} parent=87 // pred_check_branch
          %572 = sbr.rel (%p570) target = $region96
        $region95: #{tpu_custom_call.1} parent=87 // pred_region
          %574 = dma.done [#allocation6], 9216
        $region96: #{tpu_custom_call.1} parent=87 // pred_fallthru
          _
        // Predicated region
        $region97: #{tpu_custom_call.1} parent=87 // pred_check
          %p575 = pneg %p141
        $region98: #{tpu_custom_call.1} parent=87 // pred_check_branch
          %577 = sbr.rel (%p575) target = $region100
        $region99: #{tpu_custom_call.1} parent=87 // pred_region
          %579 = dma.done [#allocation6], 512
        $region100: #{tpu_custom_call.1} parent=87 // pred_fallthru
          _
        // Predicated region
        $region101: #{tpu_custom_call.1} parent=87 // pred_check
          %p580 = pneg %p162
        $region102: #{tpu_custom_call.1} parent=87 // pred_check_branch
          %582 = sbr.rel (%p580) target = $region104
        $region103: #{tpu_custom_call.1} parent=87 // pred_region
          %584 = dma.done [#allocation9], 512
        $region104: #{tpu_custom_call.1} parent=87 // pred_fallthru
          _
        // Predicated region
        $region105: #{tpu_custom_call.1} parent=87 // pred_check
          %p585 = pneg %p246
        $region106: #{tpu_custom_call.1} parent=87 // pred_check_branch
          %587 = sbr.rel (%p585) target = $region108
        $region107: #{tpu_custom_call.1} parent=87 // pred_region
          %589 = dma.done [#allocation9], 512
        $region108: #{tpu_custom_call.1} parent=87 // pred_fallthru
          _
        %s590 = sand.u32 %s44, 1
        %s591 = scalar_lea.sflag [#allocation3], %s590
        %s592 = sand.u32 %s44, 1
        %s593 = smul.addr %s592, 192
        %s594 = scalar_lea.vmem [#allocation2], %s593
        %p595 = pneg %p57
        %p596 = pneg %p54
        %p597 = pneg %p78
        %p598 = pneg %p75
        %p599 = pneg %p99
        %p600 = pneg %p96
        %p601 = pneg %p120
        %p602 = pneg %p117
        %p603 = pneg %p141
        %p604 = pneg %p138
        %p605 = pneg %p162
        %p606 = pneg %p159
        %p607 = pneg %p183
        %p608 = pneg %p180
        %p609 = pneg %p204
        %p610 = pneg %p201
        %p611 = pneg %p225
        %p612 = pneg %p222
        %p613 = pneg %p246
        %p614 = pneg %p243
        %p615 = pneg %p267
        %p616 = pneg %p264
        %p617 = pneg %p288
        %p618 = pneg %p285
        %p619 = pneg %p309
        %p620 = pneg %p306
        %p621 = pneg %p330
        %p622 = pneg %p327
        %p623 = pneg %p351
        %p624 = pneg %p348
        %p625 = pneg %p372
        %p626 = pneg %p369
        %p627 = pneg %p393
        %p628 = pneg %p390
        %p629 = pneg %p419
        %p630 = pneg %p416
        %s631 = sand.u32 %s406, 1
        %s632 = scalar_lea.sflag [#allocation4], %s631
        %s633 = sand.u32 %s406, 1
        %s634 = smul.addr %s633, 8
        %s635 = scalar_lea.vmem [#allocation11], %s634
        %s636 = smul.u32 8, %s36
        %v637 = vld [vmem:[%s564] sm:$0xff]
        %v638 = vld [vmem:[%s564 + $0x8] sm:$0xff]
        %v639 = vld [vmem:[%s564 + $0x10] sm:$0xff]
        %v640 = vld [vmem:[%s564 + $0x18] sm:$0xff]
        %v641 = vld [vmem:[%s564 + $0x20] sm:$0xff]
        %v642 = vld [vmem:[%s564 + $0x28] sm:$0xff]
        %v643 = vld [vmem:[%s564 + $0x30] sm:$0xff]
        %v644 = vld [vmem:[%s564 + $0x38] sm:$0xff]
        %v645 = vld [vmem:[%s564 + $0x40] sm:$0xff]
        %v646 = vld [vmem:[%s564 + $0x48] sm:$0xff]
        %v647 = vld [vmem:[%s564 + $0x50] sm:$0xff]
        %v648 = vld [vmem:[%s564 + $0x58] sm:$0xff]
        %v649 = vld [vmem:[%s564 + $0x60] sm:$0xff]
        %v650 = vld [vmem:[%s564 + $0x68] sm:$0xff]
        %v651 = vld [vmem:[%s564 + $0x70] sm:$0xff]
        %v652 = vld [vmem:[%s564 + $0x78] sm:$0xff]
        %v653 = vld [vmem:[%s564 + $0x80] sm:$0xff]
        %v654 = vld [vmem:[%s564 + $0x88] sm:$0xff]
        %v655 = vld [vmem:[%s564 + $0x90] sm:$0xff]
        %v656 = vld [vmem:[%s564 + $0x98] sm:$0xff]
        %v657 = vld [vmem:[%s564 + $0xa0] sm:$0xff]
        %v658 = vld [vmem:[%s564 + $0xa8] sm:$0xff]
        %v659 = vld [vmem:[%s564 + $0xb0] sm:$0xff]
        %v660 = vld [vmem:[%s564 + $0xb8] sm:$0xff]
        %v661 = vld [vmem:[#allocation5] sm:$0xff]
        %v662 = vld [vmem:[#allocation5 + $0x8] sm:$0xff]
        %v663 = vld [vmem:[#allocation5 + $0x10] sm:$0xff]
        %v664 = vld [vmem:[#allocation5 + $0x18] sm:$0xff]
        %v665 = vld [vmem:[#allocation5 + $0x20] sm:$0xff]
        %v666 = vld [vmem:[#allocation5 + $0x28] sm:$0xff]
        %v667 = vld [vmem:[#allocation5 + $0x30] sm:$0xff]
        %v668 = vld [vmem:[#allocation5 + $0x38] sm:$0xff]
        %vm693 = vcmask 1046528
        %v694 = vrot.slane %v637, 1
        %v695 = vrot.slane %v638, 1
        %v696 = vsel %vm693, %v694, %v695
        %v697 = vrot.slane %v639, 1
        %v698 = vsel %vm693, %v695, %v697
        %v699 = vrot.slane %v640, 1
        %v700 = vrot.slane %v641, 1
        %v701 = vsel %vm693, %v699, %v700
        %v702 = vrot.slane %v642, 1
        %v703 = vsel %vm693, %v700, %v702
        %v704 = vrot.slane %v643, 1
        %v705 = vrot.slane %v644, 1
        %v706 = vsel %vm693, %v704, %v705
        %v707 = vrot.slane %v645, 1
        %v708 = vsel %vm693, %v705, %v707
        %v709 = vrot.slane %v646, 1
        %v710 = vrot.slane %v647, 1
        %v711 = vsel %vm693, %v709, %v710
        %v712 = vrot.slane %v648, 1
        %v713 = vsel %vm693, %v710, %v712
        %v714 = vrot.slane %v649, 1
        %v715 = vrot.slane %v650, 1
        %v716 = vsel %vm693, %v714, %v715
        %v717 = vrot.slane %v651, 1
        %v718 = vsel %vm693, %v715, %v717
        %v719 = vrot.slane %v652, 1
        %v720 = vrot.slane %v653, 1
        %v721 = vsel %vm693, %v719, %v720
        %v722 = vrot.slane %v654, 1
        %v723 = vsel %vm693, %v720, %v722
        %v724 = vrot.slane %v655, 1
        %v725 = vrot.slane %v656, 1
        %v726 = vsel %vm693, %v724, %v725
        %v727 = vrot.slane %v657, 1
        %v728 = vsel %vm693, %v725, %v727
        %v729 = vrot.slane %v658, 1
        %v730 = vrot.slane %v659, 1
        %v731 = vsel %vm693, %v729, %v730
        %v732 = vrot.slane %v660, 1
        %v733 = vsel %vm693, %v730, %v732
        %s734 = scalar_lea.vmem [#allocation5], 64
        %v735 = vld [vmem:[%s734] sm:$0xff]
        %v736 = vld [vmem:[%s734 + $0x8] sm:$0xff]
        %v737 = vld [vmem:[%s734 + $0x10] sm:$0xff]
        %v738 = vld [vmem:[%s734 + $0x18] sm:$0xff]
        %v739 = vld [vmem:[%s734 + $0x20] sm:$0xff]
        %v740 = vld [vmem:[%s734 + $0x28] sm:$0xff]
        %v741 = vld [vmem:[%s734 + $0x30] sm:$0xff]
        %v742 = vld [vmem:[%s734 + $0x38] sm:$0xff]
        %vm743 = vcmask 261120
        %v744 = vsel %vm743, %v696, 0
        %v746 = vsel %vm743, %v698, 0
        %v748 = vsel %vm743, %v701, 0
        %v750 = vsel %vm743, %v703, 0
        %v752 = vsel %vm743, %v706, 0
        %v754 = vsel %vm743, %v708, 0
        %v756 = vsel %vm743, %v711, 0
        %v758 = vsel %vm743, %v713, 0
        %v760 = vsel %vm743, %v716, 0
        %v762 = vsel %vm743, %v718, 0
        %v764 = vsel %vm743, %v721, 0
        %v766 = vsel %vm743, %v723, 0
        %v768 = vsel %vm743, %v726, 0
        %v770 = vsel %vm743, %v728, 0
        %v772 = vsel %vm743, %v731, 0
        %v774 = vsel %vm743, %v733, 0
        %776 = vmatpush.msra.mxu0 0.0
        %777 = vmatpush.msra.mxu0 0.0
        %778 = vmatpush.msra.mxu0 0.0
        %779 = vmatpush.msra.mxu0 0.0
        %780 = vmatpush.msra.mxu0 0.0
        %781 = vmatpush.msra.mxu0 0.0
        %782 = vmatpush.msra.mxu0 0.0
        %783 = vmatpush.msra.mxu0 0.0
        %784 = vmatpush.msra.mxu0 0.0
        %785 = vmatpush.msra.mxu0 0.0
        %786 = vmatpush.msra.mxu0 0.0
        %787 = vmatpush.msra.mxu0 0.0
        %788 = vmatpush.msra.mxu0 %v741
        %789 = vmatpush.msra.mxu0 %v739
        %790 = vmatpush.msra.mxu0 %v737
        %791 = vmatpush.msra.mxu0 %v735
        %792 = vmatmul.f32.gmra.mxu0 %v744
        %v793 = vpop.f32.mrf.mxu0
        %v794 = vadd.f32 0.0, %v793
        %795 = vmatmul.f32.gmra.mxu0 %v746
        %v796 = vpop.f32.mrf.mxu0
        %v797 = vadd.f32 0.0, %v796
        %798 = vmatmul.f32.gmra.mxu0 %v748
        %v799 = vpop.f32.mrf.mxu0
        %v800 = vadd.f32 0.0, %v799
        %801 = vmatmul.f32.gmra.mxu0 %v750
        %v802 = vpop.f32.mrf.mxu0
        %v803 = vadd.f32 0.0, %v802
        %804 = vmatmul.f32.gmra.mxu0 %v752
        %v805 = vpop.f32.mrf.mxu0
        %v806 = vadd.f32 0.0, %v805
        %807 = vmatmul.f32.gmra.mxu0 %v754
        %v808 = vpop.f32.mrf.mxu0
        %v809 = vadd.f32 0.0, %v808
        %810 = vmatmul.f32.gmra.mxu0 %v756
        %v811 = vpop.f32.mrf.mxu0
        %v812 = vadd.f32 0.0, %v811
        %813 = vmatmul.f32.gmra.mxu0 %v758
        %v814 = vpop.f32.mrf.mxu0
        %v815 = vadd.f32 0.0, %v814
        %816 = vmatmul.f32.gmra.mxu0 %v760
        %v817 = vpop.f32.mrf.mxu0
        %v818 = vadd.f32 0.0, %v817
        %819 = vmatmul.f32.gmra.mxu0 %v762
        %v820 = vpop.f32.mrf.mxu0
        %v821 = vadd.f32 0.0, %v820
        %822 = vmatmul.f32.gmra.mxu0 %v764
        %v823 = vpop.f32.mrf.mxu0
        %v824 = vadd.f32 0.0, %v823
        %825 = vmatmul.f32.gmra.mxu0 %v766
        %v826 = vpop.f32.mrf.mxu0
        %v827 = vadd.f32 0.0, %v826
        %828 = vmatmul.f32.gmra.mxu0 %v768
        %v829 = vpop.f32.mrf.mxu0
        %v830 = vadd.f32 0.0, %v829
        %831 = vmatmul.f32.gmra.mxu0 %v770
        %v832 = vpop.f32.mrf.mxu0
        %v833 = vadd.f32 0.0, %v832
        %834 = vmatmul.f32.gmra.mxu0 %v772
        %v835 = vpop.f32.mrf.mxu0
        %v836 = vadd.f32 0.0, %v835
        %837 = vmatmul.f32.gmra.mxu0 %v774
        %v838 = vpop.f32.mrf.mxu0
        %v839 = vadd.f32 0.0, %v838
        %840 = vdwg.mxu0
        %841 = vmatpush.msra.mxu0 0.0
        %842 = vmatpush.msra.mxu0 0.0
        %843 = vmatpush.msra.mxu0 0.0
        %844 = vmatpush.msra.mxu0 0.0
        %845 = vmatpush.msra.mxu0 0.0
        %846 = vmatpush.msra.mxu0 0.0
        %847 = vmatpush.msra.mxu0 0.0
        %848 = vmatpush.msra.mxu0 0.0
        %849 = vmatpush.msra.mxu0 0.0
        %850 = vmatpush.msra.mxu0 0.0
        %851 = vmatpush.msra.mxu0 0.0
        %852 = vmatpush.msra.mxu0 0.0
        %853 = vmatpush.msra.mxu0 %v742
        %854 = vmatpush.msra.mxu0 %v740
        %855 = vmatpush.msra.mxu0 %v738
        %856 = vmatpush.msra.mxu0 %v736
        %857 = vmatmul.f32.gmra.mxu0 %v744
        %v858 = vpop.f32.mrf.mxu0
        %v859 = vadd.f32 0.0, %v858
        %860 = vmatmul.f32.gmra.mxu0 %v746
        %v861 = vpop.f32.mrf.mxu0
        %v862 = vadd.f32 0.0, %v861
        %863 = vmatmul.f32.gmra.mxu0 %v748
        %v864 = vpop.f32.mrf.mxu0
        %v865 = vadd.f32 0.0, %v864
        %866 = vmatmul.f32.gmra.mxu0 %v750
        %v867 = vpop.f32.mrf.mxu0
        %v868 = vadd.f32 0.0, %v867
        %869 = vmatmul.f32.gmra.mxu0 %v752
        %v870 = vpop.f32.mrf.mxu0
        %v871 = vadd.f32 0.0, %v870
        %872 = vmatmul.f32.gmra.mxu0 %v754
        %v873 = vpop.f32.mrf.mxu0
        %v874 = vadd.f32 0.0, %v873
        %875 = vmatmul.f32.gmra.mxu0 %v756
        %v876 = vpop.f32.mrf.mxu0
        %v877 = vadd.f32 0.0, %v876
        %878 = vmatmul.f32.gmra.mxu0 %v758
        %v879 = vpop.f32.mrf.mxu0
        %v880 = vadd.f32 0.0, %v879
        %881 = vmatmul.f32.gmra.mxu0 %v760
        %v882 = vpop.f32.mrf.mxu0
        %v883 = vadd.f32 0.0, %v882
        %884 = vmatmul.f32.gmra.mxu0 %v762
        %v885 = vpop.f32.mrf.mxu0
        %v886 = vadd.f32 0.0, %v885
        %887 = vmatmul.f32.gmra.mxu0 %v764
        %v888 = vpop.f32.mrf.mxu0
        %v889 = vadd.f32 0.0, %v888
        %890 = vmatmul.f32.gmra.mxu0 %v766
        %v891 = vpop.f32.mrf.mxu0
        %v892 = vadd.f32 0.0, %v891
        %893 = vmatmul.f32.gmra.mxu0 %v768
        %v894 = vpop.f32.mrf.mxu0
        %v895 = vadd.f32 0.0, %v894
        %896 = vmatmul.f32.gmra.mxu0 %v770
        %v897 = vpop.f32.mrf.mxu0
        %v898 = vadd.f32 0.0, %v897
        %899 = vmatmul.f32.gmra.mxu0 %v772
        %v900 = vpop.f32.mrf.mxu0
        %v901 = vadd.f32 0.0, %v900
        %902 = vmatmul.f32.gmra.mxu0 %v774
        %v903 = vpop.f32.mrf.mxu0
        %v904 = vadd.f32 0.0, %v903
        %905 = vdwg.mxu0
        %v906 = vsel %vm743, %v637, 0
        %v908 = vsel %vm743, %v638, 0
        %v910 = vsel %vm743, %v640, 0
        %v912 = vsel %vm743, %v641, 0
        %v914 = vsel %vm743, %v643, 0
        %v916 = vsel %vm743, %v644, 0
        %v918 = vsel %vm743, %v646, 0
        %v920 = vsel %vm743, %v647, 0
        %v922 = vsel %vm743, %v649, 0
        %v924 = vsel %vm743, %v650, 0
        %v926 = vsel %vm743, %v652, 0
        %v928 = vsel %vm743, %v653, 0
        %v930 = vsel %vm743, %v655, 0
        %v932 = vsel %vm743, %v656, 0
        %v934 = vsel %vm743, %v658, 0
        %v936 = vsel %vm743, %v659, 0
        %938 = vmatpush.msra.mxu0 0.0
        %939 = vmatpush.msra.mxu0 0.0
        %940 = vmatpush.msra.mxu0 0.0
        %941 = vmatpush.msra.mxu0 0.0
        %942 = vmatpush.msra.mxu0 0.0
        %943 = vmatpush.msra.mxu0 0.0
        %944 = vmatpush.msra.mxu0 0.0
        %945 = vmatpush.msra.mxu0 0.0
        %946 = vmatpush.msra.mxu0 0.0
        %947 = vmatpush.msra.mxu0 0.0
        %948 = vmatpush.msra.mxu0 0.0
        %949 = vmatpush.msra.mxu0 0.0
        %950 = vmatpush.msra.mxu0 %v667
        %951 = vmatpush.msra.mxu0 %v665
        %952 = vmatpush.msra.mxu0 %v663
        %953 = vmatpush.msra.mxu0 %v661
        %954 = vmatmul.f32.gmra.mxu0 %v906
        %v955 = vpop.f32.mrf.mxu0
        %v956 = vadd.f32 %v794, %v955
        %957 = vmatmul.f32.gmra.mxu0 %v908
        %v958 = vpop.f32.mrf.mxu0
        %v959 = vadd.f32 %v797, %v958
        %960 = vmatmul.f32.gmra.mxu0 %v910
        %v961 = vpop.f32.mrf.mxu0
        %v962 = vadd.f32 %v800, %v961
        %963 = vmatmul.f32.gmra.mxu0 %v912
        %v964 = vpop.f32.mrf.mxu0
        %v965 = vadd.f32 %v803, %v964
        %966 = vmatmul.f32.gmra.mxu0 %v914
        %v967 = vpop.f32.mrf.mxu0
        %v968 = vadd.f32 %v806, %v967
        %969 = vmatmul.f32.gmra.mxu0 %v916
        %v970 = vpop.f32.mrf.mxu0
        %v971 = vadd.f32 %v809, %v970
        %972 = vmatmul.f32.gmra.mxu0 %v918
        %v973 = vpop.f32.mrf.mxu0
        %v974 = vadd.f32 %v812, %v973
        %975 = vmatmul.f32.gmra.mxu0 %v920
        %v976 = vpop.f32.mrf.mxu0
        %v977 = vadd.f32 %v815, %v976
        %978 = vmatmul.f32.gmra.mxu0 %v922
        %v979 = vpop.f32.mrf.mxu0
        %v980 = vadd.f32 %v818, %v979
        %981 = vmatmul.f32.gmra.mxu0 %v924
        %v982 = vpop.f32.mrf.mxu0
        %v983 = vadd.f32 %v821, %v982
        %984 = vmatmul.f32.gmra.mxu0 %v926
        %v985 = vpop.f32.mrf.mxu0
        %v986 = vadd.f32 %v824, %v985
        %987 = vmatmul.f32.gmra.mxu0 %v928
        %v988 = vpop.f32.mrf.mxu0
        %v989 = vadd.f32 %v827, %v988
        %990 = vmatmul.f32.gmra.mxu0 %v930
        %v991 = vpop.f32.mrf.mxu0
        %v992 = vadd.f32 %v830, %v991
        %993 = vmatmul.f32.gmra.mxu0 %v932
        %v994 = vpop.f32.mrf.mxu0
        %v995 = vadd.f32 %v833, %v994
        %996 = vmatmul.f32.gmra.mxu0 %v934
        %v997 = vpop.f32.mrf.mxu0
        %v998 = vadd.f32 %v836, %v997
        %999 = vmatmul.f32.gmra.mxu0 %v936
        %v1000 = vpop.f32.mrf.mxu0
        %v1001 = vadd.f32 %v839, %v1000
        %1002 = vdwg.mxu0
        %1003 = vmatpush.msra.mxu0 0.0
        %1004 = vmatpush.msra.mxu0 0.0
        %1005 = vmatpush.msra.mxu0 0.0
        %1006 = vmatpush.msra.mxu0 0.0
        %1007 = vmatpush.msra.mxu0 0.0
        %1008 = vmatpush.msra.mxu0 0.0
        %1009 = vmatpush.msra.mxu0 0.0
        %1010 = vmatpush.msra.mxu0 0.0
        %1011 = vmatpush.msra.mxu0 0.0
        %1012 = vmatpush.msra.mxu0 0.0
        %1013 = vmatpush.msra.mxu0 0.0
        %1014 = vmatpush.msra.mxu0 0.0
        %1015 = vmatpush.msra.mxu0 %v668
        %1016 = vmatpush.msra.mxu0 %v666
        %1017 = vmatpush.msra.mxu0 %v664
        %1018 = vmatpush.msra.mxu0 %v662
        %1019 = vmatmul.f32.gmra.mxu0 %v906
        %v1020 = vpop.f32.mrf.mxu0
        %v1021 = vadd.f32 %v859, %v1020
        %1022 = vmatmul.f32.gmra.mxu0 %v908
        %v1023 = vpop.f32.mrf.mxu0
        %v1024 = vadd.f32 %v862, %v1023
        %1025 = vmatmul.f32.gmra.mxu0 %v910
        %v1026 = vpop.f32.mrf.mxu0
        %v1027 = vadd.f32 %v865, %v1026
        %1028 = vmatmul.f32.gmra.mxu0 %v912
        %v1029 = vpop.f32.mrf.mxu0
        %v1030 = vadd.f32 %v868, %v1029
        %1031 = vmatmul.f32.gmra.mxu0 %v914
        %v1032 = vpop.f32.mrf.mxu0
        %v1033 = vadd.f32 %v871, %v1032
        %1034 = vmatmul.f32.gmra.mxu0 %v916
        %v1035 = vpop.f32.mrf.mxu0
        %v1036 = vadd.f32 %v874, %v1035
        %1037 = vmatmul.f32.gmra.mxu0 %v918
        %v1038 = vpop.f32.mrf.mxu0
        %v1039 = vadd.f32 %v877, %v1038
        %1040 = vmatmul.f32.gmra.mxu0 %v920
        %v1041 = vpop.f32.mrf.mxu0
        %v1042 = vadd.f32 %v880, %v1041
        %1043 = vmatmul.f32.gmra.mxu0 %v922
        %v1044 = vpop.f32.mrf.mxu0
        %v1045 = vadd.f32 %v883, %v1044
        %1046 = vmatmul.f32.gmra.mxu0 %v924
        %v1047 = vpop.f32.mrf.mxu0
        %v1048 = vadd.f32 %v886, %v1047
        %1049 = vmatmul.f32.gmra.mxu0 %v926
        %v1050 = vpop.f32.mrf.mxu0
        %v1051 = vadd.f32 %v889, %v1050
        %1052 = vmatmul.f32.gmra.mxu0 %v928
        %v1053 = vpop.f32.mrf.mxu0
        %v1054 = vadd.f32 %v892, %v1053
        %1055 = vmatmul.f32.gmra.mxu0 %v930
        %v1056 = vpop.f32.mrf.mxu0
        %v1057 = vadd.f32 %v895, %v1056
        %1058 = vmatmul.f32.gmra.mxu0 %v932
        %v1059 = vpop.f32.mrf.mxu0
        %v1060 = vadd.f32 %v898, %v1059
        %1061 = vmatmul.f32.gmra.mxu0 %v934
        %v1062 = vpop.f32.mrf.mxu0
        %v1063 = vadd.f32 %v901, %v1062
        %1064 = vmatmul.f32.gmra.mxu0 %v936
        %v1065 = vpop.f32.mrf.mxu0
        %v1066 = vadd.f32 %v904, %v1065
        %1067 = vdwg.mxu0
        %vm1068 = vcmask 1045504
        %v1069 = vrot.slane %v637, 2
        %v1070 = vrot.slane %v638, 2
        %v1071 = vsel %vm1068, %v1069, %v1070
        %v1072 = vrot.slane %v639, 2
        %v1073 = vsel %vm1068, %v1070, %v1072
        %v1074 = vrot.slane %v640, 2
        %v1075 = vrot.slane %v641, 2
        %v1076 = vsel %vm1068, %v1074, %v1075
        %v1077 = vrot.slane %v642, 2
        %v1078 = vsel %vm1068, %v1075, %v1077
        %v1079 = vrot.slane %v643, 2
        %v1080 = vrot.slane %v644, 2
        %v1081 = vsel %vm1068, %v1079, %v1080
        %v1082 = vrot.slane %v645, 2
        %v1083 = vsel %vm1068, %v1080, %v1082
        %v1084 = vrot.slane %v646, 2
        %v1085 = vrot.slane %v647, 2
        %v1086 = vsel %vm1068, %v1084, %v1085
        %v1087 = vrot.slane %v648, 2
        %v1088 = vsel %vm1068, %v1085, %v1087
        %v1089 = vrot.slane %v649, 2
        %v1090 = vrot.slane %v650, 2
        %v1091 = vsel %vm1068, %v1089, %v1090
        %v1092 = vrot.slane %v651, 2
        %v1093 = vsel %vm1068, %v1090, %v1092
        %v1094 = vrot.slane %v652, 2
        %v1095 = vrot.slane %v653, 2
        %v1096 = vsel %vm1068, %v1094, %v1095
        %v1097 = vrot.slane %v654, 2
        %v1098 = vsel %vm1068, %v1095, %v1097
        %v1099 = vrot.slane %v655, 2
        %v1100 = vrot.slane %v656, 2
        %v1101 = vsel %vm1068, %v1099, %v1100
        %v1102 = vrot.slane %v657, 2
        %v1103 = vsel %vm1068, %v1100, %v1102
        %v1104 = vrot.slane %v658, 2
        %v1105 = vrot.slane %v659, 2
        %v1106 = vsel %vm1068, %v1104, %v1105
        %v1107 = vrot.slane %v660, 2
        %v1108 = vsel %vm1068, %v1105, %v1107
        %s1109 = scalar_lea.vmem [#allocation5], 128
        %v1110 = vld [vmem:[%s1109] sm:$0xff]
        %v1111 = vld [vmem:[%s1109 + $0x8] sm:$0xff]
        %v1112 = vld [vmem:[%s1109 + $0x10] sm:$0xff]
        %v1113 = vld [vmem:[%s1109 + $0x18] sm:$0xff]
        %v1114 = vld [vmem:[%s1109 + $0x20] sm:$0xff]
        %v1115 = vld [vmem:[%s1109 + $0x28] sm:$0xff]
        %v1116 = vld [vmem:[%s1109 + $0x30] sm:$0xff]
        %v1117 = vld [vmem:[%s1109 + $0x38] sm:$0xff]
        %v1118 = vsel %vm743, %v1071, 0
        %v1120 = vsel %vm743, %v1073, 0
        %v1122 = vsel %vm743, %v1076, 0
        %v1124 = vsel %vm743, %v1078, 0
        %v1126 = vsel %vm743, %v1081, 0
        %v1128 = vsel %vm743, %v1083, 0
        %v1130 = vsel %vm743, %v1086, 0
        %v1132 = vsel %vm743, %v1088, 0
        %v1134 = vsel %vm743, %v1091, 0
        %v1136 = vsel %vm743, %v1093, 0
        %v1138 = vsel %vm743, %v1096, 0
        %v1140 = vsel %vm743, %v1098, 0
        %v1142 = vsel %vm743, %v1101, 0
        %v1144 = vsel %vm743, %v1103, 0
        %v1146 = vsel %vm743, %v1106, 0
        %v1148 = vsel %vm743, %v1108, 0
        %1150 = vmatpush.msra.mxu0 0.0
        %1151 = vmatpush.msra.mxu0 0.0
        %1152 = vmatpush.msra.mxu0 0.0
        %1153 = vmatpush.msra.mxu0 0.0
        %1154 = vmatpush.msra.mxu0 0.0
        %1155 = vmatpush.msra.mxu0 0.0
        %1156 = vmatpush.msra.mxu0 0.0
        %1157 = vmatpush.msra.mxu0 0.0
        %1158 = vmatpush.msra.mxu0 0.0
        %1159 = vmatpush.msra.mxu0 0.0
        %1160 = vmatpush.msra.mxu0 0.0
        %1161 = vmatpush.msra.mxu0 0.0
        %1162 = vmatpush.msra.mxu0 %v1116
        %1163 = vmatpush.msra.mxu0 %v1114
        %1164 = vmatpush.msra.mxu0 %v1112
        %1165 = vmatpush.msra.mxu0 %v1110
        %1166 = vmatmul.f32.gmra.mxu0 %v1118
        %v1167 = vpop.f32.mrf.mxu0
        %v1168 = vadd.f32 0.0, %v1167
        %1169 = vmatmul.f32.gmra.mxu0 %v1120
        %v1170 = vpop.f32.mrf.mxu0
        %v1171 = vadd.f32 0.0, %v1170
        %1172 = vmatmul.f32.gmra.mxu0 %v1122
        %v1173 = vpop.f32.mrf.mxu0
        %v1174 = vadd.f32 0.0, %v1173
        %1175 = vmatmul.f32.gmra.mxu0 %v1124
        %v1176 = vpop.f32.mrf.mxu0
        %v1177 = vadd.f32 0.0, %v1176
        %1178 = vmatmul.f32.gmra.mxu0 %v1126
        %v1179 = vpop.f32.mrf.mxu0
        %v1180 = vadd.f32 0.0, %v1179
        %1181 = vmatmul.f32.gmra.mxu0 %v1128
        %v1182 = vpop.f32.mrf.mxu0
        %v1183 = vadd.f32 0.0, %v1182
        %1184 = vmatmul.f32.gmra.mxu0 %v1130
        %v1185 = vpop.f32.mrf.mxu0
        %v1186 = vadd.f32 0.0, %v1185
        %1187 = vmatmul.f32.gmra.mxu0 %v1132
        %v1188 = vpop.f32.mrf.mxu0
        %v1189 = vadd.f32 0.0, %v1188
        %1190 = vmatmul.f32.gmra.mxu0 %v1134
        %v1191 = vpop.f32.mrf.mxu0
        %v1192 = vadd.f32 0.0, %v1191
        %1193 = vmatmul.f32.gmra.mxu0 %v1136
        %v1194 = vpop.f32.mrf.mxu0
        %v1195 = vadd.f32 0.0, %v1194
        %1196 = vmatmul.f32.gmra.mxu0 %v1138
        %v1197 = vpop.f32.mrf.mxu0
        %v1198 = vadd.f32 0.0, %v1197
        %1199 = vmatmul.f32.gmra.mxu0 %v1140
        %v1200 = vpop.f32.mrf.mxu0
        %v1201 = vadd.f32 0.0, %v1200
        %1202 = vmatmul.f32.gmra.mxu0 %v1142
        %v1203 = vpop.f32.mrf.mxu0
        %v1204 = vadd.f32 0.0, %v1203
        %1205 = vmatmul.f32.gmra.mxu0 %v1144
        %v1206 = vpop.f32.mrf.mxu0
        %v1207 = vadd.f32 0.0, %v1206
        %1208 = vmatmul.f32.gmra.mxu0 %v1146
        %v1209 = vpop.f32.mrf.mxu0
        %v1210 = vadd.f32 0.0, %v1209
        %1211 = vmatmul.f32.gmra.mxu0 %v1148
        %v1212 = vpop.f32.mrf.mxu0
        %v1213 = vadd.f32 0.0, %v1212
        %1214 = vdwg.mxu0
        %1215 = vmatpush.msra.mxu0 0.0
        %1216 = vmatpush.msra.mxu0 0.0
        %1217 = vmatpush.msra.mxu0 0.0
        %1218 = vmatpush.msra.mxu0 0.0
        %1219 = vmatpush.msra.mxu0 0.0
        %1220 = vmatpush.msra.mxu0 0.0
        %1221 = vmatpush.msra.mxu0 0.0
        %1222 = vmatpush.msra.mxu0 0.0
        %1223 = vmatpush.msra.mxu0 0.0
        %1224 = vmatpush.msra.mxu0 0.0
        %1225 = vmatpush.msra.mxu0 0.0
        %1226 = vmatpush.msra.mxu0 0.0
        %1227 = vmatpush.msra.mxu0 %v1117
        %1228 = vmatpush.msra.mxu0 %v1115
        %1229 = vmatpush.msra.mxu0 %v1113
        %1230 = vmatpush.msra.mxu0 %v1111
        %1231 = vmatmul.f32.gmra.mxu0 %v1118
        %v1232 = vpop.f32.mrf.mxu0
        %v1233 = vadd.f32 0.0, %v1232
        %1234 = vmatmul.f32.gmra.mxu0 %v1120
        %v1235 = vpop.f32.mrf.mxu0
        %v1236 = vadd.f32 0.0, %v1235
        %1237 = vmatmul.f32.gmra.mxu0 %v1122
        %v1238 = vpop.f32.mrf.mxu0
        %v1239 = vadd.f32 0.0, %v1238
        %1240 = vmatmul.f32.gmra.mxu0 %v1124
        %v1241 = vpop.f32.mrf.mxu0
        %v1242 = vadd.f32 0.0, %v1241
        %1243 = vmatmul.f32.gmra.mxu0 %v1126
        %v1244 = vpop.f32.mrf.mxu0
        %v1245 = vadd.f32 0.0, %v1244
        %1246 = vmatmul.f32.gmra.mxu0 %v1128
        %v1247 = vpop.f32.mrf.mxu0
        %v1248 = vadd.f32 0.0, %v1247
        %1249 = vmatmul.f32.gmra.mxu0 %v1130
        %v1250 = vpop.f32.mrf.mxu0
        %v1251 = vadd.f32 0.0, %v1250
        %1252 = vmatmul.f32.gmra.mxu0 %v1132
        %v1253 = vpop.f32.mrf.mxu0
        %v1254 = vadd.f32 0.0, %v1253
        %1255 = vmatmul.f32.gmra.mxu0 %v1134
        %v1256 = vpop.f32.mrf.mxu0
        %v1257 = vadd.f32 0.0, %v1256
        %1258 = vmatmul.f32.gmra.mxu0 %v1136
        %v1259 = vpop.f32.mrf.mxu0
        %v1260 = vadd.f32 0.0, %v1259
        %1261 = vmatmul.f32.gmra.mxu0 %v1138
        %v1262 = vpop.f32.mrf.mxu0
        %v1263 = vadd.f32 0.0, %v1262
        %1264 = vmatmul.f32.gmra.mxu0 %v1140
        %v1265 = vpop.f32.mrf.mxu0
        %v1266 = vadd.f32 0.0, %v1265
        %1267 = vmatmul.f32.gmra.mxu0 %v1142
        %v1268 = vpop.f32.mrf.mxu0
        %v1269 = vadd.f32 0.0, %v1268
        %1270 = vmatmul.f32.gmra.mxu0 %v1144
        %v1271 = vpop.f32.mrf.mxu0
        %v1272 = vadd.f32 0.0, %v1271
        %1273 = vmatmul.f32.gmra.mxu0 %v1146
        %v1274 = vpop.f32.mrf.mxu0
        %v1275 = vadd.f32 0.0, %v1274
        %1276 = vmatmul.f32.gmra.mxu0 %v1148
        %v1277 = vpop.f32.mrf.mxu0
        %v1278 = vadd.f32 0.0, %v1277
        %1279 = vdwg.mxu0
        %v1280 = vadd.f32 %v956, %v1168
        %v1281 = vadd.f32 %v1021, %v1233
        %v1282 = vadd.f32 %v959, %v1171
        %v1283 = vadd.f32 %v1024, %v1236
        %v1284 = vadd.f32 %v962, %v1174
        %v1285 = vadd.f32 %v1027, %v1239
        %v1286 = vadd.f32 %v965, %v1177
        %v1287 = vadd.f32 %v1030, %v1242
        %v1288 = vadd.f32 %v968, %v1180
        %v1289 = vadd.f32 %v1033, %v1245
        %v1290 = vadd.f32 %v971, %v1183
        %v1291 = vadd.f32 %v1036, %v1248
        %v1292 = vadd.f32 %v974, %v1186
        %v1293 = vadd.f32 %v1039, %v1251
        %v1294 = vadd.f32 %v977, %v1189
        %v1295 = vadd.f32 %v1042, %v1254
        %v1296 = vadd.f32 %v980, %v1192
        %v1297 = vadd.f32 %v1045, %v1257
        %v1298 = vadd.f32 %v983, %v1195
        %v1299 = vadd.f32 %v1048, %v1260
        %v1300 = vadd.f32 %v986, %v1198
        %v1301 = vadd.f32 %v1051, %v1263
        %v1302 = vadd.f32 %v989, %v1201
        %v1303 = vadd.f32 %v1054, %v1266
        %v1304 = vadd.f32 %v992, %v1204
        %v1305 = vadd.f32 %v1057, %v1269
        %v1306 = vadd.f32 %v995, %v1207
        %v1307 = vadd.f32 %v1060, %v1272
        %v1308 = vadd.f32 %v998, %v1210
        %v1309 = vadd.f32 %v1063, %v1275
        %v1310 = vadd.f32 %v1001, %v1213
        %v1311 = vadd.f32 %v1066, %v1278
        %vm1312 = vcmask 1044480
        %v1313 = vrot.slane %v637, 3
        %v1314 = vrot.slane %v638, 3
        %v1315 = vsel %vm1312, %v1313, %v1314
        %v1316 = vrot.slane %v639, 3
        %v1317 = vsel %vm1312, %v1314, %v1316
        %v1318 = vrot.slane %v640, 3
        %v1319 = vrot.slane %v641, 3
        %v1320 = vsel %vm1312, %v1318, %v1319
        %v1321 = vrot.slane %v642, 3
        %v1322 = vsel %vm1312, %v1319, %v1321
        %v1323 = vrot.slane %v643, 3
        %v1324 = vrot.slane %v644, 3
        %v1325 = vsel %vm1312, %v1323, %v1324
        %v1326 = vrot.slane %v645, 3
        %v1327 = vsel %vm1312, %v1324, %v1326
        %v1328 = vrot.slane %v646, 3
        %v1329 = vrot.slane %v647, 3
        %v1330 = vsel %vm1312, %v1328, %v1329
        %v1331 = vrot.slane %v648, 3
        %v1332 = vsel %vm1312, %v1329, %v1331
        %v1333 = vrot.slane %v649, 3
        %v1334 = vrot.slane %v650, 3
        %v1335 = vsel %vm1312, %v1333, %v1334
        %v1336 = vrot.slane %v651, 3
        %v1337 = vsel %vm1312, %v1334, %v1336
        %v1338 = vrot.slane %v652, 3
        %v1339 = vrot.slane %v653, 3
        %v1340 = vsel %vm1312, %v1338, %v1339
        %v1341 = vrot.slane %v654, 3
        %v1342 = vsel %vm1312, %v1339, %v1341
        %v1343 = vrot.slane %v655, 3
        %v1344 = vrot.slane %v656, 3
        %v1345 = vsel %vm1312, %v1343, %v1344
        %v1346 = vrot.slane %v657, 3
        %v1347 = vsel %vm1312, %v1344, %v1346
        %v1348 = vrot.slane %v658, 3
        %v1349 = vrot.slane %v659, 3
        %v1350 = vsel %vm1312, %v1348, %v1349
        %v1351 = vrot.slane %v660, 3
        %v1352 = vsel %vm1312, %v1349, %v1351
        %s1353 = scalar_lea.vmem [#allocation5], 192
        %v1354 = vld [vmem:[%s1353] sm:$0xff]
        %v1355 = vld [vmem:[%s1353 + $0x8] sm:$0xff]
        %v1356 = vld [vmem:[%s1353 + $0x10] sm:$0xff]
        %v1357 = vld [vmem:[%s1353 + $0x18] sm:$0xff]
        %v1358 = vld [vmem:[%s1353 + $0x20] sm:$0xff]
        %v1359 = vld [vmem:[%s1353 + $0x28] sm:$0xff]
        %v1360 = vld [vmem:[%s1353 + $0x30] sm:$0xff]
        %v1361 = vld [vmem:[%s1353 + $0x38] sm:$0xff]
        %v1362 = vsel %vm743, %v1315, 0
        %v1364 = vsel %vm743, %v1317, 0
        %v1366 = vsel %vm743, %v1320, 0
        %v1368 = vsel %vm743, %v1322, 0
        %v1370 = vsel %vm743, %v1325, 0
        %v1372 = vsel %vm743, %v1327, 0
        %v1374 = vsel %vm743, %v1330, 0
        %v1376 = vsel %vm743, %v1332, 0
        %v1378 = vsel %vm743, %v1335, 0
        %v1380 = vsel %vm743, %v1337, 0
        %v1382 = vsel %vm743, %v1340, 0
        %v1384 = vsel %vm743, %v1342, 0
        %v1386 = vsel %vm743, %v1345, 0
        %v1388 = vsel %vm743, %v1347, 0
        %v1390 = vsel %vm743, %v1350, 0
        %v1392 = vsel %vm743, %v1352, 0
        %1394 = vmatpush.msra.mxu0 0.0
        %1395 = vmatpush.msra.mxu0 0.0
        %1396 = vmatpush.msra.mxu0 0.0
        %1397 = vmatpush.msra.mxu0 0.0
        %1398 = vmatpush.msra.mxu0 0.0
        %1399 = vmatpush.msra.mxu0 0.0
        %1400 = vmatpush.msra.mxu0 0.0
        %1401 = vmatpush.msra.mxu0 0.0
        %1402 = vmatpush.msra.mxu0 0.0
        %1403 = vmatpush.msra.mxu0 0.0
        %1404 = vmatpush.msra.mxu0 0.0
        %1405 = vmatpush.msra.mxu0 0.0
        %1406 = vmatpush.msra.mxu0 %v1360
        %1407 = vmatpush.msra.mxu0 %v1358
        %1408 = vmatpush.msra.mxu0 %v1356
        %1409 = vmatpush.msra.mxu0 %v1354
        %1410 = vmatmul.f32.gmra.mxu0 %v1362
        %v1411 = vpop.f32.mrf.mxu0
        %v1412 = vadd.f32 0.0, %v1411
        %1413 = vmatmul.f32.gmra.mxu0 %v1364
        %v1414 = vpop.f32.mrf.mxu0
        %v1415 = vadd.f32 0.0, %v1414
        %1416 = vmatmul.f32.gmra.mxu0 %v1366
        %v1417 = vpop.f32.mrf.mxu0
        %v1418 = vadd.f32 0.0, %v1417
        %1419 = vmatmul.f32.gmra.mxu0 %v1368
        %v1420 = vpop.f32.mrf.mxu0
        %v1421 = vadd.f32 0.0, %v1420
        %1422 = vmatmul.f32.gmra.mxu0 %v1370
        %v1423 = vpop.f32.mrf.mxu0
        %v1424 = vadd.f32 0.0, %v1423
        %1425 = vmatmul.f32.gmra.mxu0 %v1372
        %v1426 = vpop.f32.mrf.mxu0
        %v1427 = vadd.f32 0.0, %v1426
        %1428 = vmatmul.f32.gmra.mxu0 %v1374
        %v1429 = vpop.f32.mrf.mxu0
        %v1430 = vadd.f32 0.0, %v1429
        %1431 = vmatmul.f32.gmra.mxu0 %v1376
        %v1432 = vpop.f32.mrf.mxu0
        %v1433 = vadd.f32 0.0, %v1432
        %1434 = vmatmul.f32.gmra.mxu0 %v1378
        %v1435 = vpop.f32.mrf.mxu0
        %v1436 = vadd.f32 0.0, %v1435
        %1437 = vmatmul.f32.gmra.mxu0 %v1380
        %v1438 = vpop.f32.mrf.mxu0
        %v1439 = vadd.f32 0.0, %v1438
        %1440 = vmatmul.f32.gmra.mxu0 %v1382
        %v1441 = vpop.f32.mrf.mxu0
        %v1442 = vadd.f32 0.0, %v1441
        %1443 = vmatmul.f32.gmra.mxu0 %v1384
        %v1444 = vpop.f32.mrf.mxu0
        %v1445 = vadd.f32 0.0, %v1444
        %1446 = vmatmul.f32.gmra.mxu0 %v1386
        %v1447 = vpop.f32.mrf.mxu0
        %v1448 = vadd.f32 0.0, %v1447
        %1449 = vmatmul.f32.gmra.mxu0 %v1388
        %v1450 = vpop.f32.mrf.mxu0
        %v1451 = vadd.f32 0.0, %v1450
        %1452 = vmatmul.f32.gmra.mxu0 %v1390
        %v1453 = vpop.f32.mrf.mxu0
        %v1454 = vadd.f32 0.0, %v1453
        %1455 = vmatmul.f32.gmra.mxu0 %v1392
        %v1456 = vpop.f32.mrf.mxu0
        %v1457 = vadd.f32 0.0, %v1456
        %1458 = vdwg.mxu0
        %1459 = vmatpush.msra.mxu0 0.0
        %1460 = vmatpush.msra.mxu0 0.0
        %1461 = vmatpush.msra.mxu0 0.0
        %1462 = vmatpush.msra.mxu0 0.0
        %1463 = vmatpush.msra.mxu0 0.0
        %1464 = vmatpush.msra.mxu0 0.0
        %1465 = vmatpush.msra.mxu0 0.0
        %1466 = vmatpush.msra.mxu0 0.0
        %1467 = vmatpush.msra.mxu0 0.0
        %1468 = vmatpush.msra.mxu0 0.0
        %1469 = vmatpush.msra.mxu0 0.0
        %1470 = vmatpush.msra.mxu0 0.0
        %1471 = vmatpush.msra.mxu0 %v1361
        %1472 = vmatpush.msra.mxu0 %v1359
        %1473 = vmatpush.msra.mxu0 %v1357
        %1474 = vmatpush.msra.mxu0 %v1355
        %1475 = vmatmul.f32.gmra.mxu0 %v1362
        %v1476 = vpop.f32.mrf.mxu0
        %v1477 = vadd.f32 0.0, %v1476
        %1478 = vmatmul.f32.gmra.mxu0 %v1364
        %v1479 = vpop.f32.mrf.mxu0
        %v1480 = vadd.f32 0.0, %v1479
        %1481 = vmatmul.f32.gmra.mxu0 %v1366
        %v1482 = vpop.f32.mrf.mxu0
        %v1483 = vadd.f32 0.0, %v1482
        %1484 = vmatmul.f32.gmra.mxu0 %v1368
        %v1485 = vpop.f32.mrf.mxu0
        %v1486 = vadd.f32 0.0, %v1485
        %1487 = vmatmul.f32.gmra.mxu0 %v1370
        %v1488 = vpop.f32.mrf.mxu0
        %v1489 = vadd.f32 0.0, %v1488
        %1490 = vmatmul.f32.gmra.mxu0 %v1372
        %v1491 = vpop.f32.mrf.mxu0
        %v1492 = vadd.f32 0.0, %v1491
        %1493 = vmatmul.f32.gmra.mxu0 %v1374
        %v1494 = vpop.f32.mrf.mxu0
        %v1495 = vadd.f32 0.0, %v1494
        %1496 = vmatmul.f32.gmra.mxu0 %v1376
        %v1497 = vpop.f32.mrf.mxu0
        %v1498 = vadd.f32 0.0, %v1497
        %1499 = vmatmul.f32.gmra.mxu0 %v1378
        %v1500 = vpop.f32.mrf.mxu0
        %v1501 = vadd.f32 0.0, %v1500
        %1502 = vmatmul.f32.gmra.mxu0 %v1380
        %v1503 = vpop.f32.mrf.mxu0
        %v1504 = vadd.f32 0.0, %v1503
        %1505 = vmatmul.f32.gmra.mxu0 %v1382
        %v1506 = vpop.f32.mrf.mxu0
        %v1507 = vadd.f32 0.0, %v1506
        %1508 = vmatmul.f32.gmra.mxu0 %v1384
        %v1509 = vpop.f32.mrf.mxu0
        %v1510 = vadd.f32 0.0, %v1509
        %1511 = vmatmul.f32.gmra.mxu0 %v1386
        %v1512 = vpop.f32.mrf.mxu0
        %v1513 = vadd.f32 0.0, %v1512
        %1514 = vmatmul.f32.gmra.mxu0 %v1388
        %v1515 = vpop.f32.mrf.mxu0
        %v1516 = vadd.f32 0.0, %v1515
        %1517 = vmatmul.f32.gmra.mxu0 %v1390
        %v1518 = vpop.f32.mrf.mxu0
        %v1519 = vadd.f32 0.0, %v1518
        %1520 = vmatmul.f32.gmra.mxu0 %v1392
        %v1521 = vpop.f32.mrf.mxu0
        %v1522 = vadd.f32 0.0, %v1521
        %1523 = vdwg.mxu0
        %v1524 = vadd.f32 %v1280, %v1412
        %v1525 = vadd.f32 %v1281, %v1477
        %v1526 = vadd.f32 %v1282, %v1415
        %v1527 = vadd.f32 %v1283, %v1480
        %v1528 = vadd.f32 %v1284, %v1418
        %v1529 = vadd.f32 %v1285, %v1483
        %v1530 = vadd.f32 %v1286, %v1421
        %v1531 = vadd.f32 %v1287, %v1486
        %v1532 = vadd.f32 %v1288, %v1424
        %v1533 = vadd.f32 %v1289, %v1489
        %v1534 = vadd.f32 %v1290, %v1427
        %v1535 = vadd.f32 %v1291, %v1492
        %v1536 = vadd.f32 %v1292, %v1430
        %v1537 = vadd.f32 %v1293, %v1495
        %v1538 = vadd.f32 %v1294, %v1433
        %v1539 = vadd.f32 %v1295, %v1498
        %v1540 = vadd.f32 %v1296, %v1436
        %v1541 = vadd.f32 %v1297, %v1501
        %v1542 = vadd.f32 %v1298, %v1439
        %v1543 = vadd.f32 %v1299, %v1504
        %v1544 = vadd.f32 %v1300, %v1442
        %v1545 = vadd.f32 %v1301, %v1507
        %v1546 = vadd.f32 %v1302, %v1445
        %v1547 = vadd.f32 %v1303, %v1510
        %v1548 = vadd.f32 %v1304, %v1448
        %v1549 = vadd.f32 %v1305, %v1513
        %v1550 = vadd.f32 %v1306, %v1451
        %v1551 = vadd.f32 %v1307, %v1516
        %v1552 = vadd.f32 %v1308, %v1454
        %v1553 = vadd.f32 %v1309, %v1519
        %v1554 = vadd.f32 %v1310, %v1457
        %v1555 = vadd.f32 %v1311, %v1522
        %vm1556 = vcmask 1043456
        %v1557 = vrot.slane %v637, 4
        %v1558 = vrot.slane %v638, 4
        %v1559 = vsel %vm1556, %v1557, %v1558
        %v1560 = vrot.slane %v639, 4
        %v1561 = vsel %vm1556, %v1558, %v1560
        %v1562 = vrot.slane %v640, 4
        %v1563 = vrot.slane %v641, 4
        %v1564 = vsel %vm1556, %v1562, %v1563
        %v1565 = vrot.slane %v642, 4
        %v1566 = vsel %vm1556, %v1563, %v1565
        %v1567 = vrot.slane %v643, 4
        %v1568 = vrot.slane %v644, 4
        %v1569 = vsel %vm1556, %v1567, %v1568
        %v1570 = vrot.slane %v645, 4
        %v1571 = vsel %vm1556, %v1568, %v1570
        %v1572 = vrot.slane %v646, 4
        %v1573 = vrot.slane %v647, 4
        %v1574 = vsel %vm1556, %v1572, %v1573
        %v1575 = vrot.slane %v648, 4
        %v1576 = vsel %vm1556, %v1573, %v1575
        %v1577 = vrot.slane %v649, 4
        %v1578 = vrot.slane %v650, 4
        %v1579 = vsel %vm1556, %v1577, %v1578
        %v1580 = vrot.slane %v651, 4
        %v1581 = vsel %vm1556, %v1578, %v1580
        %v1582 = vrot.slane %v652, 4
        %v1583 = vrot.slane %v653, 4
        %v1584 = vsel %vm1556, %v1582, %v1583
        %v1585 = vrot.slane %v654, 4
        %v1586 = vsel %vm1556, %v1583, %v1585
        %v1587 = vrot.slane %v655, 4
        %v1588 = vrot.slane %v656, 4
        %v1589 = vsel %vm1556, %v1587, %v1588
        %v1590 = vrot.slane %v657, 4
        %v1591 = vsel %vm1556, %v1588, %v1590
        %v1592 = vrot.slane %v658, 4
        %v1593 = vrot.slane %v659, 4
        %v1594 = vsel %vm1556, %v1592, %v1593
        %v1595 = vrot.slane %v660, 4
        %v1596 = vsel %vm1556, %v1593, %v1595
        %s1597 = scalar_lea.vmem [#allocation5], 256
        %v1598 = vld [vmem:[%s1597] sm:$0xff]
        %v1599 = vld [vmem:[%s1597 + $0x8] sm:$0xff]
        %v1600 = vld [vmem:[%s1597 + $0x10] sm:$0xff]
        %v1601 = vld [vmem:[%s1597 + $0x18] sm:$0xff]
        %v1602 = vld [vmem:[%s1597 + $0x20] sm:$0xff]
        %v1603 = vld [vmem:[%s1597 + $0x28] sm:$0xff]
        %v1604 = vld [vmem:[%s1597 + $0x30] sm:$0xff]
        %v1605 = vld [vmem:[%s1597 + $0x38] sm:$0xff]
        %v1606 = vsel %vm743, %v1559, 0
        %v1608 = vsel %vm743, %v1561, 0
        %v1610 = vsel %vm743, %v1564, 0
        %v1612 = vsel %vm743, %v1566, 0
        %v1614 = vsel %vm743, %v1569, 0
        %v1616 = vsel %vm743, %v1571, 0
        %v1618 = vsel %vm743, %v1574, 0
        %v1620 = vsel %vm743, %v1576, 0
        %v1622 = vsel %vm743, %v1579, 0
        %v1624 = vsel %vm743, %v1581, 0
        %v1626 = vsel %vm743, %v1584, 0
        %v1628 = vsel %vm743, %v1586, 0
        %v1630 = vsel %vm743, %v1589, 0
        %v1632 = vsel %vm743, %v1591, 0
        %v1634 = vsel %vm743, %v1594, 0
        %v1636 = vsel %vm743, %v1596, 0
        %1638 = vmatpush.msra.mxu0 0.0
        %1639 = vmatpush.msra.mxu0 0.0
        %1640 = vmatpush.msra.mxu0 0.0
        %1641 = vmatpush.msra.mxu0 0.0
        %1642 = vmatpush.msra.mxu0 0.0
        %1643 = vmatpush.msra.mxu0 0.0
        %1644 = vmatpush.msra.mxu0 0.0
        %1645 = vmatpush.msra.mxu0 0.0
        %1646 = vmatpush.msra.mxu0 0.0
        %1647 = vmatpush.msra.mxu0 0.0
        %1648 = vmatpush.msra.mxu0 0.0
        %1649 = vmatpush.msra.mxu0 0.0
        %1650 = vmatpush.msra.mxu0 %v1604
        %1651 = vmatpush.msra.mxu0 %v1602
        %1652 = vmatpush.msra.mxu0 %v1600
        %1653 = vmatpush.msra.mxu0 %v1598
        %1654 = vmatmul.f32.gmra.mxu0 %v1606
        %v1655 = vpop.f32.mrf.mxu0
        %v1656 = vadd.f32 0.0, %v1655
        %1657 = vmatmul.f32.gmra.mxu0 %v1608
        %v1658 = vpop.f32.mrf.mxu0
        %v1659 = vadd.f32 0.0, %v1658
        %1660 = vmatmul.f32.gmra.mxu0 %v1610
        %v1661 = vpop.f32.mrf.mxu0
        %v1662 = vadd.f32 0.0, %v1661
        %1663 = vmatmul.f32.gmra.mxu0 %v1612
        %v1664 = vpop.f32.mrf.mxu0
        %v1665 = vadd.f32 0.0, %v1664
        %1666 = vmatmul.f32.gmra.mxu0 %v1614
        %v1667 = vpop.f32.mrf.mxu0
        %v1668 = vadd.f32 0.0, %v1667
        %1669 = vmatmul.f32.gmra.mxu0 %v1616
        %v1670 = vpop.f32.mrf.mxu0
        %v1671 = vadd.f32 0.0, %v1670
        %1672 = vmatmul.f32.gmra.mxu0 %v1618
        %v1673 = vpop.f32.mrf.mxu0
        %v1674 = vadd.f32 0.0, %v1673
        %1675 = vmatmul.f32.gmra.mxu0 %v1620
        %v1676 = vpop.f32.mrf.mxu0
        %v1677 = vadd.f32 0.0, %v1676
        %1678 = vmatmul.f32.gmra.mxu0 %v1622
        %v1679 = vpop.f32.mrf.mxu0
        %v1680 = vadd.f32 0.0, %v1679
        %1681 = vmatmul.f32.gmra.mxu0 %v1624
        %v1682 = vpop.f32.mrf.mxu0
        %v1683 = vadd.f32 0.0, %v1682
        %1684 = vmatmul.f32.gmra.mxu0 %v1626
        %v1685 = vpop.f32.mrf.mxu0
        %v1686 = vadd.f32 0.0, %v1685
        %1687 = vmatmul.f32.gmra.mxu0 %v1628
        %v1688 = vpop.f32.mrf.mxu0
        %v1689 = vadd.f32 0.0, %v1688
        %1690 = vmatmul.f32.gmra.mxu0 %v1630
        %v1691 = vpop.f32.mrf.mxu0
        %v1692 = vadd.f32 0.0, %v1691
        %1693 = vmatmul.f32.gmra.mxu0 %v1632
        %v1694 = vpop.f32.mrf.mxu0
        %v1695 = vadd.f32 0.0, %v1694
        %1696 = vmatmul.f32.gmra.mxu0 %v1634
        %v1697 = vpop.f32.mrf.mxu0
        %v1698 = vadd.f32 0.0, %v1697
        %1699 = vmatmul.f32.gmra.mxu0 %v1636
        %v1700 = vpop.f32.mrf.mxu0
        %v1701 = vadd.f32 0.0, %v1700
        %1702 = vdwg.mxu0
        %1703 = vmatpush.msra.mxu0 0.0
        %1704 = vmatpush.msra.mxu0 0.0
        %1705 = vmatpush.msra.mxu0 0.0
        %1706 = vmatpush.msra.mxu0 0.0
        %1707 = vmatpush.msra.mxu0 0.0
        %1708 = vmatpush.msra.mxu0 0.0
        %1709 = vmatpush.msra.mxu0 0.0
        %1710 = vmatpush.msra.mxu0 0.0
        %1711 = vmatpush.msra.mxu0 0.0
        %1712 = vmatpush.msra.mxu0 0.0
        %1713 = vmatpush.msra.mxu0 0.0
        %1714 = vmatpush.msra.mxu0 0.0
        %1715 = vmatpush.msra.mxu0 %v1605
        %1716 = vmatpush.msra.mxu0 %v1603
        %1717 = vmatpush.msra.mxu0 %v1601
        %1718 = vmatpush.msra.mxu0 %v1599
        %1719 = vmatmul.f32.gmra.mxu0 %v1606
        %v1720 = vpop.f32.mrf.mxu0
        %v1721 = vadd.f32 0.0, %v1720
        %1722 = vmatmul.f32.gmra.mxu0 %v1608
        %v1723 = vpop.f32.mrf.mxu0
        %v1724 = vadd.f32 0.0, %v1723
        %1725 = vmatmul.f32.gmra.mxu0 %v1610
        %v1726 = vpop.f32.mrf.mxu0
        %v1727 = vadd.f32 0.0, %v1726
        %1728 = vmatmul.f32.gmra.mxu0 %v1612
        %v1729 = vpop.f32.mrf.mxu0
        %v1730 = vadd.f32 0.0, %v1729
        %1731 = vmatmul.f32.gmra.mxu0 %v1614
        %v1732 = vpop.f32.mrf.mxu0
        %v1733 = vadd.f32 0.0, %v1732
        %1734 = vmatmul.f32.gmra.mxu0 %v1616
        %v1735 = vpop.f32.mrf.mxu0
        %v1736 = vadd.f32 0.0, %v1735
        %1737 = vmatmul.f32.gmra.mxu0 %v1618
        %v1738 = vpop.f32.mrf.mxu0
        %v1739 = vadd.f32 0.0, %v1738
        %1740 = vmatmul.f32.gmra.mxu0 %v1620
        %v1741 = vpop.f32.mrf.mxu0
        %v1742 = vadd.f32 0.0, %v1741
        %1743 = vmatmul.f32.gmra.mxu0 %v1622
        %v1744 = vpop.f32.mrf.mxu0
        %v1745 = vadd.f32 0.0, %v1744
        %1746 = vmatmul.f32.gmra.mxu0 %v1624
        %v1747 = vpop.f32.mrf.mxu0
        %v1748 = vadd.f32 0.0, %v1747
        %1749 = vmatmul.f32.gmra.mxu0 %v1626
        %v1750 = vpop.f32.mrf.mxu0
        %v1751 = vadd.f32 0.0, %v1750
        %1752 = vmatmul.f32.gmra.mxu0 %v1628
        %v1753 = vpop.f32.mrf.mxu0
        %v1754 = vadd.f32 0.0, %v1753
        %1755 = vmatmul.f32.gmra.mxu0 %v1630
        %v1756 = vpop.f32.mrf.mxu0
        %v1757 = vadd.f32 0.0, %v1756
        %1758 = vmatmul.f32.gmra.mxu0 %v1632
        %v1759 = vpop.f32.mrf.mxu0
        %v1760 = vadd.f32 0.0, %v1759
        %1761 = vmatmul.f32.gmra.mxu0 %v1634
        %v1762 = vpop.f32.mrf.mxu0
        %v1763 = vadd.f32 0.0, %v1762
        %1764 = vmatmul.f32.gmra.mxu0 %v1636
        %v1765 = vpop.f32.mrf.mxu0
        %v1766 = vadd.f32 0.0, %v1765
        %1767 = vdwg.mxu0
        %v1768 = vadd.f32 %v1524, %v1656
        %v1769 = vadd.f32 %v1525, %v1721
        %v1770 = vadd.f32 %v1526, %v1659
        %v1771 = vadd.f32 %v1527, %v1724
        %v1772 = vadd.f32 %v1528, %v1662
        %v1773 = vadd.f32 %v1529, %v1727
        %v1774 = vadd.f32 %v1530, %v1665
        %v1775 = vadd.f32 %v1531, %v1730
        %v1776 = vadd.f32 %v1532, %v1668
        %v1777 = vadd.f32 %v1533, %v1733
        %v1778 = vadd.f32 %v1534, %v1671
        %v1779 = vadd.f32 %v1535, %v1736
        %v1780 = vadd.f32 %v1536, %v1674
        %v1781 = vadd.f32 %v1537, %v1739
        %v1782 = vadd.f32 %v1538, %v1677
        %v1783 = vadd.f32 %v1539, %v1742
        %v1784 = vadd.f32 %v1540, %v1680
        %v1785 = vadd.f32 %v1541, %v1745
        %v1786 = vadd.f32 %v1542, %v1683
        %v1787 = vadd.f32 %v1543, %v1748
        %v1788 = vadd.f32 %v1544, %v1686
        %v1789 = vadd.f32 %v1545, %v1751
        %v1790 = vadd.f32 %v1546, %v1689
        %v1791 = vadd.f32 %v1547, %v1754
        %v1792 = vadd.f32 %v1548, %v1692
        %v1793 = vadd.f32 %v1549, %v1757
        %v1794 = vadd.f32 %v1550, %v1695
        %v1795 = vadd.f32 %v1551, %v1760
        %v1796 = vadd.f32 %v1552, %v1698
        %v1797 = vadd.f32 %v1553, %v1763
        %v1798 = vadd.f32 %v1554, %v1701
        %v1799 = vadd.f32 %v1555, %v1766
        %vm1800 = vcmask 1042432
        %v1801 = vrot.slane %v637, 5
        %v1802 = vrot.slane %v638, 5
        %v1803 = vsel %vm1800, %v1801, %v1802
        %v1804 = vrot.slane %v639, 5
        %v1805 = vsel %vm1800, %v1802, %v1804
        %v1806 = vrot.slane %v640, 5
        %v1807 = vrot.slane %v641, 5
        %v1808 = vsel %vm1800, %v1806, %v1807
        %v1809 = vrot.slane %v642, 5
        %v1810 = vsel %vm1800, %v1807, %v1809
        %v1811 = vrot.slane %v643, 5
        %v1812 = vrot.slane %v644, 5
        %v1813 = vsel %vm1800, %v1811, %v1812
        %v1814 = vrot.slane %v645, 5
        %v1815 = vsel %vm1800, %v1812, %v1814
        %v1816 = vrot.slane %v646, 5
        %v1817 = vrot.slane %v647, 5
        %v1818 = vsel %vm1800, %v1816, %v1817
        %v1819 = vrot.slane %v648, 5
        %v1820 = vsel %vm1800, %v1817, %v1819
        %v1821 = vrot.slane %v649, 5
        %v1822 = vrot.slane %v650, 5
        %v1823 = vsel %vm1800, %v1821, %v1822
        %v1824 = vrot.slane %v651, 5
        %v1825 = vsel %vm1800, %v1822, %v1824
        %v1826 = vrot.slane %v652, 5
        %v1827 = vrot.slane %v653, 5
        %v1828 = vsel %vm1800, %v1826, %v1827
        %v1829 = vrot.slane %v654, 5
        %v1830 = vsel %vm1800, %v1827, %v1829
        %v1831 = vrot.slane %v655, 5
        %v1832 = vrot.slane %v656, 5
        %v1833 = vsel %vm1800, %v1831, %v1832
        %v1834 = vrot.slane %v657, 5
        %v1835 = vsel %vm1800, %v1832, %v1834
        %v1836 = vrot.slane %v658, 5
        %v1837 = vrot.slane %v659, 5
        %v1838 = vsel %vm1800, %v1836, %v1837
        %v1839 = vrot.slane %v660, 5
        %v1840 = vsel %vm1800, %v1837, %v1839
        %s1841 = scalar_lea.vmem [#allocation5], 320
        %v1842 = vld [vmem:[%s1841] sm:$0xff]
        %v1843 = vld [vmem:[%s1841 + $0x8] sm:$0xff]
        %v1844 = vld [vmem:[%s1841 + $0x10] sm:$0xff]
        %v1845 = vld [vmem:[%s1841 + $0x18] sm:$0xff]
        %v1846 = vld [vmem:[%s1841 + $0x20] sm:$0xff]
        %v1847 = vld [vmem:[%s1841 + $0x28] sm:$0xff]
        %v1848 = vld [vmem:[%s1841 + $0x30] sm:$0xff]
        %v1849 = vld [vmem:[%s1841 + $0x38] sm:$0xff]
        %v1850 = vsel %vm743, %v1803, 0
        %v1852 = vsel %vm743, %v1805, 0
        %v1854 = vsel %vm743, %v1808, 0
        %v1856 = vsel %vm743, %v1810, 0
        %v1858 = vsel %vm743, %v1813, 0
        %v1860 = vsel %vm743, %v1815, 0
        %v1862 = vsel %vm743, %v1818, 0
        %v1864 = vsel %vm743, %v1820, 0
        %v1866 = vsel %vm743, %v1823, 0
        %v1868 = vsel %vm743, %v1825, 0
        %v1870 = vsel %vm743, %v1828, 0
        %v1872 = vsel %vm743, %v1830, 0
        %v1874 = vsel %vm743, %v1833, 0
        %v1876 = vsel %vm743, %v1835, 0
        %v1878 = vsel %vm743, %v1838, 0
        %v1880 = vsel %vm743, %v1840, 0
        %1882 = vmatpush.msra.mxu0 0.0
        %1883 = vmatpush.msra.mxu0 0.0
        %1884 = vmatpush.msra.mxu0 0.0
        %1885 = vmatpush.msra.mxu0 0.0
        %1886 = vmatpush.msra.mxu0 0.0
        %1887 = vmatpush.msra.mxu0 0.0
        %1888 = vmatpush.msra.mxu0 0.0
        %1889 = vmatpush.msra.mxu0 0.0
        %1890 = vmatpush.msra.mxu0 0.0
        %1891 = vmatpush.msra.mxu0 0.0
        %1892 = vmatpush.msra.mxu0 0.0
        %1893 = vmatpush.msra.mxu0 0.0
        %1894 = vmatpush.msra.mxu0 %v1848
        %1895 = vmatpush.msra.mxu0 %v1846
        %1896 = vmatpush.msra.mxu0 %v1844
        %1897 = vmatpush.msra.mxu0 %v1842
        %1898 = vmatmul.f32.gmra.mxu0 %v1850
        %v1899 = vpop.f32.mrf.mxu0
        %v1900 = vadd.f32 0.0, %v1899
        %1901 = vmatmul.f32.gmra.mxu0 %v1852
        %v1902 = vpop.f32.mrf.mxu0
        %v1903 = vadd.f32 0.0, %v1902
        %1904 = vmatmul.f32.gmra.mxu0 %v1854
        %v1905 = vpop.f32.mrf.mxu0
        %v1906 = vadd.f32 0.0, %v1905
        %1907 = vmatmul.f32.gmra.mxu0 %v1856
        %v1908 = vpop.f32.mrf.mxu0
        %v1909 = vadd.f32 0.0, %v1908
        %1910 = vmatmul.f32.gmra.mxu0 %v1858
        %v1911 = vpop.f32.mrf.mxu0
        %v1912 = vadd.f32 0.0, %v1911
        %1913 = vmatmul.f32.gmra.mxu0 %v1860
        %v1914 = vpop.f32.mrf.mxu0
        %v1915 = vadd.f32 0.0, %v1914
        %1916 = vmatmul.f32.gmra.mxu0 %v1862
        %v1917 = vpop.f32.mrf.mxu0
        %v1918 = vadd.f32 0.0, %v1917
        %1919 = vmatmul.f32.gmra.mxu0 %v1864
        %v1920 = vpop.f32.mrf.mxu0
        %v1921 = vadd.f32 0.0, %v1920
        %1922 = vmatmul.f32.gmra.mxu0 %v1866
        %v1923 = vpop.f32.mrf.mxu0
        %v1924 = vadd.f32 0.0, %v1923
        %1925 = vmatmul.f32.gmra.mxu0 %v1868
        %v1926 = vpop.f32.mrf.mxu0
        %v1927 = vadd.f32 0.0, %v1926
        %1928 = vmatmul.f32.gmra.mxu0 %v1870
        %v1929 = vpop.f32.mrf.mxu0
        %v1930 = vadd.f32 0.0, %v1929
        %1931 = vmatmul.f32.gmra.mxu0 %v1872
        %v1932 = vpop.f32.mrf.mxu0
        %v1933 = vadd.f32 0.0, %v1932
        %1934 = vmatmul.f32.gmra.mxu0 %v1874
        %v1935 = vpop.f32.mrf.mxu0
        %v1936 = vadd.f32 0.0, %v1935
        %1937 = vmatmul.f32.gmra.mxu0 %v1876
        %v1938 = vpop.f32.mrf.mxu0
        %v1939 = vadd.f32 0.0, %v1938
        %1940 = vmatmul.f32.gmra.mxu0 %v1878
        %v1941 = vpop.f32.mrf.mxu0
        %v1942 = vadd.f32 0.0, %v1941
        %1943 = vmatmul.f32.gmra.mxu0 %v1880
        %v1944 = vpop.f32.mrf.mxu0
        %v1945 = vadd.f32 0.0, %v1944
        %1946 = vdwg.mxu0
        %1947 = vmatpush.msra.mxu0 0.0
        %1948 = vmatpush.msra.mxu0 0.0
        %1949 = vmatpush.msra.mxu0 0.0
        %1950 = vmatpush.msra.mxu0 0.0
        %1951 = vmatpush.msra.mxu0 0.0
        %1952 = vmatpush.msra.mxu0 0.0
        %1953 = vmatpush.msra.mxu0 0.0
        %1954 = vmatpush.msra.mxu0 0.0
        %1955 = vmatpush.msra.mxu0 0.0
        %1956 = vmatpush.msra.mxu0 0.0
        %1957 = vmatpush.msra.mxu0 0.0
        %1958 = vmatpush.msra.mxu0 0.0
        %1959 = vmatpush.msra.mxu0 %v1849
        %1960 = vmatpush.msra.mxu0 %v1847
        %1961 = vmatpush.msra.mxu0 %v1845
        %1962 = vmatpush.msra.mxu0 %v1843
        %1963 = vmatmul.f32.gmra.mxu0 %v1850
        %v1964 = vpop.f32.mrf.mxu0
        %v1965 = vadd.f32 0.0, %v1964
        %1966 = vmatmul.f32.gmra.mxu0 %v1852
        %v1967 = vpop.f32.mrf.mxu0
        %v1968 = vadd.f32 0.0, %v1967
        %1969 = vmatmul.f32.gmra.mxu0 %v1854
        %v1970 = vpop.f32.mrf.mxu0
        %v1971 = vadd.f32 0.0, %v1970
        %1972 = vmatmul.f32.gmra.mxu0 %v1856
        %v1973 = vpop.f32.mrf.mxu0
        %v1974 = vadd.f32 0.0, %v1973
        %1975 = vmatmul.f32.gmra.mxu0 %v1858
        %v1976 = vpop.f32.mrf.mxu0
        %v1977 = vadd.f32 0.0, %v1976
        %1978 = vmatmul.f32.gmra.mxu0 %v1860
        %v1979 = vpop.f32.mrf.mxu0
        %v1980 = vadd.f32 0.0, %v1979
        %1981 = vmatmul.f32.gmra.mxu0 %v1862
        %v1982 = vpop.f32.mrf.mxu0
        %v1983 = vadd.f32 0.0, %v1982
        %1984 = vmatmul.f32.gmra.mxu0 %v1864
        %v1985 = vpop.f32.mrf.mxu0
        %v1986 = vadd.f32 0.0, %v1985
        %1987 = vmatmul.f32.gmra.mxu0 %v1866
        %v1988 = vpop.f32.mrf.mxu0
        %v1989 = vadd.f32 0.0, %v1988
        %1990 = vmatmul.f32.gmra.mxu0 %v1868
        %v1991 = vpop.f32.mrf.mxu0
        %v1992 = vadd.f32 0.0, %v1991
        %1993 = vmatmul.f32.gmra.mxu0 %v1870
        %v1994 = vpop.f32.mrf.mxu0
        %v1995 = vadd.f32 0.0, %v1994
        %1996 = vmatmul.f32.gmra.mxu0 %v1872
        %v1997 = vpop.f32.mrf.mxu0
        %v1998 = vadd.f32 0.0, %v1997
        %1999 = vmatmul.f32.gmra.mxu0 %v1874
        %v2000 = vpop.f32.mrf.mxu0
        %v2001 = vadd.f32 0.0, %v2000
        %2002 = vmatmul.f32.gmra.mxu0 %v1876
        %v2003 = vpop.f32.mrf.mxu0
        %v2004 = vadd.f32 0.0, %v2003
        %2005 = vmatmul.f32.gmra.mxu0 %v1878
        %v2006 = vpop.f32.mrf.mxu0
        %v2007 = vadd.f32 0.0, %v2006
        %2008 = vmatmul.f32.gmra.mxu0 %v1880
        %v2009 = vpop.f32.mrf.mxu0
        %v2010 = vadd.f32 0.0, %v2009
        %2011 = vdwg.mxu0
        %v2012 = vadd.f32 %v1768, %v1900
        %v2013 = vadd.f32 %v1769, %v1965
        %v2014 = vadd.f32 %v1770, %v1903
        %v2015 = vadd.f32 %v1771, %v1968
        %v2016 = vadd.f32 %v1772, %v1906
        %v2017 = vadd.f32 %v1773, %v1971
        %v2018 = vadd.f32 %v1774, %v1909
        %v2019 = vadd.f32 %v1775, %v1974
        %v2020 = vadd.f32 %v1776, %v1912
        %v2021 = vadd.f32 %v1777, %v1977
        %v2022 = vadd.f32 %v1778, %v1915
        %v2023 = vadd.f32 %v1779, %v1980
        %v2024 = vadd.f32 %v1780, %v1918
        %v2025 = vadd.f32 %v1781, %v1983
        %v2026 = vadd.f32 %v1782, %v1921
        %v2027 = vadd.f32 %v1783, %v1986
        %v2028 = vadd.f32 %v1784, %v1924
        %v2029 = vadd.f32 %v1785, %v1989
        %v2030 = vadd.f32 %v1786, %v1927
        %v2031 = vadd.f32 %v1787, %v1992
        %v2032 = vadd.f32 %v1788, %v1930
        %v2033 = vadd.f32 %v1789, %v1995
        %v2034 = vadd.f32 %v1790, %v1933
        %v2035 = vadd.f32 %v1791, %v1998
        %v2036 = vadd.f32 %v1792, %v1936
        %v2037 = vadd.f32 %v1793, %v2001
        %v2038 = vadd.f32 %v1794, %v1939
        %v2039 = vadd.f32 %v1795, %v2004
        %v2040 = vadd.f32 %v1796, %v1942
        %v2041 = vadd.f32 %v1797, %v2007
        %v2042 = vadd.f32 %v1798, %v1945
        %v2043 = vadd.f32 %v1799, %v2010
        %vm2044 = vcmask 1041408
        %v2045 = vrot.slane %v637, 6
        %v2046 = vrot.slane %v638, 6
        %v2047 = vsel %vm2044, %v2045, %v2046
        %v2048 = vrot.slane %v639, 6
        %v2049 = vsel %vm2044, %v2046, %v2048
        %v2050 = vrot.slane %v640, 6
        %v2051 = vrot.slane %v641, 6
        %v2052 = vsel %vm2044, %v2050, %v2051
        %v2053 = vrot.slane %v642, 6
        %v2054 = vsel %vm2044, %v2051, %v2053
        %v2055 = vrot.slane %v643, 6
        %v2056 = vrot.slane %v644, 6
        %v2057 = vsel %vm2044, %v2055, %v2056
        %v2058 = vrot.slane %v645, 6
        %v2059 = vsel %vm2044, %v2056, %v2058
        %v2060 = vrot.slane %v646, 6
        %v2061 = vrot.slane %v647, 6
        %v2062 = vsel %vm2044, %v2060, %v2061
        %v2063 = vrot.slane %v648, 6
        %v2064 = vsel %vm2044, %v2061, %v2063
        %v2065 = vrot.slane %v649, 6
        %v2066 = vrot.slane %v650, 6
        %v2067 = vsel %vm2044, %v2065, %v2066
        %v2068 = vrot.slane %v651, 6
        %v2069 = vsel %vm2044, %v2066, %v2068
        %v2070 = vrot.slane %v652, 6
        %v2071 = vrot.slane %v653, 6
        %v2072 = vsel %vm2044, %v2070, %v2071
        %v2073 = vrot.slane %v654, 6
        %v2074 = vsel %vm2044, %v2071, %v2073
        %v2075 = vrot.slane %v655, 6
        %v2076 = vrot.slane %v656, 6
        %v2077 = vsel %vm2044, %v2075, %v2076
        %v2078 = vrot.slane %v657, 6
        %v2079 = vsel %vm2044, %v2076, %v2078
        %v2080 = vrot.slane %v658, 6
        %v2081 = vrot.slane %v659, 6
        %v2082 = vsel %vm2044, %v2080, %v2081
        %v2083 = vrot.slane %v660, 6
        %v2084 = vsel %vm2044, %v2081, %v2083
        %s2085 = scalar_lea.vmem [#allocation5], 384
        %v2086 = vld [vmem:[%s2085] sm:$0xff]
        %v2087 = vld [vmem:[%s2085 + $0x8] sm:$0xff]
        %v2088 = vld [vmem:[%s2085 + $0x10] sm:$0xff]
        %v2089 = vld [vmem:[%s2085 + $0x18] sm:$0xff]
        %v2090 = vld [vmem:[%s2085 + $0x20] sm:$0xff]
        %v2091 = vld [vmem:[%s2085 + $0x28] sm:$0xff]
        %v2092 = vld [vmem:[%s2085 + $0x30] sm:$0xff]
        %v2093 = vld [vmem:[%s2085 + $0x38] sm:$0xff]
        %v2094 = vsel %vm743, %v2047, 0
        %v2096 = vsel %vm743, %v2049, 0
        %v2098 = vsel %vm743, %v2052, 0
        %v2100 = vsel %vm743, %v2054, 0
        %v2102 = vsel %vm743, %v2057, 0
        %v2104 = vsel %vm743, %v2059, 0
        %v2106 = vsel %vm743, %v2062, 0
        %v2108 = vsel %vm743, %v2064, 0
        %v2110 = vsel %vm743, %v2067, 0
        %v2112 = vsel %vm743, %v2069, 0
        %v2114 = vsel %vm743, %v2072, 0
        %v2116 = vsel %vm743, %v2074, 0
        %v2118 = vsel %vm743, %v2077, 0
        %v2120 = vsel %vm743, %v2079, 0
        %v2122 = vsel %vm743, %v2082, 0
        %v2124 = vsel %vm743, %v2084, 0
        %2126 = vmatpush.msra.mxu0 0.0
        %2127 = vmatpush.msra.mxu0 0.0
        %2128 = vmatpush.msra.mxu0 0.0
        %2129 = vmatpush.msra.mxu0 0.0
        %2130 = vmatpush.msra.mxu0 0.0
        %2131 = vmatpush.msra.mxu0 0.0
        %2132 = vmatpush.msra.mxu0 0.0
        %2133 = vmatpush.msra.mxu0 0.0
        %2134 = vmatpush.msra.mxu0 0.0
        %2135 = vmatpush.msra.mxu0 0.0
        %2136 = vmatpush.msra.mxu0 0.0
        %2137 = vmatpush.msra.mxu0 0.0
        %2138 = vmatpush.msra.mxu0 %v2092
        %2139 = vmatpush.msra.mxu0 %v2090
        %2140 = vmatpush.msra.mxu0 %v2088
        %2141 = vmatpush.msra.mxu0 %v2086
        %2142 = vmatmul.f32.gmra.mxu0 %v2094
        %v2143 = vpop.f32.mrf.mxu0
        %v2144 = vadd.f32 0.0, %v2143
        %2145 = vmatmul.f32.gmra.mxu0 %v2096
        %v2146 = vpop.f32.mrf.mxu0
        %v2147 = vadd.f32 0.0, %v2146
        %2148 = vmatmul.f32.gmra.mxu0 %v2098
        %v2149 = vpop.f32.mrf.mxu0
        %v2150 = vadd.f32 0.0, %v2149
        %2151 = vmatmul.f32.gmra.mxu0 %v2100
        %v2152 = vpop.f32.mrf.mxu0
        %v2153 = vadd.f32 0.0, %v2152
        %2154 = vmatmul.f32.gmra.mxu0 %v2102
        %v2155 = vpop.f32.mrf.mxu0
        %v2156 = vadd.f32 0.0, %v2155
        %2157 = vmatmul.f32.gmra.mxu0 %v2104
        %v2158 = vpop.f32.mrf.mxu0
        %v2159 = vadd.f32 0.0, %v2158
        %2160 = vmatmul.f32.gmra.mxu0 %v2106
        %v2161 = vpop.f32.mrf.mxu0
        %v2162 = vadd.f32 0.0, %v2161
        %2163 = vmatmul.f32.gmra.mxu0 %v2108
        %v2164 = vpop.f32.mrf.mxu0
        %v2165 = vadd.f32 0.0, %v2164
        %2166 = vmatmul.f32.gmra.mxu0 %v2110
        %v2167 = vpop.f32.mrf.mxu0
        %v2168 = vadd.f32 0.0, %v2167
        %2169 = vmatmul.f32.gmra.mxu0 %v2112
        %v2170 = vpop.f32.mrf.mxu0
        %v2171 = vadd.f32 0.0, %v2170
        %2172 = vmatmul.f32.gmra.mxu0 %v2114
        %v2173 = vpop.f32.mrf.mxu0
        %v2174 = vadd.f32 0.0, %v2173
        %2175 = vmatmul.f32.gmra.mxu0 %v2116
        %v2176 = vpop.f32.mrf.mxu0
        %v2177 = vadd.f32 0.0, %v2176
        %2178 = vmatmul.f32.gmra.mxu0 %v2118
        %v2179 = vpop.f32.mrf.mxu0
        %v2180 = vadd.f32 0.0, %v2179
        %2181 = vmatmul.f32.gmra.mxu0 %v2120
        %v2182 = vpop.f32.mrf.mxu0
        %v2183 = vadd.f32 0.0, %v2182
        %2184 = vmatmul.f32.gmra.mxu0 %v2122
        %v2185 = vpop.f32.mrf.mxu0
        %v2186 = vadd.f32 0.0, %v2185
        %2187 = vmatmul.f32.gmra.mxu0 %v2124
        %v2188 = vpop.f32.mrf.mxu0
        %v2189 = vadd.f32 0.0, %v2188
        %2190 = vdwg.mxu0
        %2191 = vmatpush.msra.mxu0 0.0
        %2192 = vmatpush.msra.mxu0 0.0
        %2193 = vmatpush.msra.mxu0 0.0
        %2194 = vmatpush.msra.mxu0 0.0
        %2195 = vmatpush.msra.mxu0 0.0
        %2196 = vmatpush.msra.mxu0 0.0
        %2197 = vmatpush.msra.mxu0 0.0
        %2198 = vmatpush.msra.mxu0 0.0
        %2199 = vmatpush.msra.mxu0 0.0
        %2200 = vmatpush.msra.mxu0 0.0
        %2201 = vmatpush.msra.mxu0 0.0
        %2202 = vmatpush.msra.mxu0 0.0
        %2203 = vmatpush.msra.mxu0 %v2093
        %2204 = vmatpush.msra.mxu0 %v2091
        %2205 = vmatpush.msra.mxu0 %v2089
        %2206 = vmatpush.msra.mxu0 %v2087
        %2207 = vmatmul.f32.gmra.mxu0 %v2094
        %v2208 = vpop.f32.mrf.mxu0
        %v2209 = vadd.f32 0.0, %v2208
        %2210 = vmatmul.f32.gmra.mxu0 %v2096
        %v2211 = vpop.f32.mrf.mxu0
        %v2212 = vadd.f32 0.0, %v2211
        %2213 = vmatmul.f32.gmra.mxu0 %v2098
        %v2214 = vpop.f32.mrf.mxu0
        %v2215 = vadd.f32 0.0, %v2214
        %2216 = vmatmul.f32.gmra.mxu0 %v2100
        %v2217 = vpop.f32.mrf.mxu0
        %v2218 = vadd.f32 0.0, %v2217
        %2219 = vmatmul.f32.gmra.mxu0 %v2102
        %v2220 = vpop.f32.mrf.mxu0
        %v2221 = vadd.f32 0.0, %v2220
        %2222 = vmatmul.f32.gmra.mxu0 %v2104
        %v2223 = vpop.f32.mrf.mxu0
        %v2224 = vadd.f32 0.0, %v2223
        %2225 = vmatmul.f32.gmra.mxu0 %v2106
        %v2226 = vpop.f32.mrf.mxu0
        %v2227 = vadd.f32 0.0, %v2226
        %2228 = vmatmul.f32.gmra.mxu0 %v2108
        %v2229 = vpop.f32.mrf.mxu0
        %v2230 = vadd.f32 0.0, %v2229
        %2231 = vmatmul.f32.gmra.mxu0 %v2110
        %v2232 = vpop.f32.mrf.mxu0
        %v2233 = vadd.f32 0.0, %v2232
        %2234 = vmatmul.f32.gmra.mxu0 %v2112
        %v2235 = vpop.f32.mrf.mxu0
        %v2236 = vadd.f32 0.0, %v2235
        %2237 = vmatmul.f32.gmra.mxu0 %v2114
        %v2238 = vpop.f32.mrf.mxu0
        %v2239 = vadd.f32 0.0, %v2238
        %2240 = vmatmul.f32.gmra.mxu0 %v2116
        %v2241 = vpop.f32.mrf.mxu0
        %v2242 = vadd.f32 0.0, %v2241
        %2243 = vmatmul.f32.gmra.mxu0 %v2118
        %v2244 = vpop.f32.mrf.mxu0
        %v2245 = vadd.f32 0.0, %v2244
        %2246 = vmatmul.f32.gmra.mxu0 %v2120
        %v2247 = vpop.f32.mrf.mxu0
        %v2248 = vadd.f32 0.0, %v2247
        %2249 = vmatmul.f32.gmra.mxu0 %v2122
        %v2250 = vpop.f32.mrf.mxu0
        %v2251 = vadd.f32 0.0, %v2250
        %2252 = vmatmul.f32.gmra.mxu0 %v2124
        %v2253 = vpop.f32.mrf.mxu0
        %v2254 = vadd.f32 0.0, %v2253
        %2255 = vdwg.mxu0
        %v2256 = vadd.f32 %v2012, %v2144
        %v2257 = vadd.f32 %v2013, %v2209
        %v2258 = vadd.f32 %v2014, %v2147
        %v2259 = vadd.f32 %v2015, %v2212
        %v2260 = vadd.f32 %v2016, %v2150
        %v2261 = vadd.f32 %v2017, %v2215
        %v2262 = vadd.f32 %v2018, %v2153
        %v2263 = vadd.f32 %v2019, %v2218
        %v2264 = vadd.f32 %v2020, %v2156
        %v2265 = vadd.f32 %v2021, %v2221
        %v2266 = vadd.f32 %v2022, %v2159
        %v2267 = vadd.f32 %v2023, %v2224
        %v2268 = vadd.f32 %v2024, %v2162
        %v2269 = vadd.f32 %v2025, %v2227
        %v2270 = vadd.f32 %v2026, %v2165
        %v2271 = vadd.f32 %v2027, %v2230
        %v2272 = vadd.f32 %v2028, %v2168
        %v2273 = vadd.f32 %v2029, %v2233
        %v2274 = vadd.f32 %v2030, %v2171
        %v2275 = vadd.f32 %v2031, %v2236
        %v2276 = vadd.f32 %v2032, %v2174
        %v2277 = vadd.f32 %v2033, %v2239
        %v2278 = vadd.f32 %v2034, %v2177
        %v2279 = vadd.f32 %v2035, %v2242
        %v2280 = vadd.f32 %v2036, %v2180
        %v2281 = vadd.f32 %v2037, %v2245
        %v2282 = vadd.f32 %v2038, %v2183
        %v2283 = vadd.f32 %v2039, %v2248
        %v2284 = vadd.f32 %v2040, %v2186
        %v2285 = vadd.f32 %v2041, %v2251
        %v2286 = vadd.f32 %v2042, %v2189
        %v2287 = vadd.f32 %v2043, %v2254
        %vm2288 = vcmask 1040384
        %v2289 = vrot.slane %v637, 7
        %v2290 = vrot.slane %v638, 7
        %v2291 = vsel %vm2288, %v2289, %v2290
        %v2292 = vrot.slane %v639, 7
        %v2293 = vsel %vm2288, %v2290, %v2292
        %v2294 = vrot.slane %v640, 7
        %v2295 = vrot.slane %v641, 7
        %v2296 = vsel %vm2288, %v2294, %v2295
        %v2297 = vrot.slane %v642, 7
        %v2298 = vsel %vm2288, %v2295, %v2297
        %v2299 = vrot.slane %v643, 7
        %v2300 = vrot.slane %v644, 7
        %v2301 = vsel %vm2288, %v2299, %v2300
        %v2302 = vrot.slane %v645, 7
        %v2303 = vsel %vm2288, %v2300, %v2302
        %v2304 = vrot.slane %v646, 7
        %v2305 = vrot.slane %v647, 7
        %v2306 = vsel %vm2288, %v2304, %v2305
        %v2307 = vrot.slane %v648, 7
        %v2308 = vsel %vm2288, %v2305, %v2307
        %v2309 = vrot.slane %v649, 7
        %v2310 = vrot.slane %v650, 7
        %v2311 = vsel %vm2288, %v2309, %v2310
        %v2312 = vrot.slane %v651, 7
        %v2313 = vsel %vm2288, %v2310, %v2312
        %v2314 = vrot.slane %v652, 7
        %v2315 = vrot.slane %v653, 7
        %v2316 = vsel %vm2288, %v2314, %v2315
        %v2317 = vrot.slane %v654, 7
        %v2318 = vsel %vm2288, %v2315, %v2317
        %v2319 = vrot.slane %v655, 7
        %v2320 = vrot.slane %v656, 7
        %v2321 = vsel %vm2288, %v2319, %v2320
        %v2322 = vrot.slane %v657, 7
        %v2323 = vsel %vm2288, %v2320, %v2322
        %v2324 = vrot.slane %v658, 7
        %v2325 = vrot.slane %v659, 7
        %v2326 = vsel %vm2288, %v2324, %v2325
        %v2327 = vrot.slane %v660, 7
        %v2328 = vsel %vm2288, %v2325, %v2327
        %s2329 = scalar_lea.vmem [#allocation5], 448
        %v2330 = vld [vmem:[%s2329] sm:$0xff]
        %v2331 = vld [vmem:[%s2329 + $0x8] sm:$0xff]
        %v2332 = vld [vmem:[%s2329 + $0x10] sm:$0xff]
        %v2333 = vld [vmem:[%s2329 + $0x18] sm:$0xff]
        %v2334 = vld [vmem:[%s2329 + $0x20] sm:$0xff]
        %v2335 = vld [vmem:[%s2329 + $0x28] sm:$0xff]
        %v2336 = vld [vmem:[%s2329 + $0x30] sm:$0xff]
        %v2337 = vld [vmem:[%s2329 + $0x38] sm:$0xff]
        %v2338 = vsel %vm743, %v2291, 0
        %v2340 = vsel %vm743, %v2293, 0
        %v2342 = vsel %vm743, %v2296, 0
        %v2344 = vsel %vm743, %v2298, 0
        %v2346 = vsel %vm743, %v2301, 0
        %v2348 = vsel %vm743, %v2303, 0
        %v2350 = vsel %vm743, %v2306, 0
        %v2352 = vsel %vm743, %v2308, 0
        %v2354 = vsel %vm743, %v2311, 0
        %v2356 = vsel %vm743, %v2313, 0
        %v2358 = vsel %vm743, %v2316, 0
        %v2360 = vsel %vm743, %v2318, 0
        %v2362 = vsel %vm743, %v2321, 0
        %v2364 = vsel %vm743, %v2323, 0
        %v2366 = vsel %vm743, %v2326, 0
        %v2368 = vsel %vm743, %v2328, 0
        %2370 = vmatpush.msra.mxu0 0.0
        %2371 = vmatpush.msra.mxu0 0.0
        %2372 = vmatpush.msra.mxu0 0.0
        %2373 = vmatpush.msra.mxu0 0.0
        %2374 = vmatpush.msra.mxu0 0.0
        %2375 = vmatpush.msra.mxu0 0.0
        %2376 = vmatpush.msra.mxu0 0.0
        %2377 = vmatpush.msra.mxu0 0.0
        %2378 = vmatpush.msra.mxu0 0.0
        %2379 = vmatpush.msra.mxu0 0.0
        %2380 = vmatpush.msra.mxu0 0.0
        %2381 = vmatpush.msra.mxu0 0.0
        %2382 = vmatpush.msra.mxu0 %v2336
        %2383 = vmatpush.msra.mxu0 %v2334
        %2384 = vmatpush.msra.mxu0 %v2332
        %2385 = vmatpush.msra.mxu0 %v2330
        %2386 = vmatmul.f32.gmra.mxu0 %v2338
        %v2387 = vpop.f32.mrf.mxu0
        %v2388 = vadd.f32 0.0, %v2387
        %2389 = vmatmul.f32.gmra.mxu0 %v2340
        %v2390 = vpop.f32.mrf.mxu0
        %v2391 = vadd.f32 0.0, %v2390
        %2392 = vmatmul.f32.gmra.mxu0 %v2342
        %v2393 = vpop.f32.mrf.mxu0
        %v2394 = vadd.f32 0.0, %v2393
        %2395 = vmatmul.f32.gmra.mxu0 %v2344
        %v2396 = vpop.f32.mrf.mxu0
        %v2397 = vadd.f32 0.0, %v2396
        %2398 = vmatmul.f32.gmra.mxu0 %v2346
        %v2399 = vpop.f32.mrf.mxu0
        %v2400 = vadd.f32 0.0, %v2399
        %2401 = vmatmul.f32.gmra.mxu0 %v2348
        %v2402 = vpop.f32.mrf.mxu0
        %v2403 = vadd.f32 0.0, %v2402
        %2404 = vmatmul.f32.gmra.mxu0 %v2350
        %v2405 = vpop.f32.mrf.mxu0
        %v2406 = vadd.f32 0.0, %v2405
        %2407 = vmatmul.f32.gmra.mxu0 %v2352
        %v2408 = vpop.f32.mrf.mxu0
        %v2409 = vadd.f32 0.0, %v2408
        %2410 = vmatmul.f32.gmra.mxu0 %v2354
        %v2411 = vpop.f32.mrf.mxu0
        %v2412 = vadd.f32 0.0, %v2411
        %2413 = vmatmul.f32.gmra.mxu0 %v2356
        %v2414 = vpop.f32.mrf.mxu0
        %v2415 = vadd.f32 0.0, %v2414
        %2416 = vmatmul.f32.gmra.mxu0 %v2358
        %v2417 = vpop.f32.mrf.mxu0
        %v2418 = vadd.f32 0.0, %v2417
        %2419 = vmatmul.f32.gmra.mxu0 %v2360
        %v2420 = vpop.f32.mrf.mxu0
        %v2421 = vadd.f32 0.0, %v2420
        %2422 = vmatmul.f32.gmra.mxu0 %v2362
        %v2423 = vpop.f32.mrf.mxu0
        %v2424 = vadd.f32 0.0, %v2423
        %2425 = vmatmul.f32.gmra.mxu0 %v2364
        %v2426 = vpop.f32.mrf.mxu0
        %v2427 = vadd.f32 0.0, %v2426
        %2428 = vmatmul.f32.gmra.mxu0 %v2366
        %v2429 = vpop.f32.mrf.mxu0
        %v2430 = vadd.f32 0.0, %v2429
        %2431 = vmatmul.f32.gmra.mxu0 %v2368
        %v2432 = vpop.f32.mrf.mxu0
        %v2433 = vadd.f32 0.0, %v2432
        %2434 = vdwg.mxu0
        %2435 = vmatpush.msra.mxu0 0.0
        %2436 = vmatpush.msra.mxu0 0.0
        %2437 = vmatpush.msra.mxu0 0.0
        %2438 = vmatpush.msra.mxu0 0.0
        %2439 = vmatpush.msra.mxu0 0.0
        %2440 = vmatpush.msra.mxu0 0.0
        %2441 = vmatpush.msra.mxu0 0.0
        %2442 = vmatpush.msra.mxu0 0.0
        %2443 = vmatpush.msra.mxu0 0.0
        %2444 = vmatpush.msra.mxu0 0.0
        %2445 = vmatpush.msra.mxu0 0.0
        %2446 = vmatpush.msra.mxu0 0.0
        %2447 = vmatpush.msra.mxu0 %v2337
        %2448 = vmatpush.msra.mxu0 %v2335
        %2449 = vmatpush.msra.mxu0 %v2333
        %2450 = vmatpush.msra.mxu0 %v2331
        %2451 = vmatmul.f32.gmra.mxu0 %v2338
        %v2452 = vpop.f32.mrf.mxu0
        %v2453 = vadd.f32 0.0, %v2452
        %2454 = vmatmul.f32.gmra.mxu0 %v2340
        %v2455 = vpop.f32.mrf.mxu0
        %v2456 = vadd.f32 0.0, %v2455
        %2457 = vmatmul.f32.gmra.mxu0 %v2342
        %v2458 = vpop.f32.mrf.mxu0
        %v2459 = vadd.f32 0.0, %v2458
        %2460 = vmatmul.f32.gmra.mxu0 %v2344
        %v2461 = vpop.f32.mrf.mxu0
        %v2462 = vadd.f32 0.0, %v2461
        %2463 = vmatmul.f32.gmra.mxu0 %v2346
        %v2464 = vpop.f32.mrf.mxu0
        %v2465 = vadd.f32 0.0, %v2464
        %2466 = vmatmul.f32.gmra.mxu0 %v2348
        %v2467 = vpop.f32.mrf.mxu0
        %v2468 = vadd.f32 0.0, %v2467
        %2469 = vmatmul.f32.gmra.mxu0 %v2350
        %v2470 = vpop.f32.mrf.mxu0
        %v2471 = vadd.f32 0.0, %v2470
        %2472 = vmatmul.f32.gmra.mxu0 %v2352
        %v2473 = vpop.f32.mrf.mxu0
        %v2474 = vadd.f32 0.0, %v2473
        %2475 = vmatmul.f32.gmra.mxu0 %v2354
        %v2476 = vpop.f32.mrf.mxu0
        %v2477 = vadd.f32 0.0, %v2476
        %2478 = vmatmul.f32.gmra.mxu0 %v2356
        %v2479 = vpop.f32.mrf.mxu0
        %v2480 = vadd.f32 0.0, %v2479
        %2481 = vmatmul.f32.gmra.mxu0 %v2358
        %v2482 = vpop.f32.mrf.mxu0
        %v2483 = vadd.f32 0.0, %v2482
        %2484 = vmatmul.f32.gmra.mxu0 %v2360
        %v2485 = vpop.f32.mrf.mxu0
        %v2486 = vadd.f32 0.0, %v2485
        %2487 = vmatmul.f32.gmra.mxu0 %v2362
        %v2488 = vpop.f32.mrf.mxu0
        %v2489 = vadd.f32 0.0, %v2488
        %2490 = vmatmul.f32.gmra.mxu0 %v2364
        %v2491 = vpop.f32.mrf.mxu0
        %v2492 = vadd.f32 0.0, %v2491
        %2493 = vmatmul.f32.gmra.mxu0 %v2366
        %v2494 = vpop.f32.mrf.mxu0
        %v2495 = vadd.f32 0.0, %v2494
        %2496 = vmatmul.f32.gmra.mxu0 %v2368
        %v2497 = vpop.f32.mrf.mxu0
        %v2498 = vadd.f32 0.0, %v2497
        %2499 = vdwg.mxu0
        %v2500 = vadd.f32 %v2256, %v2388
        %v2501 = vadd.f32 %v2257, %v2453
        %v2502 = vadd.f32 %v2258, %v2391
        %v2503 = vadd.f32 %v2259, %v2456
        %v2504 = vadd.f32 %v2260, %v2394
        %v2505 = vadd.f32 %v2261, %v2459
        %v2506 = vadd.f32 %v2262, %v2397
        %v2507 = vadd.f32 %v2263, %v2462
        %v2508 = vadd.f32 %v2264, %v2400
        %v2509 = vadd.f32 %v2265, %v2465
        %v2510 = vadd.f32 %v2266, %v2403
        %v2511 = vadd.f32 %v2267, %v2468
        %v2512 = vadd.f32 %v2268, %v2406
        %v2513 = vadd.f32 %v2269, %v2471
        %v2514 = vadd.f32 %v2270, %v2409
        %v2515 = vadd.f32 %v2271, %v2474
        %v2516 = vadd.f32 %v2272, %v2412
        %v2517 = vadd.f32 %v2273, %v2477
        %v2518 = vadd.f32 %v2274, %v2415
        %v2519 = vadd.f32 %v2275, %v2480
        %v2520 = vadd.f32 %v2276, %v2418
        %v2521 = vadd.f32 %v2277, %v2483
        %v2522 = vadd.f32 %v2278, %v2421
        %v2523 = vadd.f32 %v2279, %v2486
        %v2524 = vadd.f32 %v2280, %v2424
        %v2525 = vadd.f32 %v2281, %v2489
        %v2526 = vadd.f32 %v2282, %v2427
        %v2527 = vadd.f32 %v2283, %v2492
        %v2528 = vadd.f32 %v2284, %v2430
        %v2529 = vadd.f32 %v2285, %v2495
        %v2530 = vadd.f32 %v2286, %v2433
        %v2531 = vadd.f32 %v2287, %v2498
        %s2532 = scalar_lea.vmem [#allocation5], 512
        %v2533 = vld [vmem:[%s2532] sm:$0xff]
        %v2534 = vld [vmem:[%s2532 + $0x8] sm:$0xff]
        %v2535 = vld [vmem:[%s2532 + $0x10] sm:$0xff]
        %v2536 = vld [vmem:[%s2532 + $0x18] sm:$0xff]
        %v2537 = vld [vmem:[%s2532 + $0x20] sm:$0xff]
        %v2538 = vld [vmem:[%s2532 + $0x28] sm:$0xff]
        %v2539 = vld [vmem:[%s2532 + $0x30] sm:$0xff]
        %v2540 = vld [vmem:[%s2532 + $0x38] sm:$0xff]
        %v2541 = vsel %vm743, %v639, 0
        %v2543 = vsel %vm743, %v642, 0
        %v2545 = vsel %vm743, %v645, 0
        %v2547 = vsel %vm743, %v648, 0
        %v2549 = vsel %vm743, %v651, 0
        %v2551 = vsel %vm743, %v654, 0
        %v2553 = vsel %vm743, %v657, 0
        %v2555 = vsel %vm743, %v660, 0
        %2557 = vmatpush.msra.mxu0 0.0
        %2558 = vmatpush.msra.mxu0 0.0
        %2559 = vmatpush.msra.mxu0 0.0
        %2560 = vmatpush.msra.mxu0 0.0
        %2561 = vmatpush.msra.mxu0 0.0
        %2562 = vmatpush.msra.mxu0 0.0
        %2563 = vmatpush.msra.mxu0 0.0
        %2564 = vmatpush.msra.mxu0 0.0
        %2565 = vmatpush.msra.mxu0 0.0
        %2566 = vmatpush.msra.mxu0 0.0
        %2567 = vmatpush.msra.mxu0 0.0
        %2568 = vmatpush.msra.mxu0 0.0
        %2569 = vmatpush.msra.mxu0 %v2539
        %2570 = vmatpush.msra.mxu0 %v2537
        %2571 = vmatpush.msra.mxu0 %v2535
        %2572 = vmatpush.msra.mxu0 %v2533
        %2573 = vmatmul.f32.gmra.mxu0 %v908
        %v2574 = vpop.f32.mrf.mxu0
        %v2575 = vadd.f32 0.0, %v2574
        %2576 = vmatmul.f32.gmra.mxu0 %v2541
        %v2577 = vpop.f32.mrf.mxu0
        %v2578 = vadd.f32 0.0, %v2577
        %2579 = vmatmul.f32.gmra.mxu0 %v912
        %v2580 = vpop.f32.mrf.mxu0
        %v2581 = vadd.f32 0.0, %v2580
        %2582 = vmatmul.f32.gmra.mxu0 %v2543
        %v2583 = vpop.f32.mrf.mxu0
        %v2584 = vadd.f32 0.0, %v2583
        %2585 = vmatmul.f32.gmra.mxu0 %v916
        %v2586 = vpop.f32.mrf.mxu0
        %v2587 = vadd.f32 0.0, %v2586
        %2588 = vmatmul.f32.gmra.mxu0 %v2545
        %v2589 = vpop.f32.mrf.mxu0
        %v2590 = vadd.f32 0.0, %v2589
        %2591 = vmatmul.f32.gmra.mxu0 %v920
        %v2592 = vpop.f32.mrf.mxu0
        %v2593 = vadd.f32 0.0, %v2592
        %2594 = vmatmul.f32.gmra.mxu0 %v2547
        %v2595 = vpop.f32.mrf.mxu0
        %v2596 = vadd.f32 0.0, %v2595
        %2597 = vmatmul.f32.gmra.mxu0 %v924
        %v2598 = vpop.f32.mrf.mxu0
        %v2599 = vadd.f32 0.0, %v2598
        %2600 = vmatmul.f32.gmra.mxu0 %v2549
        %v2601 = vpop.f32.mrf.mxu0
        %v2602 = vadd.f32 0.0, %v2601
        %2603 = vmatmul.f32.gmra.mxu0 %v928
        %v2604 = vpop.f32.mrf.mxu0
        %v2605 = vadd.f32 0.0, %v2604
        %2606 = vmatmul.f32.gmra.mxu0 %v2551
        %v2607 = vpop.f32.mrf.mxu0
        %v2608 = vadd.f32 0.0, %v2607
        %2609 = vmatmul.f32.gmra.mxu0 %v932
        %v2610 = vpop.f32.mrf.mxu0
        %v2611 = vadd.f32 0.0, %v2610
        %2612 = vmatmul.f32.gmra.mxu0 %v2553
        %v2613 = vpop.f32.mrf.mxu0
        %v2614 = vadd.f32 0.0, %v2613
        %2615 = vmatmul.f32.gmra.mxu0 %v936
        %v2616 = vpop.f32.mrf.mxu0
        %v2617 = vadd.f32 0.0, %v2616
        %2618 = vmatmul.f32.gmra.mxu0 %v2555
        %v2619 = vpop.f32.mrf.mxu0
        %v2620 = vadd.f32 0.0, %v2619
        %2621 = vdwg.mxu0
        %2622 = vmatpush.msra.mxu0 0.0
        %2623 = vmatpush.msra.mxu0 0.0
        %2624 = vmatpush.msra.mxu0 0.0
        %2625 = vmatpush.msra.mxu0 0.0
        %2626 = vmatpush.msra.mxu0 0.0
        %2627 = vmatpush.msra.mxu0 0.0
        %2628 = vmatpush.msra.mxu0 0.0
        %2629 = vmatpush.msra.mxu0 0.0
        %2630 = vmatpush.msra.mxu0 0.0
        %2631 = vmatpush.msra.mxu0 0.0
        %2632 = vmatpush.msra.mxu0 0.0
        %2633 = vmatpush.msra.mxu0 0.0
        %2634 = vmatpush.msra.mxu0 %v2540
        %2635 = vmatpush.msra.mxu0 %v2538
        %2636 = vmatpush.msra.mxu0 %v2536
        %2637 = vmatpush.msra.mxu0 %v2534
        %2638 = vmatmul.f32.gmra.mxu0 %v908
        %v2639 = vpop.f32.mrf.mxu0
        %v2640 = vadd.f32 0.0, %v2639
        %2641 = vmatmul.f32.gmra.mxu0 %v2541
        %v2642 = vpop.f32.mrf.mxu0
        %v2643 = vadd.f32 0.0, %v2642
        %2644 = vmatmul.f32.gmra.mxu0 %v912
        %v2645 = vpop.f32.mrf.mxu0
        %v2646 = vadd.f32 0.0, %v2645
        %2647 = vmatmul.f32.gmra.mxu0 %v2543
        %v2648 = vpop.f32.mrf.mxu0
        %v2649 = vadd.f32 0.0, %v2648
        %2650 = vmatmul.f32.gmra.mxu0 %v916
        %v2651 = vpop.f32.mrf.mxu0
        %v2652 = vadd.f32 0.0, %v2651
        %2653 = vmatmul.f32.gmra.mxu0 %v2545
        %v2654 = vpop.f32.mrf.mxu0
        %v2655 = vadd.f32 0.0, %v2654
        %2656 = vmatmul.f32.gmra.mxu0 %v920
        %v2657 = vpop.f32.mrf.mxu0
        %v2658 = vadd.f32 0.0, %v2657
        %2659 = vmatmul.f32.gmra.mxu0 %v2547
        %v2660 = vpop.f32.mrf.mxu0
        %v2661 = vadd.f32 0.0, %v2660
        %2662 = vmatmul.f32.gmra.mxu0 %v924
        %v2663 = vpop.f32.mrf.mxu0
        %v2664 = vadd.f32 0.0, %v2663
        %2665 = vmatmul.f32.gmra.mxu0 %v2549
        %v2666 = vpop.f32.mrf.mxu0
        %v2667 = vadd.f32 0.0, %v2666
        %2668 = vmatmul.f32.gmra.mxu0 %v928
        %v2669 = vpop.f32.mrf.mxu0
        %v2670 = vadd.f32 0.0, %v2669
        %2671 = vmatmul.f32.gmra.mxu0 %v2551
        %v2672 = vpop.f32.mrf.mxu0
        %v2673 = vadd.f32 0.0, %v2672
        %2674 = vmatmul.f32.gmra.mxu0 %v932
        %v2675 = vpop.f32.mrf.mxu0
        %v2676 = vadd.f32 0.0, %v2675
        %2677 = vmatmul.f32.gmra.mxu0 %v2553
        %v2678 = vpop.f32.mrf.mxu0
        %v2679 = vadd.f32 0.0, %v2678
        %2680 = vmatmul.f32.gmra.mxu0 %v936
        %v2681 = vpop.f32.mrf.mxu0
        %v2682 = vadd.f32 0.0, %v2681
        %2683 = vmatmul.f32.gmra.mxu0 %v2555
        %v2684 = vpop.f32.mrf.mxu0
        %v2685 = vadd.f32 0.0, %v2684
        %2686 = vdwg.mxu0
        %v2687 = vadd.f32 %v2500, %v2575
        %v2688 = vadd.f32 %v2501, %v2640
        %v2689 = vadd.f32 %v2502, %v2578
        %v2690 = vadd.f32 %v2503, %v2643
        %v2691 = vadd.f32 %v2504, %v2581
        %v2692 = vadd.f32 %v2505, %v2646
        %v2693 = vadd.f32 %v2506, %v2584
        %v2694 = vadd.f32 %v2507, %v2649
        %v2695 = vadd.f32 %v2508, %v2587
        %v2696 = vadd.f32 %v2509, %v2652
        %v2697 = vadd.f32 %v2510, %v2590
        %v2698 = vadd.f32 %v2511, %v2655
        %v2699 = vadd.f32 %v2512, %v2593
        %v2700 = vadd.f32 %v2513, %v2658
        %v2701 = vadd.f32 %v2514, %v2596
        %v2702 = vadd.f32 %v2515, %v2661
        %v2703 = vadd.f32 %v2516, %v2599
        %v2704 = vadd.f32 %v2517, %v2664
        %v2705 = vadd.f32 %v2518, %v2602
        %v2706 = vadd.f32 %v2519, %v2667
        %v2707 = vadd.f32 %v2520, %v2605
        %v2708 = vadd.f32 %v2521, %v2670
        %v2709 = vadd.f32 %v2522, %v2608
        %v2710 = vadd.f32 %v2523, %v2673
        %v2711 = vadd.f32 %v2524, %v2611
        %v2712 = vadd.f32 %v2525, %v2676
        %v2713 = vadd.f32 %v2526, %v2614
        %v2714 = vadd.f32 %v2527, %v2679
        %v2715 = vadd.f32 %v2528, %v2617
        %v2716 = vadd.f32 %v2529, %v2682
        %v2717 = vadd.f32 %v2530, %v2620
        %v2718 = vadd.f32 %v2531, %v2685
        %v2719 = vld [vmem:[%s2] sm:$0x1]
        %v2721 = vperm.slane %v2719, 0
        %v2723 = vadd.f32 %v2687, %v2721
        %v2724 = vadd.f32 %v2689, %v2721
        %v2725 = vadd.f32 %v2691, %v2721
        %v2726 = vadd.f32 %v2693, %v2721
        %v2727 = vadd.f32 %v2695, %v2721
        %v2728 = vadd.f32 %v2697, %v2721
        %v2729 = vadd.f32 %v2699, %v2721
        %v2730 = vadd.f32 %v2701, %v2721
        %v2731 = vadd.f32 %v2703, %v2721
        %v2732 = vadd.f32 %v2705, %v2721
        %v2733 = vadd.f32 %v2707, %v2721
        %v2734 = vadd.f32 %v2709, %v2721
        %v2735 = vadd.f32 %v2711, %v2721
        %v2736 = vadd.f32 %v2713, %v2721
        %v2737 = vadd.f32 %v2715, %v2721
        %v2738 = vadd.f32 %v2717, %v2721
        %v2739 = vld [vmem:[%s3] sm:$0x1]
        %v2741 = vperm.slane %v2739, 0
        %v2743 = vadd.f32 %v2688, %v2741
        %v2744 = vadd.f32 %v2690, %v2741
        %v2745 = vadd.f32 %v2692, %v2741
        %v2746 = vadd.f32 %v2694, %v2741
        %v2747 = vadd.f32 %v2696, %v2741
        %v2748 = vadd.f32 %v2698, %v2741
        %v2749 = vadd.f32 %v2700, %v2741
        %v2750 = vadd.f32 %v2702, %v2741
        %v2751 = vadd.f32 %v2704, %v2741
        %v2752 = vadd.f32 %v2706, %v2741
        %v2753 = vadd.f32 %v2708, %v2741
        %v2754 = vadd.f32 %v2710, %v2741
        %v2755 = vadd.f32 %v2712, %v2741
        %v2756 = vadd.f32 %v2714, %v2741
        %v2757 = vadd.f32 %v2716, %v2741
        %v2758 = vadd.f32 %v2718, %v2741
        %v2759 = vsel %vm743, %v2743, -inf
        %v2760 = vsel %vm743, %v2744, -inf
        %v2761 = vmax.f32 %v2759, %v2760
        %v2762 = vrot.slane %v2761, 4
        %v2763 = vmax.f32 %v2761, %v2762
        %v2764 = vrot.slane %v2763, 2
        %v2765 = vmax.f32 %v2763, %v2764
        %v2766 = vrot.slane %v2765, 1
        %v2767 = vmax.f32 %v2765, %v2766
        %v2768 = vsel %vm743, %v2745, -inf
        %v2769 = vsel %vm743, %v2746, -inf
        %v2770 = vmax.f32 %v2768, %v2769
        %v2771 = vrot.slane %v2770, 4
        %v2772 = vmax.f32 %v2770, %v2771
        %v2773 = vrot.slane %v2772, 2
        %v2774 = vmax.f32 %v2772, %v2773
        %v2775 = vrot.slane %v2774, 1
        %v2776 = vmax.f32 %v2774, %v2775
        %v2777 = vsel %vm743, %v2747, -inf
        %v2778 = vsel %vm743, %v2748, -inf
        %v2779 = vmax.f32 %v2777, %v2778
        %v2780 = vrot.slane %v2779, 4
        %v2781 = vmax.f32 %v2779, %v2780
        %v2782 = vrot.slane %v2781, 2
        %v2783 = vmax.f32 %v2781, %v2782
        %v2784 = vrot.slane %v2783, 1
        %v2785 = vmax.f32 %v2783, %v2784
        %v2786 = vsel %vm743, %v2749, -inf
        %v2787 = vsel %vm743, %v2750, -inf
        %v2788 = vmax.f32 %v2786, %v2787
        %v2789 = vrot.slane %v2788, 4
        %v2790 = vmax.f32 %v2788, %v2789
        %v2791 = vrot.slane %v2790, 2
        %v2792 = vmax.f32 %v2790, %v2791
        %v2793 = vrot.slane %v2792, 1
        %v2794 = vmax.f32 %v2792, %v2793
        %v2795 = vsel %vm743, %v2751, -inf
        %v2796 = vsel %vm743, %v2752, -inf
        %v2797 = vmax.f32 %v2795, %v2796
        %v2798 = vrot.slane %v2797, 4
        %v2799 = vmax.f32 %v2797, %v2798
        %v2800 = vrot.slane %v2799, 2
        %v2801 = vmax.f32 %v2799, %v2800
        %v2802 = vrot.slane %v2801, 1
        %v2803 = vmax.f32 %v2801, %v2802
        %v2804 = vsel %vm743, %v2753, -inf
        %v2805 = vsel %vm743, %v2754, -inf
        %v2806 = vmax.f32 %v2804, %v2805
        %v2807 = vrot.slane %v2806, 4
        %v2808 = vmax.f32 %v2806, %v2807
        %v2809 = vrot.slane %v2808, 2
        %v2810 = vmax.f32 %v2808, %v2809
        %v2811 = vrot.slane %v2810, 1
        %v2812 = vmax.f32 %v2810, %v2811
        %v2813 = vsel %vm743, %v2755, -inf
        %v2814 = vsel %vm743, %v2756, -inf
        %v2815 = vmax.f32 %v2813, %v2814
        %v2816 = vrot.slane %v2815, 4
        %v2817 = vmax.f32 %v2815, %v2816
        %v2818 = vrot.slane %v2817, 2
        %v2819 = vmax.f32 %v2817, %v2818
        %v2820 = vrot.slane %v2819, 1
        %v2821 = vmax.f32 %v2819, %v2820
        %v2822 = vsel %vm743, %v2757, -inf
        %v2823 = vsel %vm743, %v2758, -inf
        %v2824 = vmax.f32 %v2822, %v2823
        %v2825 = vrot.slane %v2824, 4
        %v2826 = vmax.f32 %v2824, %v2825
        %v2827 = vrot.slane %v2826, 2
        %v2828 = vmax.f32 %v2826, %v2827
        %v2829 = vrot.slane %v2828, 1
        %v2830 = vmax.f32 %v2828, %v2829
        %v2831 = vsub.f32 %v2743, %v2767
        %v2832 = vsub.f32 %v2744, %v2767
        %v2833 = vsub.f32 %v2745, %v2776
        %v2834 = vsub.f32 %v2746, %v2776
        %v2835 = vsub.f32 %v2747, %v2785
        %v2836 = vsub.f32 %v2748, %v2785
        %v2837 = vsub.f32 %v2749, %v2794
        %v2838 = vsub.f32 %v2750, %v2794
        %v2839 = vsub.f32 %v2751, %v2803
        %v2840 = vsub.f32 %v2752, %v2803
        %v2841 = vsub.f32 %v2753, %v2812
        %v2842 = vsub.f32 %v2754, %v2812
        %v2843 = vsub.f32 %v2755, %v2821
        %v2844 = vsub.f32 %v2756, %v2821
        %v2845 = vsub.f32 %v2757, %v2830
        %v2846 = vsub.f32 %v2758, %v2830
        %v2847 = vmul.f32 %v2831, 1.442695
        %v2848 = vpow.pop %v2847
        %v2849 = vmul.f32 %v2832, 1.442695
        %v2850 = vpow.pop %v2849
        %v2851 = vmul.f32 %v2833, 1.442695
        %v2852 = vpow.pop %v2851
        %v2853 = vmul.f32 %v2834, 1.442695
        %v2854 = vpow.pop %v2853
        %v2855 = vmul.f32 %v2835, 1.442695
        %v2856 = vpow.pop %v2855
        %v2857 = vmul.f32 %v2836, 1.442695
        %v2858 = vpow.pop %v2857
        %v2859 = vmul.f32 %v2837, 1.442695
        %v2860 = vpow.pop %v2859
        %v2861 = vmul.f32 %v2838, 1.442695
        %v2862 = vpow.pop %v2861
        %v2863 = vmul.f32 %v2839, 1.442695
        %v2864 = vpow.pop %v2863
        %v2865 = vmul.f32 %v2840, 1.442695
        %v2866 = vpow.pop %v2865
        %v2867 = vmul.f32 %v2841, 1.442695
        %v2868 = vpow.pop %v2867
        %v2869 = vmul.f32 %v2842, 1.442695
        %v2870 = vpow.pop %v2869
        %v2871 = vmul.f32 %v2843, 1.442695
        %v2872 = vpow.pop %v2871
        %v2873 = vmul.f32 %v2844, 1.442695
        %v2874 = vpow.pop %v2873
        %v2875 = vmul.f32 %v2845, 1.442695
        %v2876 = vpow.pop %v2875
        %v2877 = vmul.f32 %v2846, 1.442695
        %v2878 = vpow.pop %v2877
        %v2879 = vmul.f32 %v2723, %v2848
        %v2880 = vmul.f32 %v2724, %v2850
        %v2881 = vmul.f32 %v2725, %v2852
        %v2882 = vmul.f32 %v2726, %v2854
        %v2883 = vmul.f32 %v2727, %v2856
        %v2884 = vmul.f32 %v2728, %v2858
        %v2885 = vmul.f32 %v2729, %v2860
        %v2886 = vmul.f32 %v2730, %v2862
        %v2887 = vmul.f32 %v2731, %v2864
        %v2888 = vmul.f32 %v2732, %v2866
        %v2889 = vmul.f32 %v2733, %v2868
        %v2890 = vmul.f32 %v2734, %v2870
        %v2891 = vmul.f32 %v2735, %v2872
        %v2892 = vmul.f32 %v2736, %v2874
        %v2893 = vmul.f32 %v2737, %v2876
        %v2894 = vmul.f32 %v2738, %v2878
        %v2895 = vsel %vm743, %v2879, 0.0
        %v2896 = vsel %vm743, %v2880, 0.0
        %v2897 = vadd.f32 %v2895, %v2896
        %v2898 = vrot.slane %v2897, 4
        %v2899 = vadd.f32 %v2897, %v2898
        %v2900 = vrot.slane %v2899, 2
        %v2901 = vadd.f32 %v2899, %v2900
        %v2902 = vrot.slane %v2901, 1
        %v2903 = vadd.f32 %v2901, %v2902
        %v2904 = vsel %vm743, %v2881, 0.0
        %v2905 = vsel %vm743, %v2882, 0.0
        %v2906 = vadd.f32 %v2904, %v2905
        %v2907 = vrot.slane %v2906, 4
        %v2908 = vadd.f32 %v2906, %v2907
        %v2909 = vrot.slane %v2908, 2
        %v2910 = vadd.f32 %v2908, %v2909
        %v2911 = vrot.slane %v2910, 1
        %v2912 = vadd.f32 %v2910, %v2911
        %v2913 = vsel %vm743, %v2883, 0.0
        %v2914 = vsel %vm743, %v2884, 0.0
        %v2915 = vadd.f32 %v2913, %v2914
        %v2916 = vrot.slane %v2915, 4
        %v2917 = vadd.f32 %v2915, %v2916
        %v2918 = vrot.slane %v2917, 2
        %v2919 = vadd.f32 %v2917, %v2918
        %v2920 = vrot.slane %v2919, 1
        %v2921 = vadd.f32 %v2919, %v2920
        %v2922 = vsel %vm743, %v2885, 0.0
        %v2923 = vsel %vm743, %v2886, 0.0
        %v2924 = vadd.f32 %v2922, %v2923
        %v2925 = vrot.slane %v2924, 4
        %v2926 = vadd.f32 %v2924, %v2925
        %v2927 = vrot.slane %v2926, 2
        %v2928 = vadd.f32 %v2926, %v2927
        %v2929 = vrot.slane %v2928, 1
        %v2930 = vadd.f32 %v2928, %v2929
        %v2931 = vsel %vm743, %v2887, 0.0
        %v2932 = vsel %vm743, %v2888, 0.0
        %v2933 = vadd.f32 %v2931, %v2932
        %v2934 = vrot.slane %v2933, 4
        %v2935 = vadd.f32 %v2933, %v2934
        %v2936 = vrot.slane %v2935, 2
        %v2937 = vadd.f32 %v2935, %v2936
        %v2938 = vrot.slane %v2937, 1
        %v2939 = vadd.f32 %v2937, %v2938
        %v2940 = vsel %vm743, %v2889, 0.0
        %v2941 = vsel %vm743, %v2890, 0.0
        %v2942 = vadd.f32 %v2940, %v2941
        %v2943 = vrot.slane %v2942, 4
        %v2944 = vadd.f32 %v2942, %v2943
        %v2945 = vrot.slane %v2944, 2
        %v2946 = vadd.f32 %v2944, %v2945
        %v2947 = vrot.slane %v2946, 1
        %v2948 = vadd.f32 %v2946, %v2947
        %v2949 = vsel %vm743, %v2891, 0.0
        %v2950 = vsel %vm743, %v2892, 0.0
        %v2951 = vadd.f32 %v2949, %v2950
        %v2952 = vrot.slane %v2951, 4
        %v2953 = vadd.f32 %v2951, %v2952
        %v2954 = vrot.slane %v2953, 2
        %v2955 = vadd.f32 %v2953, %v2954
        %v2956 = vrot.slane %v2955, 1
        %v2957 = vadd.f32 %v2955, %v2956
        %v2958 = vsel %vm743, %v2893, 0.0
        %v2959 = vsel %vm743, %v2894, 0.0
        %v2960 = vadd.f32 %v2958, %v2959
        %v2961 = vrot.slane %v2960, 4
        %v2962 = vadd.f32 %v2960, %v2961
        %v2963 = vrot.slane %v2962, 2
        %v2964 = vadd.f32 %v2962, %v2963
        %v2965 = vrot.slane %v2964, 1
        %v2966 = vadd.f32 %v2964, %v2965
        %v2967 = vsel %vm743, %v2848, 0.0
        %v2968 = vsel %vm743, %v2850, 0.0
        %v2969 = vadd.f32 %v2967, %v2968
        %v2970 = vrot.slane %v2969, 4
        %v2971 = vadd.f32 %v2969, %v2970
        %v2972 = vrot.slane %v2971, 2
        %v2973 = vadd.f32 %v2971, %v2972
        %v2974 = vrot.slane %v2973, 1
        %v2975 = vadd.f32 %v2973, %v2974
        %v2976 = vsel %vm743, %v2852, 0.0
        %v2977 = vsel %vm743, %v2854, 0.0
        %v2978 = vadd.f32 %v2976, %v2977
        %v2979 = vrot.slane %v2978, 4
        %v2980 = vadd.f32 %v2978, %v2979
        %v2981 = vrot.slane %v2980, 2
        %v2982 = vadd.f32 %v2980, %v2981
        %v2983 = vrot.slane %v2982, 1
        %v2984 = vadd.f32 %v2982, %v2983
        %v2985 = vsel %vm743, %v2856, 0.0
        %v2986 = vsel %vm743, %v2858, 0.0
        %v2987 = vadd.f32 %v2985, %v2986
        %v2988 = vrot.slane %v2987, 4
        %v2989 = vadd.f32 %v2987, %v2988
        %v2990 = vrot.slane %v2989, 2
        %v2991 = vadd.f32 %v2989, %v2990
        %v2992 = vrot.slane %v2991, 1
        %v2993 = vadd.f32 %v2991, %v2992
        %v2994 = vsel %vm743, %v2860, 0.0
        %v2995 = vsel %vm743, %v2862, 0.0
        %v2996 = vadd.f32 %v2994, %v2995
        %v2997 = vrot.slane %v2996, 4
        %v2998 = vadd.f32 %v2996, %v2997
        %v2999 = vrot.slane %v2998, 2
        %v3000 = vadd.f32 %v2998, %v2999
        %v3001 = vrot.slane %v3000, 1
        %v3002 = vadd.f32 %v3000, %v3001
        %v3003 = vsel %vm743, %v2864, 0.0
        %v3004 = vsel %vm743, %v2866, 0.0
        %v3005 = vadd.f32 %v3003, %v3004
        %v3006 = vrot.slane %v3005, 4
        %v3007 = vadd.f32 %v3005, %v3006
        %v3008 = vrot.slane %v3007, 2
        %v3009 = vadd.f32 %v3007, %v3008
        %v3010 = vrot.slane %v3009, 1
        %v3011 = vadd.f32 %v3009, %v3010
        %v3012 = vsel %vm743, %v2868, 0.0
        %v3013 = vsel %vm743, %v2870, 0.0
        %v3014 = vadd.f32 %v3012, %v3013
        %v3015 = vrot.slane %v3014, 4
        %v3016 = vadd.f32 %v3014, %v3015
        %v3017 = vrot.slane %v3016, 2
        %v3018 = vadd.f32 %v3016, %v3017
        %v3019 = vrot.slane %v3018, 1
        %v3020 = vadd.f32 %v3018, %v3019
        %v3021 = vsel %vm743, %v2872, 0.0
        %v3022 = vsel %vm743, %v2874, 0.0
        %v3023 = vadd.f32 %v3021, %v3022
        %v3024 = vrot.slane %v3023, 4
        %v3025 = vadd.f32 %v3023, %v3024
        %v3026 = vrot.slane %v3025, 2
        %v3027 = vadd.f32 %v3025, %v3026
        %v3028 = vrot.slane %v3027, 1
        %v3029 = vadd.f32 %v3027, %v3028
        %v3030 = vsel %vm743, %v2876, 0.0
        %v3031 = vsel %vm743, %v2878, 0.0
        %v3032 = vadd.f32 %v3030, %v3031
        %v3033 = vrot.slane %v3032, 4
        %v3034 = vadd.f32 %v3032, %v3033
        %v3035 = vrot.slane %v3034, 2
        %v3036 = vadd.f32 %v3034, %v3035
        %v3037 = vrot.slane %v3036, 1
        %v3038 = vadd.f32 %v3036, %v3037
        %v3039 = vrcp.pop %v2975
        %v3040 = vrcp.pop %v2984
        %v3041 = vrcp.pop %v2993
        %v3042 = vrcp.pop %v3002
        %v3043 = vrcp.pop %v3011
        %v3044 = vrcp.pop %v3020
        %v3045 = vrcp.pop %v3029
        %v3046 = vrcp.pop %v3038
        %v3047 = vmul.f32 %v2903, %v3039
        %v3048 = vmul.f32 %v2912, %v3040
        %v3049 = vmul.f32 %v2921, %v3041
        %v3050 = vmul.f32 %v2930, %v3042
        %v3051 = vmul.f32 %v2939, %v3043
        %v3052 = vmul.f32 %v2948, %v3044
        %v3053 = vmul.f32 %v2957, %v3045
        %v3054 = vmul.f32 %v2966, %v3046
        %v3055 = vsel %vm743, %v2723, -inf
        %v3056 = vsel %vm743, %v2724, -inf
        %v3057 = vmax.f32 %v3055, %v3056
        %v3058 = vrot.slane %v3057, 4
        %v3059 = vmax.f32 %v3057, %v3058
        %v3060 = vrot.slane %v3059, 2
        %v3061 = vmax.f32 %v3059, %v3060
        %v3062 = vrot.slane %v3061, 1
        %v3063 = vmax.f32 %v3061, %v3062
        %v3064 = vsel %vm743, %v2725, -inf
        %v3065 = vsel %vm743, %v2726, -inf
        %v3066 = vmax.f32 %v3064, %v3065
        %v3067 = vrot.slane %v3066, 4
        %v3068 = vmax.f32 %v3066, %v3067
        %v3069 = vrot.slane %v3068, 2
        %v3070 = vmax.f32 %v3068, %v3069
        %v3071 = vrot.slane %v3070, 1
        %v3072 = vmax.f32 %v3070, %v3071
        %v3073 = vsel %vm743, %v2727, -inf
        %v3074 = vsel %vm743, %v2728, -inf
        %v3075 = vmax.f32 %v3073, %v3074
        %v3076 = vrot.slane %v3075, 4
        %v3077 = vmax.f32 %v3075, %v3076
        %v3078 = vrot.slane %v3077, 2
        %v3079 = vmax.f32 %v3077, %v3078
        %v3080 = vrot.slane %v3079, 1
        %v3081 = vmax.f32 %v3079, %v3080
        %v3082 = vsel %vm743, %v2729, -inf
        %v3083 = vsel %vm743, %v2730, -inf
        %v3084 = vmax.f32 %v3082, %v3083
        %v3085 = vrot.slane %v3084, 4
        %v3086 = vmax.f32 %v3084, %v3085
        %v3087 = vrot.slane %v3086, 2
        %v3088 = vmax.f32 %v3086, %v3087
        %v3089 = vrot.slane %v3088, 1
        %v3090 = vmax.f32 %v3088, %v3089
        %v3091 = vsel %vm743, %v2731, -inf
        %v3092 = vsel %vm743, %v2732, -inf
        %v3093 = vmax.f32 %v3091, %v3092
        %v3094 = vrot.slane %v3093, 4
        %v3095 = vmax.f32 %v3093, %v3094
        %v3096 = vrot.slane %v3095, 2
        %v3097 = vmax.f32 %v3095, %v3096
        %v3098 = vrot.slane %v3097, 1
        %v3099 = vmax.f32 %v3097, %v3098
        %v3100 = vsel %vm743, %v2733, -inf
        %v3101 = vsel %vm743, %v2734, -inf
        %v3102 = vmax.f32 %v3100, %v3101
        %v3103 = vrot.slane %v3102, 4
        %v3104 = vmax.f32 %v3102, %v3103
        %v3105 = vrot.slane %v3104, 2
        %v3106 = vmax.f32 %v3104, %v3105
        %v3107 = vrot.slane %v3106, 1
        %v3108 = vmax.f32 %v3106, %v3107
        %v3109 = vsel %vm743, %v2735, -inf
        %v3110 = vsel %vm743, %v2736, -inf
        %v3111 = vmax.f32 %v3109, %v3110
        %v3112 = vrot.slane %v3111, 4
        %v3113 = vmax.f32 %v3111, %v3112
        %v3114 = vrot.slane %v3113, 2
        %v3115 = vmax.f32 %v3113, %v3114
        %v3116 = vrot.slane %v3115, 1
        %v3117 = vmax.f32 %v3115, %v3116
        %v3118 = vsel %vm743, %v2737, -inf
        %v3119 = vsel %vm743, %v2738, -inf
        %v3120 = vmax.f32 %v3118, %v3119
        %v3121 = vrot.slane %v3120, 4
        %v3122 = vmax.f32 %v3120, %v3121
        %v3123 = vrot.slane %v3122, 2
        %v3124 = vmax.f32 %v3122, %v3123
        %v3125 = vrot.slane %v3124, 1
        %v3126 = vmax.f32 %v3124, %v3125
        %v3127 = vld [vmem:[#allocation7] sm:$0xff]
        %v3128 = vld [vmem:[#allocation7 + $0x8] sm:$0xff]
        %v3129 = vld [vmem:[#allocation7 + $0x10] sm:$0xff]
        %v3130 = vld [vmem:[#allocation7 + $0x18] sm:$0xff]
        %v3131 = vld [vmem:[#allocation8] sm:$0xff]
        %v3132 = vld [vmem:[#allocation8 + $0x8] sm:$0xff]
        %v3133 = vld [vmem:[#allocation8 + $0x10] sm:$0xff]
        %v3134 = vld [vmem:[#allocation8 + $0x18] sm:$0xff]
        %vm3143 = vcmask 1041409
        %v3144 = vsel %vm3143, %v3072, %v3063
        %vm3145 = vcmask 1042434
        %v3146 = vsel %vm3145, %v3081, %v3144
        %vm3147 = vcmask 1043459
        %v3148 = vsel %vm3147, %v3090, %v3146
        %vm3149 = vcmask 1044484
        %v3150 = vsel %vm3149, %v3099, %v3148
        %vm3151 = vcmask 1045509
        %v3152 = vsel %vm3151, %v3108, %v3150
        %vm3153 = vcmask 1046534
        %v3154 = vsel %vm3153, %v3117, %v3152
        %vm3155 = vcmask 1047559
        %v3156 = vsel %vm3155, %v3126, %v3154
        %v3157 = vsel %vm743, %v3156, 0
        %3159 = vmatpush.msra.mxu0 0.0
        %3160 = vmatpush.msra.mxu0 0.0
        %3161 = vmatpush.msra.mxu0 0.0
        %3162 = vmatpush.msra.mxu0 0.0
        %3163 = vmatpush.msra.mxu0 0.0
        %3164 = vmatpush.msra.mxu0 0.0
        %3165 = vmatpush.msra.mxu0 0.0
        %3166 = vmatpush.msra.mxu0 0.0
        %3167 = vmatpush.msra.mxu0 0.0
        %3168 = vmatpush.msra.mxu0 0.0
        %3169 = vmatpush.msra.mxu0 0.0
        %3170 = vmatpush.msra.mxu0 0.0
        %3171 = vmatpush.msra.mxu0 %v3134
        %3172 = vmatpush.msra.mxu0 %v3133
        %3173 = vmatpush.msra.mxu0 %v3132
        %3174 = vmatpush.msra.mxu0 %v3131
        %3175 = vmatmul.f32.gmra.mxu0 %v3157
        %v3176 = vpop.f32.mrf.mxu0
        %v3177 = vadd.f32 0.0, %v3176
        %3178 = vdwg.mxu0
        %v3187 = vsel %vm3143, %v3048, %v3047
        %v3188 = vsel %vm3145, %v3049, %v3187
        %v3189 = vsel %vm3147, %v3050, %v3188
        %v3190 = vsel %vm3149, %v3051, %v3189
        %v3191 = vsel %vm3151, %v3052, %v3190
        %v3192 = vsel %vm3153, %v3053, %v3191
        %v3193 = vsel %vm3155, %v3054, %v3192
        %v3194 = vsel %vm743, %v3193, 0
        %3196 = vmatpush.msra.mxu0 0.0
        %3197 = vmatpush.msra.mxu0 0.0
        %3198 = vmatpush.msra.mxu0 0.0
        %3199 = vmatpush.msra.mxu0 0.0
        %3200 = vmatpush.msra.mxu0 0.0
        %3201 = vmatpush.msra.mxu0 0.0
        %3202 = vmatpush.msra.mxu0 0.0
        %3203 = vmatpush.msra.mxu0 0.0
        %3204 = vmatpush.msra.mxu0 0.0
        %3205 = vmatpush.msra.mxu0 0.0
        %3206 = vmatpush.msra.mxu0 0.0
        %3207 = vmatpush.msra.mxu0 0.0
        %3208 = vmatpush.msra.mxu0 %v3130
        %3209 = vmatpush.msra.mxu0 %v3129
        %3210 = vmatpush.msra.mxu0 %v3128
        %3211 = vmatpush.msra.mxu0 %v3127
        %3212 = vmatmul.f32.gmra.mxu0 %v3194
        %v3213 = vpop.f32.mrf.mxu0
        %v3214 = vadd.f32 %v3177, %v3213
        %3215 = vdwg.mxu0
        %v3216 = vld [vmem:[%s6] sm:$0x1]
        %v3218 = vperm.slane %v3216, 0
        %v3220 = vadd.f32 %v3214, %v3218
        %v3221 = vmax.f32 %v3220, 0.0
        %v3222 = vld [vmem:[%s7] sm:$0x1]
        %v3224 = vperm.slane %v3222, 0
        %v3226 = vmul.f32 %v3221, %v3224
        %v3227 = vld [vmem:[%s8] sm:$0x1]
        %v3229 = vperm.slane %v3227, 0
        %v3231 = vadd.f32 %v3226, %v3229
        %v3232 = vld [vmem:[#allocation10] sm:$0xff]
        %v3233 = vld [vmem:[#allocation10 + $0x8] sm:$0xff]
        %v3234 = vld [vmem:[#allocation10 + $0x10] sm:$0xff]
        %v3235 = vld [vmem:[#allocation10 + $0x18] sm:$0xff]
        %v3236 = vld [vmem:[%s10] sm:$0x1]
        %v3238 = vperm.slane %v3236, 0
        %v3241 = vsel %vm743, %v3231, 0
        %3243 = vmatpush.msra.mxu0 0.0
        %3244 = vmatpush.msra.mxu0 0.0
        %3245 = vmatpush.msra.mxu0 0.0
        %3246 = vmatpush.msra.mxu0 0.0
        %3247 = vmatpush.msra.mxu0 0.0
        %3248 = vmatpush.msra.mxu0 0.0
        %3249 = vmatpush.msra.mxu0 0.0
        %3250 = vmatpush.msra.mxu0 0.0
        %3251 = vmatpush.msra.mxu0 0.0
        %3252 = vmatpush.msra.mxu0 0.0
        %3253 = vmatpush.msra.mxu0 0.0
        %3254 = vmatpush.msra.mxu0 0.0
        %3255 = vmatpush.msra.mxu0 %v3235
        %3256 = vmatpush.msra.mxu0 %v3234
        %3257 = vmatpush.msra.mxu0 %v3233
        %3258 = vmatpush.msra.mxu0 %v3232
        %3259 = vmatmul.f32.gmra.mxu0 %v3241
        %v3260 = vpop.f32.mrf.mxu0
        %v3261 = vadd.f32 %v3238, %v3260
        %3262 = vdwg.mxu0
        %v3263 = vld [vmem:[%s11] sm:$0xff]
        %v3264 = vld [vmem:[%s11 + $0x8] sm:$0xff]
        %v3265 = vld [vmem:[%s11 + $0x10] sm:$0xff]
        %v3266 = vld [vmem:[%s11 + $0x18] sm:$0xff]
        %v3267 = vld [vmem:[%s11 + $0x20] sm:$0xff]
        %v3268 = vld [vmem:[%s11 + $0x28] sm:$0xff]
        %v3269 = vld [vmem:[%s11 + $0x30] sm:$0xff]
        %v3270 = vld [vmem:[%s11 + $0x38] sm:$0xff]
        %v3271 = vld [vmem:[%s11 + $0x40] sm:$0xff]
        %v3272 = vld [vmem:[%s11 + $0x48] sm:$0xff]
        %v3273 = vld [vmem:[%s11 + $0x50] sm:$0xff]
        %v3274 = vld [vmem:[%s11 + $0x58] sm:$0xff]
        %v3275 = vld [vmem:[%s11 + $0x60] sm:$0xff]
        %v3276 = vld [vmem:[%s11 + $0x68] sm:$0xff]
        %v3277 = vld [vmem:[%s11 + $0x70] sm:$0xff]
        %v3278 = vld [vmem:[%s11 + $0x78] sm:$0xff]
        %v3279 = vld [vmem:[%s12] sm:$0x1]
        %v3281 = vperm.slane %v3279, 0
        %3283 = vmatpush.msra.mxu0 %v3278
        %3284 = vmatpush.msra.mxu0 %v3277
        %3285 = vmatpush.msra.mxu0 %v3276
        %3286 = vmatpush.msra.mxu0 %v3275
        %3287 = vmatpush.msra.mxu0 %v3274
        %3288 = vmatpush.msra.mxu0 %v3273
        %3289 = vmatpush.msra.mxu0 %v3272
        %3290 = vmatpush.msra.mxu0 %v3271
        %3291 = vmatpush.msra.mxu0 %v3270
        %3292 = vmatpush.msra.mxu0 %v3269
        %3293 = vmatpush.msra.mxu0 %v3268
        %3294 = vmatpush.msra.mxu0 %v3267
        %3295 = vmatpush.msra.mxu0 %v3266
        %3296 = vmatpush.msra.mxu0 %v3265
        %3297 = vmatpush.msra.mxu0 %v3264
        %3298 = vmatpush.msra.mxu0 %v3263
        %3299 = vmatmul.f32.gmra.mxu0 %v3261
        %v3300 = vpop.f32.mrf.mxu0
        %v3301 = vadd.f32 %v3281, %v3300
        %3302 = vdwg.mxu0
        %vm3303 = vcmp.gt.f32.partialorder %v3301, 0.0
        %v3304 = vmul.f32 %v3301, 0.1
        %v3305 = vsel %vm3303, %v3301, %v3304
        %v3306 = vld [vmem:[%s13] sm:$0xff]
        %v3307 = vld [vmem:[%s13 + $0x8] sm:$0xff]
        %v3308 = vld [vmem:[%s13 + $0x10] sm:$0xff]
        %v3309 = vld [vmem:[%s13 + $0x18] sm:$0xff]
        %v3310 = vld [vmem:[%s13 + $0x20] sm:$0xff]
        %v3311 = vld [vmem:[%s13 + $0x28] sm:$0xff]
        %v3312 = vld [vmem:[%s13 + $0x30] sm:$0xff]
        %v3313 = vld [vmem:[%s13 + $0x38] sm:$0xff]
        %v3314 = vld [vmem:[%s13 + $0x40] sm:$0xff]
        %v3315 = vld [vmem:[%s13 + $0x48] sm:$0xff]
        %v3316 = vld [vmem:[%s13 + $0x50] sm:$0xff]
        %v3317 = vld [vmem:[%s13 + $0x58] sm:$0xff]
        %v3318 = vld [vmem:[%s13 + $0x60] sm:$0xff]
        %v3319 = vld [vmem:[%s13 + $0x68] sm:$0xff]
        %v3320 = vld [vmem:[%s13 + $0x70] sm:$0xff]
        %v3321 = vld [vmem:[%s13 + $0x78] sm:$0xff]
        %v3322 = vld [vmem:[%s14] sm:$0x1]
        %v3324 = vperm.slane %v3322, 0
        %3326 = vmatpush.msra.mxu0 %v3321
        %3327 = vmatpush.msra.mxu0 %v3320
        %3328 = vmatpush.msra.mxu0 %v3319
        %3329 = vmatpush.msra.mxu0 %v3318
        %3330 = vmatpush.msra.mxu0 %v3317
        %3331 = vmatpush.msra.mxu0 %v3316
        %3332 = vmatpush.msra.mxu0 %v3315
        %3333 = vmatpush.msra.mxu0 %v3314
        %3334 = vmatpush.msra.mxu0 %v3313
        %3335 = vmatpush.msra.mxu0 %v3312
        %3336 = vmatpush.msra.mxu0 %v3311
        %3337 = vmatpush.msra.mxu0 %v3310
        %3338 = vmatpush.msra.mxu0 %v3309
        %3339 = vmatpush.msra.mxu0 %v3308
        %3340 = vmatpush.msra.mxu0 %v3307
        %3341 = vmatpush.msra.mxu0 %v3306
        %3342 = vmatmul.f32.gmra.mxu0 %v3305
        %v3343 = vpop.f32.mrf.mxu0
        %v3344 = vadd.f32 %v3324, %v3343
        %3345 = vdwg.mxu0
        %vm3346 = vcmp.gt.f32.partialorder %v3344, 0.0
        %v3347 = vmul.f32 %v3344, 0.1
        %v3348 = vsel %vm3346, %v3344, %v3347
        %v3349 = vld [vmem:[%s15] sm:$0xff]
        %v3350 = vld [vmem:[%s15 + $0x8] sm:$0xff]
        %v3351 = vld [vmem:[%s15 + $0x10] sm:$0xff]
        %v3352 = vld [vmem:[%s15 + $0x18] sm:$0xff]
        %v3353 = vld [vmem:[%s15 + $0x20] sm:$0xff]
        %v3354 = vld [vmem:[%s15 + $0x28] sm:$0xff]
        %v3355 = vld [vmem:[%s15 + $0x30] sm:$0xff]
        %v3356 = vld [vmem:[%s15 + $0x38] sm:$0xff]
        %v3357 = vld [vmem:[%s16] sm:$0x1]
        %v3359 = vperm.slane %v3357, 0
        %vm3361 = vcmask 523264
        %v3363 = vsel %vm3361, %v3348, 0
        %3365 = vmatpush.msra.mxu0 0.0
        %3366 = vmatpush.msra.mxu0 0.0
        %3367 = vmatpush.msra.mxu0 0.0
        %3368 = vmatpush.msra.mxu0 0.0
        %3369 = vmatpush.msra.mxu0 0.0
        %3370 = vmatpush.msra.mxu0 0.0
        %3371 = vmatpush.msra.mxu0 0.0
        %3372 = vmatpush.msra.mxu0 0.0
        %3373 = vmatpush.msra.mxu0 %v3356
        %3374 = vmatpush.msra.mxu0 %v3355
        %3375 = vmatpush.msra.mxu0 %v3354
        %3376 = vmatpush.msra.mxu0 %v3353
        %3377 = vmatpush.msra.mxu0 %v3352
        %3378 = vmatpush.msra.mxu0 %v3351
        %3379 = vmatpush.msra.mxu0 %v3350
        %3380 = vmatpush.msra.mxu0 %v3349
        %3381 = vmatmul.f32.gmra.mxu0 %v3363
        %v3382 = vpop.f32.mrf.mxu0
        %v3383 = vadd.f32 %v3359, %v3382
        %3384 = vdwg.mxu0
        %3385 = vst [vmem:[%s635] sm:$0xff] %v3383
        %s3386 = sand.u32 %s406, 1
        %s3387 = scalar_lea.sflag [#allocation4], %s3386
        %s3388 = sand.u32 %s406, 1
        %s3389 = smul.addr %s3388, 8
        %s3390 = scalar_lea.vmem [#allocation11], %s3389
        // Predicated region
        $region109: #{tpu_custom_call.1} parent=87 // pred_check
          %p3391 = pneg %p416
        $region110: #{tpu_custom_call.1} parent=87 // pred_check_branch
          %3393 = sbr.rel (%p3391) target = $region112
        $region111: #{tpu_custom_call.1} parent=87 // pred_region
          %3395 = vsyncadd %s3387, 0
          %s3396 = smul.addr %s36, 8
          %s3397 = scalar_lea.hbm %s17, %s3396
          %s3399 = sshll.u32 %s3390, 4
          %s3400 = int_to_ptr.vmem [resolvable:$true] %s3399
          %s3401 = sshll.u32 %s3397, 4
          %s3402 = int_to_ptr.hbm [resolvable:$true] %s3401
          %3404 = dma.vmem_to_hbm [thread:$0]  %s3400, 128, %s3402, %s3387
        $region112: #{tpu_custom_call.1} parent=87 // pred_fallthru
          _
      $region88: #{tpu_custom_call.1} parent=5 // pred_fallthru
        _
      %p3405 = scmp.le.s32.totalorder 2, %s31
      // Predicated region
      $region113: #{tpu_custom_call.1} parent=5 // pred_check
        %p3406 = pneg %p3405
      $region114: #{tpu_custom_call.1} parent=5 // pred_check_branch
        %3408 = sbr.rel (%p3406) target = $region116
      $region115: #{tpu_custom_call.1} parent=5 // pred_region
        %s3409 = ssub.s32 %s31, 2
        // Predicated region
        $region117: #{tpu_custom_call.1} parent=115 // pred_check
          %p3410 = pneg %p422
        $region118: #{tpu_custom_call.1} parent=115 // pred_check_branch
          %3412 = sbr.rel (%p3410) target = $region120
        $region119: #{tpu_custom_call.1} parent=115 // pred_region
          %s3413 = sand.u32 %s407, 1
          %s3414 = scalar_lea.sflag [#allocation4], %s3413
          %s3415 = sand.u32 %s407, 1
          %s3416 = smul.addr %s3415, 8
          %s3417 = scalar_lea.vmem [#allocation11], %s3416
          %3419 = dma.done %s3414, 128
        $region120: #{tpu_custom_call.1} parent=115 // pred_fallthru
          _
      $region116: #{tpu_custom_call.1} parent=5 // pred_fallthru
        _
    $region6: #{tpu_custom_call.1} parent=1 // loop_footer
      %s35 = sadd.s32 1, %s31
    $region7: #{tpu_custom_call.1} parent=1 // loop_footer_branch
      %30 = sbr.rel target = $region3
    $region8: #{tpu_custom_call.1} parent=1 // loop_exit
      _
    %3420 = vsyncpa [#allocation3], 1
    %s3421 = scalar_lea.sflag [#allocation3], 1
    %3422 = vsyncpa %s3421, 1
    %3423 = vsyncpa [#allocation6], 1
    %3424 = vsyncpa [#allocation9], 1
    %3425 = vsyncpa [#allocation4], 1
    %s3426 = scalar_lea.sflag [#allocation4], 1
    %3427 = vsyncpa %s3426, 1

</llo_original>
